<compile_context>
chip_gen: v7x
topology: tpu7x:2x2x1
jax: 0.10.0
libtpu: 0.0.40
codegen_flags: <defaults>
</compile_context>

<pallas_src>
import jax
import jax.numpy as jnp
from jax import lax
from jax.experimental import pallas as pl
from jax.experimental.pallas import tpu as pltpu

VMEM_SPEC = pl.BlockSpec(memory_space=pltpu.MemorySpace.VMEM)


# ----------------------------------------------------------------------------
# The single fused Pallas kernel
# ----------------------------------------------------------------------------
def _fused_forward_kernel(p1_ref, w1_ref, b1_ref, w2_ref, b2_ref,
                          wf1_ref, bf1_ref, wf2_ref, bf2_ref,
                          wf3_ref, bf3_ref, wf4_ref, bf4_ref,
                          wf5_ref, bf5_ref, o_ref):
    f32 = jnp.float32

    def shifts_cat(m, offsets, pad):
        # Lane-concat of row-shifted copies of m (zero-padded so every static
        # slice stays in bounds).  Used as an in-VMEM im2col / gather.
        mp = jnp.concatenate([m, jnp.zeros((pad, m.shape[1]), f32)], axis=0)
        n = m.shape[0]
        return jnp.concatenate([mp[o:o + n] for o in offsets], axis=1)

    # ---- conv1 (+bias) + 2x2 maxpool + ReLU, both digit stacks batched -----
    # p1_ref: [4*n1, 9], pool-position major; n1 = n_img*36 rows in (img, y, x)
    # order on the 6x6 pooled grid.  One tall MXU dot, then a VPU max over the
    # four pool-position slabs (relu(maxpool(conv+b)) == relu(max_p(x_p@W)+b)).
    p1 = p1_ref[...]
    n1 = p1.shape[0] // 4
    a1 = jnp.dot(p1, w1_ref[...], preferred_element_type=f32)          # [4*n1, 32]
    m1 = jnp.maximum(jnp.maximum(a1[:n1], a1[n1:2 * n1]),
                     jnp.maximum(a1[2 * n1:3 * n1], a1[3 * n1:]))
    h1 = jnp.maximum(m1 + b1_ref[...], 0.0)                            # [n1, 32]

    # ---- conv2: im2col = 9 shifted row-slices of VMEM-resident h1 ----------
    # Row r = img*36 + y*6 + x; shifting by ky*6+kx gives the (y+ky, x+kx)
    # neighbour for every valid output row (y,x <= 3).  Invalid rows carry
    # garbage but are never selected downstream (row-wise dataflow).
    p2 = shifts_cat(h1, [ky * 6 + kx for ky in range(3) for kx in range(3)], 16)
    a2 = jnp.dot(p2, w2_ref[...], preferred_element_type=f32)          # [n1, 64]

    # 2x2 maxpool on the 4x4 valid conv2 grid (shifts {0,1,6,7}) + bias + ReLU.
    a2p = jnp.concatenate([a2, jnp.zeros((8, a2.shape[1]), f32)], axis=0)
    pooled = jnp.maximum(jnp.maximum(a2p[:n1], a2p[1:n1 + 1]),
                         jnp.maximum(a2p[6:n1 + 6], a2p[7:n1 + 7]))
    h2 = jnp.maximum(pooled + b2_ref[...], 0.0)                        # [n1, 64]
    # valid rows: img*36 + {0, 2, 12, 14}  == the four 2x2-pooled positions

    # ---- fc1 -> relu -> fc2 (shared head, both digit stacks at once) -------
    # The 4 pooled positions of an image sit at row offsets {0,2,12,14};
    # lane-concat those shifts -> [n1, 256] and do ONE dot.  Row img*36 is the
    # valid fc output for image `img`; other rows are redundant rows that ride
    # along for free at these sizes (keeps the kernel free of row gathers).
    x1 = shifts_cat(h2, (0, 2, 12, 14), 16)                            # [n1, 256]
    hf1 = jnp.maximum(jnp.dot(x1, wf1_ref[...], preferred_element_type=f32)
                      + bf1_ref[...], 0.0)                             # [n1, 256]
    ocnn = jnp.dot(hf1, wf2_ref[...], preferred_element_type=f32) + bf2_ref[...]

    # ---- concat the two digit halves along lanes, then fc3 -> fc4 -> fc5 ---
    half = n1 // 2                                                     # = B*36
    cc = jnp.concatenate([ocnn[:half], ocnn[half:]], axis=1)           # [half, 20]
    h3 = jnp.maximum(jnp.dot(cc, wf3_ref[...], preferred_element_type=f32)
                     + bf3_ref[...], 0.0)                              # [half, 384]
    h4 = jnp.maximum(jnp.dot(h3, wf4_ref[...], preferred_element_type=f32)
                     + bf4_ref[...], 0.0)                              # [half, 384]
    # Lane-dense [half, 128] output slab; rows b*36 are the real outputs.
    o_ref[...] = jnp.dot(h4, wf5_ref[...], preferred_element_type=f32) + bf5_ref[...]


# ----------------------------------------------------------------------------
# Glue: input im2col (raw input only — no intermediate ever leaves VMEM)
# ----------------------------------------------------------------------------
def im2col_pooled(x, k, pool):
    # x: [N, H, W, Cin] -> [pool*pool, N*PH*PW, k*k*Cin]; pool-position major,
    # rows ordered (image, pooled_y, pooled_x), columns ordered (ky, kx, ci).
    N, H, W, Cin = x.shape
    OH, OW = H - k + 1, W - k + 1
    PH, PW = OH // pool, OW // pool
    cols = [x[:, ky:ky + OH, kx:kx + OW, :] for ky in range(k) for kx in range(k)]
    patches = jnp.stack(cols, axis=3).reshape(N, OH, OW, k * k * Cin)
    patches = patches.reshape(N, PH, pool, PW, pool, k * k * Cin)
    patches = patches.transpose(2, 4, 0, 1, 3, 5)
    return patches.reshape(pool * pool, N * PH * PW, k * k * Cin)


def conv_w_to_col(w):
    # PyTorch conv weight [Cout, Cin, k, k] -> [k*k*Cin, Cout], rows (ky, kx, ci).
    Cout, Cin, k, _ = w.shape
    return jnp.transpose(w, (2, 3, 1, 0)).reshape(k * k * Cin, Cout)


def prepare_params(params):
    """One-time weight reformatting (outside the traced hot path)."""
    # fc1: fold PyTorch's (c, h, w) flatten order into the weight by permuting
    # its rows to the kernel's (h, w, c) feature order, then pad out 200 -> 256.
    wf1 = params["w_fc1"].reshape(64, 2, 2, 200).transpose(1, 2, 0, 3).reshape(256, 200)
    return {
        "w1c": conv_w_to_col(params["w_conv1"]),                  # [9, 32]
        "b1": params["b_conv1"].reshape(1, -1),
        "w2c": conv_w_to_col(params["w_conv2"]),                  # [288, 64]
        "b2": params["b_conv2"].reshape(1, -1),
        "wf1": jnp.pad(wf1, ((0, 0), (0, 56))),                   # [256, 256]
        "bf1": jnp.pad(params["b_fc1"], (0, 56)).reshape(1, -1),
        "wf2": jnp.pad(params["w_fc2"], ((0, 56), (0, 0))),       # [256, 10]
        "bf2": params["b_fc2"].reshape(1, -1),
        "wf3": jnp.pad(params["w_fc3"], ((0, 0), (0, 84))),       # [20, 384]
        "bf3": jnp.pad(params["b_fc3"], (0, 84)).reshape(1, -1),
        "wf4": jnp.pad(params["w_fc4"], ((0, 84), (0, 84))),      # [384, 384]
        "bf4": jnp.pad(params["b_fc4"], (0, 84)).reshape(1, -1),
        "wf5": jnp.pad(params["w_fc5"], ((0, 84), (0, 126))),     # [384, 128]
        "bf5": jnp.pad(params["b_fc5"], (0, 126)).reshape(1, -1),
    }


def make_pallas_forward(params):
    prep = prepare_params(params)

    @jax.jit
    def forward(x):                                    # x: [B, 2, 14, 14]
        B = x.shape[0]
        # Batch both digit channels through one shared-weight CNN path.
        imgs = jnp.concatenate([x[:, 0], x[:, 1]], axis=0)[..., None]  # [2B,14,14,1]
        p1 = im2col_pooled(imgs, 3, 2).reshape(4 * 2 * B * 36, 9)
        out_pad = pl.pallas_call(
            _fused_forward_kernel,
            out_shape=jax.ShapeDtypeStruct((B * 36, 128), jnp.float32),
            in_specs=[VMEM_SPEC] * 15,
            out_specs=VMEM_SPEC,
        )(p1, prep["w1c"], prep["b1"], prep["w2c"], prep["b2"],
          prep["wf1"], prep["bf1"], prep["wf2"], prep["bf2"],
          prep["wf3"], prep["bf3"], prep["wf4"], prep["bf4"],
          prep["wf5"], prep["bf5"])
        # Valid rows are b*36; first 2 lanes are the real fc5 outputs.
        return out_pad[::36, :2]

    return forward


# ----------------------------------------------------------------------------
# Pure-JAX reference (PyTorch semantics) for validation
# ----------------------------------------------------------------------------
def reference_forward(x, params):
    def conv2d(xi, w, b):
        y = lax.conv_general_dilated(xi, w, window_strides=(1, 1), padding="VALID",
                                     dimension_numbers=("NCHW", "OIHW", "NCHW"))
        return y + b.reshape(1, -1, 1, 1)

    def maxpool2(xi):
        return lax.reduce_window(xi, -jnp.inf, lax.max, (1, 1, 2, 2), (1, 1, 2, 2), "VALID")

    def cnn(xi):
        h = jax.nn.relu(maxpool2(conv2d(xi, params["w_conv1"], params["b_conv1"])))
        h = jax.nn.relu(maxpool2(conv2d(h, params["w_conv2"], params["b_conv2"])))
        h = h.reshape(h.shape[0], -1)
        h = jax.nn.relu(h @ params["w_fc1"] + params["b_fc1"])
        return h @ params["w_fc2"] + params["b_fc2"]

    o1 = cnn(x[:, 0:1])
    o2 = cnn(x[:, 1:2])
    c = jnp.concatenate([o1, o2], axis=1)
    h = jax.nn.relu(c @ params["w_fc3"] + params["b_fc3"])
    h = jax.nn.relu(h @ params["w_fc4"] + params["b_fc4"])
    return h @ params["w_fc5"] + params["b_fc5"]


# ----------------------------------------------------------------------------
# Deterministic parameter init (shapes from Weight_Sharing_Net.__init__)
# ----------------------------------------------------------------------------
def init_params(key):
    ks = jax.random.split(key, 16)
    n = lambda k, s, sc: jax.random.normal(k, s, jnp.float32) * sc
    return {
        "w_conv1": n(ks[0], (32, 1, 3, 3), 0.2),   "b_conv1": n(ks[1], (32,), 0.05),
        "w_conv2": n(ks[2], (64, 32, 3, 3), 0.05), "b_conv2": n(ks[3], (64,), 0.05),
        # linear weights stored transposed: [in, out]
        "w_fc1": n(ks[4], (256, 200), 0.05),  "b_fc1": n(ks[5], (200,), 0.05),
        "w_fc2": n(ks[6], (200, 10), 0.05),   "b_fc2": n(ks[7], (10,), 0.05),
        "w_fc3": n(ks[8], (20, 300), 0.1),    "b_fc3": n(ks[9], (300,), 0.05),
        "w_fc4": n(ks[10], (300, 300), 0.05), "b_fc4": n(ks[11], (300,), 0.05),
        "w_fc5": n(ks[12], (300, 2), 0.05),   "b_fc5": n(ks[13], (2,), 0.05),
    }


if __name__ == "__main__":
    key = jax.random.PRNGKey(0)
    k_params, k_x = jax.random.split(key)
    params = init_params(k_params)
    x = jax.random.normal(k_x, (2, 2, 14, 14), jnp.float32)

    forward = make_pallas_forward(params)
    out = jax.block_until_ready(forward(x))

    ref = jax.block_until_ready(reference_forward(x, params))
    assert out.shape == (2, 2), out.shape
    max_err = float(jnp.max(jnp.abs(out - ref)))
    assert max_err < 1e-3, f"mismatch vs reference: {max_err}"

    print("KERNEL_OK")
</pallas_src>

<mosaic_0001>
module attributes {stable_mosaic.version = 11 : i64} {
  func.func @_fused_forward_kernel(%arg0: memref<576x9xf32, #tpu.memory_space<vmem>>, %arg1: memref<9x32xf32, #tpu.memory_space<vmem>>, %arg2: memref<1x32xf32, #tpu.memory_space<vmem>>, %arg3: memref<288x64xf32, #tpu.memory_space<vmem>>, %arg4: memref<1x64xf32, #tpu.memory_space<vmem>>, %arg5: memref<256x256xf32, #tpu.memory_space<vmem>>, %arg6: memref<1x256xf32, #tpu.memory_space<vmem>>, %arg7: memref<256x10xf32, #tpu.memory_space<vmem>>, %arg8: memref<1x10xf32, #tpu.memory_space<vmem>>, %arg9: memref<20x384xf32, #tpu.memory_space<vmem>>, %arg10: memref<1x384xf32, #tpu.memory_space<vmem>>, %arg11: memref<384x384xf32, #tpu.memory_space<vmem>>, %arg12: memref<1x384xf32, #tpu.memory_space<vmem>>, %arg13: memref<384x128xf32, #tpu.memory_space<vmem>>, %arg14: memref<1x128xf32, #tpu.memory_space<vmem>>, %arg15: memref<72x128xf32, #tpu.memory_space<vmem>>) attributes {dimension_semantics = [], scalar_prefetch = 0 : i64, scratch_operands = 0 : i64, tpu.core_type = #tpu.core_type<tc>} {
    %c0 = arith.constant 0 : index
    %c0_0 = arith.constant 0 : index
    %0 = vector.load %arg0[%c0, %c0_0] : memref<576x9xf32, #tpu.memory_space<vmem>>, vector<576x9xf32>
    %c0_1 = arith.constant 0 : index
    %c0_2 = arith.constant 0 : index
    %1 = vector.load %arg1[%c0_1, %c0_2] : memref<9x32xf32, #tpu.memory_space<vmem>>, vector<9x32xf32>
    %cst = arith.constant dense<0.000000e+00> : vector<576x32xf32>
    %2 = tpu.matmul %0, %1, %cst {dimension_numbers = #tpu.dot_dimension_numbers<[1], [0], [0], [1], [0, 0, 1, 1], [], []>} : vector<576x9xf32>, vector<9x32xf32>, vector<576x32xf32> -> vector<576x32xf32>
    %3 = vector.extract_strided_slice %2 {offsets = [0, 0], sizes = [144, 32], strides = [1, 1]} : vector<576x32xf32> to vector<144x32xf32>
    %4 = vector.extract_strided_slice %2 {offsets = [144, 0], sizes = [144, 32], strides = [1, 1]} : vector<576x32xf32> to vector<144x32xf32>
    %5 = arith.maximumf %3, %4 : vector<144x32xf32>
    %6 = vector.extract_strided_slice %2 {offsets = [288, 0], sizes = [144, 32], strides = [1, 1]} : vector<576x32xf32> to vector<144x32xf32>
    %7 = vector.extract_strided_slice %2 {offsets = [432, 0], sizes = [144, 32], strides = [1, 1]} : vector<576x32xf32> to vector<144x32xf32>
    %8 = arith.maximumf %6, %7 : vector<144x32xf32>
    %9 = arith.maximumf %5, %8 : vector<144x32xf32>
    %c0_3 = arith.constant 0 : index
    %c0_4 = arith.constant 0 : index
    %10 = vector.load %arg2[%c0_3, %c0_4] : memref<1x32xf32, #tpu.memory_space<vmem>>, vector<1x32xf32>
    %11 = vector.broadcast %10 : vector<1x32xf32> to vector<144x32xf32>
    %12 = arith.addf %9, %11 : vector<144x32xf32>
    %cst_5 = arith.constant 0.000000e+00 : f32
    %13 = vector.broadcast %cst_5 : f32 to vector<144x32xf32>
    %14 = arith.maximumf %12, %13 : vector<144x32xf32>
    %cst_6 = arith.constant 0.000000e+00 : f32
    %15 = vector.broadcast %cst_6 : f32 to vector<16x32xf32>
    %16 = tpu.concatenate %14, %15 in 0 : vector<144x32xf32>, vector<16x32xf32> -> vector<160x32xf32>
    %17 = vector.extract_strided_slice %16 {offsets = [0, 0], sizes = [144, 32], strides = [1, 1]} : vector<160x32xf32> to vector<144x32xf32>
    %18 = vector.extract_strided_slice %16 {offsets = [1, 0], sizes = [144, 32], strides = [1, 1]} : vector<160x32xf32> to vector<144x32xf32>
    %19 = vector.extract_strided_slice %16 {offsets = [2, 0], sizes = [144, 32], strides = [1, 1]} : vector<160x32xf32> to vector<144x32xf32>
    %20 = vector.extract_strided_slice %16 {offsets = [6, 0], sizes = [144, 32], strides = [1, 1]} : vector<160x32xf32> to vector<144x32xf32>
    %21 = vector.extract_strided_slice %16 {offsets = [7, 0], sizes = [144, 32], strides = [1, 1]} : vector<160x32xf32> to vector<144x32xf32>
    %22 = vector.extract_strided_slice %16 {offsets = [8, 0], sizes = [144, 32], strides = [1, 1]} : vector<160x32xf32> to vector<144x32xf32>
    %23 = vector.extract_strided_slice %16 {offsets = [12, 0], sizes = [144, 32], strides = [1, 1]} : vector<160x32xf32> to vector<144x32xf32>
    %24 = vector.extract_strided_slice %16 {offsets = [13, 0], sizes = [144, 32], strides = [1, 1]} : vector<160x32xf32> to vector<144x32xf32>
    %25 = vector.extract_strided_slice %16 {offsets = [14, 0], sizes = [144, 32], strides = [1, 1]} : vector<160x32xf32> to vector<144x32xf32>
    %26 = tpu.concatenate %17, %18, %19, %20, %21, %22, %23, %24, %25 in 1 : vector<144x32xf32>, vector<144x32xf32>, vector<144x32xf32>, vector<144x32xf32>, vector<144x32xf32>, vector<144x32xf32>, vector<144x32xf32>, vector<144x32xf32>, vector<144x32xf32> -> vector<144x288xf32>
    %c0_7 = arith.constant 0 : index
    %c0_8 = arith.constant 0 : index
    %27 = vector.load %arg3[%c0_7, %c0_8] : memref<288x64xf32, #tpu.memory_space<vmem>>, vector<288x64xf32>
    %cst_9 = arith.constant dense<0.000000e+00> : vector<144x64xf32>
    %28 = tpu.matmul %26, %27, %cst_9 {dimension_numbers = #tpu.dot_dimension_numbers<[1], [0], [0], [1], [0, 0, 1, 1], [], []>} : vector<144x288xf32>, vector<288x64xf32>, vector<144x64xf32> -> vector<144x64xf32>
    %cst_10 = arith.constant 0.000000e+00 : f32
    %29 = vector.broadcast %cst_10 : f32 to vector<8x64xf32>
    %30 = tpu.concatenate %28, %29 in 0 : vector<144x64xf32>, vector<8x64xf32> -> vector<152x64xf32>
    %31 = vector.extract_strided_slice %30 {offsets = [0, 0], sizes = [144, 64], strides = [1, 1]} : vector<152x64xf32> to vector<144x64xf32>
    %32 = vector.extract_strided_slice %30 {offsets = [1, 0], sizes = [144, 64], strides = [1, 1]} : vector<152x64xf32> to vector<144x64xf32>
    %33 = arith.maximumf %31, %32 : vector<144x64xf32>
    %34 = vector.extract_strided_slice %30 {offsets = [6, 0], sizes = [144, 64], strides = [1, 1]} : vector<152x64xf32> to vector<144x64xf32>
    %35 = vector.extract_strided_slice %30 {offsets = [7, 0], sizes = [144, 64], strides = [1, 1]} : vector<152x64xf32> to vector<144x64xf32>
    %36 = arith.maximumf %34, %35 : vector<144x64xf32>
    %37 = arith.maximumf %33, %36 : vector<144x64xf32>
    %c0_11 = arith.constant 0 : index
    %c0_12 = arith.constant 0 : index
    %38 = vector.load %arg4[%c0_11, %c0_12] : memref<1x64xf32, #tpu.memory_space<vmem>>, vector<1x64xf32>
    %39 = vector.broadcast %38 : vector<1x64xf32> to vector<144x64xf32>
    %40 = arith.addf %37, %39 : vector<144x64xf32>
    %cst_13 = arith.constant 0.000000e+00 : f32
    %41 = vector.broadcast %cst_13 : f32 to vector<144x64xf32>
    %42 = arith.maximumf %40, %41 : vector<144x64xf32>
    %cst_14 = arith.constant 0.000000e+00 : f32
    %43 = vector.broadcast %cst_14 : f32 to vector<16x64xf32>
    %44 = tpu.concatenate %42, %43 in 0 : vector<144x64xf32>, vector<16x64xf32> -> vector<160x64xf32>
    %45 = vector.extract_strided_slice %44 {offsets = [0, 0], sizes = [144, 64], strides = [1, 1]} : vector<160x64xf32> to vector<144x64xf32>
    %46 = vector.extract_strided_slice %44 {offsets = [2, 0], sizes = [144, 64], strides = [1, 1]} : vector<160x64xf32> to vector<144x64xf32>
    %47 = vector.extract_strided_slice %44 {offsets = [12, 0], sizes = [144, 64], strides = [1, 1]} : vector<160x64xf32> to vector<144x64xf32>
    %48 = vector.extract_strided_slice %44 {offsets = [14, 0], sizes = [144, 64], strides = [1, 1]} : vector<160x64xf32> to vector<144x64xf32>
    %49 = tpu.concatenate %45, %46, %47, %48 in 1 : vector<144x64xf32>, vector<144x64xf32>, vector<144x64xf32>, vector<144x64xf32> -> vector<144x256xf32>
    %c0_15 = arith.constant 0 : index
    %c0_16 = arith.constant 0 : index
    %50 = vector.load %arg5[%c0_15, %c0_16] : memref<256x256xf32, #tpu.memory_space<vmem>>, vector<256x256xf32>
    %cst_17 = arith.constant dense<0.000000e+00> : vector<144x256xf32>
    %51 = tpu.matmul %49, %50, %cst_17 {dimension_numbers = #tpu.dot_dimension_numbers<[1], [0], [0], [1], [0, 0, 1, 1], [], []>} : vector<144x256xf32>, vector<256x256xf32>, vector<144x256xf32> -> vector<144x256xf32>
    %c0_18 = arith.constant 0 : index
    %c0_19 = arith.constant 0 : index
    %52 = vector.load %arg6[%c0_18, %c0_19] : memref<1x256xf32, #tpu.memory_space<vmem>>, vector<1x256xf32>
    %53 = vector.broadcast %52 : vector<1x256xf32> to vector<144x256xf32>
    %54 = arith.addf %51, %53 : vector<144x256xf32>
    %cst_20 = arith.constant 0.000000e+00 : f32
    %55 = vector.broadcast %cst_20 : f32 to vector<144x256xf32>
    %56 = arith.maximumf %54, %55 : vector<144x256xf32>
    %c0_21 = arith.constant 0 : index
    %c0_22 = arith.constant 0 : index
    %57 = vector.load %arg7[%c0_21, %c0_22] : memref<256x10xf32, #tpu.memory_space<vmem>>, vector<256x10xf32>
    %cst_23 = arith.constant dense<0.000000e+00> : vector<144x10xf32>
    %58 = tpu.matmul %56, %57, %cst_23 {dimension_numbers = #tpu.dot_dimension_numbers<[1], [0], [0], [1], [0, 0, 1, 1], [], []>} : vector<144x256xf32>, vector<256x10xf32>, vector<144x10xf32> -> vector<144x10xf32>
    %c0_24 = arith.constant 0 : index
    %c0_25 = arith.constant 0 : index
    %59 = vector.load %arg8[%c0_24, %c0_25] : memref<1x10xf32, #tpu.memory_space<vmem>>, vector<1x10xf32>
    %60 = vector.broadcast %59 : vector<1x10xf32> to vector<144x10xf32>
    %61 = arith.addf %58, %60 : vector<144x10xf32>
    %62 = vector.extract_strided_slice %61 {offsets = [0, 0], sizes = [72, 10], strides = [1, 1]} : vector<144x10xf32> to vector<72x10xf32>
    %63 = vector.extract_strided_slice %61 {offsets = [72, 0], sizes = [72, 10], strides = [1, 1]} : vector<144x10xf32> to vector<72x10xf32>
    %64 = tpu.concatenate %62, %63 in 1 : vector<72x10xf32>, vector<72x10xf32> -> vector<72x20xf32>
    %c0_26 = arith.constant 0 : index
    %c0_27 = arith.constant 0 : index
    %65 = vector.load %arg9[%c0_26, %c0_27] : memref<20x384xf32, #tpu.memory_space<vmem>>, vector<20x384xf32>
    %cst_28 = arith.constant dense<0.000000e+00> : vector<72x384xf32>
    %66 = tpu.matmul %64, %65, %cst_28 {dimension_numbers = #tpu.dot_dimension_numbers<[1], [0], [0], [1], [0, 0, 1, 1], [], []>} : vector<72x20xf32>, vector<20x384xf32>, vector<72x384xf32> -> vector<72x384xf32>
    %c0_29 = arith.constant 0 : index
    %c0_30 = arith.constant 0 : index
    %67 = vector.load %arg10[%c0_29, %c0_30] : memref<1x384xf32, #tpu.memory_space<vmem>>, vector<1x384xf32>
    %68 = vector.broadcast %67 : vector<1x384xf32> to vector<72x384xf32>
    %69 = arith.addf %66, %68 : vector<72x384xf32>
    %cst_31 = arith.constant 0.000000e+00 : f32
    %70 = vector.broadcast %cst_31 : f32 to vector<72x384xf32>
    %71 = arith.maximumf %69, %70 : vector<72x384xf32>
    %c0_32 = arith.constant 0 : index
    %c0_33 = arith.constant 0 : index
    %72 = vector.load %arg11[%c0_32, %c0_33] : memref<384x384xf32, #tpu.memory_space<vmem>>, vector<384x384xf32>
    %cst_34 = arith.constant dense<0.000000e+00> : vector<72x384xf32>
    %73 = tpu.matmul %71, %72, %cst_34 {dimension_numbers = #tpu.dot_dimension_numbers<[1], [0], [0], [1], [0, 0, 1, 1], [], []>} : vector<72x384xf32>, vector<384x384xf32>, vector<72x384xf32> -> vector<72x384xf32>
    %c0_35 = arith.constant 0 : index
    %c0_36 = arith.constant 0 : index
    %74 = vector.load %arg12[%c0_35, %c0_36] : memref<1x384xf32, #tpu.memory_space<vmem>>, vector<1x384xf32>
    %75 = vector.broadcast %74 : vector<1x384xf32> to vector<72x384xf32>
    %76 = arith.addf %73, %75 : vector<72x384xf32>
    %cst_37 = arith.constant 0.000000e+00 : f32
    %77 = vector.broadcast %cst_37 : f32 to vector<72x384xf32>
    %78 = arith.maximumf %76, %77 : vector<72x384xf32>
    %c0_38 = arith.constant 0 : index
    %c0_39 = arith.constant 0 : index
    %79 = vector.load %arg13[%c0_38, %c0_39] : memref<384x128xf32, #tpu.memory_space<vmem>>, vector<384x128xf32>
    %cst_40 = arith.constant dense<0.000000e+00> : vector<72x128xf32>
    %80 = tpu.matmul %78, %79, %cst_40 {dimension_numbers = #tpu.dot_dimension_numbers<[1], [0], [0], [1], [0, 0, 1, 1], [], []>} : vector<72x384xf32>, vector<384x128xf32>, vector<72x128xf32> -> vector<72x128xf32>
    %c0_41 = arith.constant 0 : index
    %c0_42 = arith.constant 0 : index
    %81 = vector.load %arg14[%c0_41, %c0_42] : memref<1x128xf32, #tpu.memory_space<vmem>>, vector<1x128xf32>
    %82 = vector.broadcast %81 : vector<1x128xf32> to vector<72x128xf32>
    %83 = arith.addf %80, %82 : vector<72x128xf32>
    %c0_43 = arith.constant 0 : index
    %c0_44 = arith.constant 0 : index
    %84 = vector.load %arg15[%c0_43, %c0_44] : memref<72x128xf32, #tpu.memory_space<vmem>>, vector<72x128xf32>
    tpu.vector_store %arg15[%c0_43, %c0_44], %83 {strides = array<i32>} : memref<72x128xf32, #tpu.memory_space<vmem>>, vector<72x128xf32>,
    return
  }
}

</mosaic_0001>

<llo_original>
// kernel: forward.1
$region0: #{forward.1}
  #allocation0 [shape = 'u32[]', space=smem, size = 0x4, offset = 0x4, fixed_abs, tag = 'smem constant byte address 0x4 - core index']
  #allocation1 [shape = 'u32[144,128]{1,0:T(1,128)}', space=vmem, size = 0x12000, scoped, tag = 'internal scratch']
  %s0 = inlined_call_operand.vmem [shape: f32[576,9], index: 0, kind: input, shape index: {}]
  %s1 = inlined_call_operand.vmem [shape: f32[9,32], index: 1, kind: input, shape index: {}]
  %s2 = inlined_call_operand.vmem [shape: f32[1,32], index: 2, kind: input, shape index: {}]
  %s3 = inlined_call_operand.vmem [shape: f32[288,64], index: 3, kind: input, shape index: {}]
  %s4 = inlined_call_operand.vmem [shape: f32[1,64], index: 4, kind: input, shape index: {}]
  %s5 = inlined_call_operand.vmem [shape: f32[256,256], index: 5, kind: input, shape index: {}]
  %s6 = inlined_call_operand.vmem [shape: f32[1,256], index: 6, kind: input, shape index: {}]
  %s7 = inlined_call_operand.vmem [shape: f32[256,10], index: 7, kind: input, shape index: {}]
  %s8 = inlined_call_operand.vmem [shape: f32[1,10], index: 8, kind: input, shape index: {}]
  %s9 = inlined_call_operand.vmem [shape: f32[20,384], index: 9, kind: input, shape index: {}]
  %s10 = inlined_call_operand.vmem [shape: f32[1,384], index: 10, kind: input, shape index: {}]
  %s11 = inlined_call_operand.vmem [shape: f32[384,384], index: 11, kind: input, shape index: {}]
  %s12 = inlined_call_operand.vmem [shape: f32[1,384], index: 12, kind: input, shape index: {}]
  %s13 = inlined_call_operand.vmem [shape: f32[384,128], index: 13, kind: input, shape index: {}]
  %s14 = inlined_call_operand.vmem [shape: f32[1,128], index: 14, kind: input, shape index: {}]
  %s15 = inlined_call_operand.vmem [shape: f32[72,128], index: 15, kind: output, shape index: {}]
  %s16 = sld [smem:[#allocation0]]
  $region70: #{forward.1} parent=0
    _
  %s18 = ssub.s32 1, %s16
  %s19 = scalar_select 0, %s18, %s16
  // Predicated region
  $region2: #{forward.1} parent=0 // pred_check
    _
  $region3: #{forward.1} parent=0 // pred_check_branch
    %21 = sbr.rel (0) target = $region5
  $region4: #{forward.1} parent=0 // pred_region
    _
  $region5: #{forward.1} parent=0 // pred_fallthru
    _
  // Predicated region
  $region6: #{forward.1} parent=0 // pred_check
    _
  $region7: #{forward.1} parent=0 // pred_check_branch
    %23 = sbr.rel (0) target = $region9
  $region8: #{forward.1} parent=0 // pred_region
    _
  $region9: #{forward.1} parent=0 // pred_fallthru
    _
  // Predicated region
  $region10: #{forward.1} parent=0 // pred_check
    _
  $region11: #{forward.1} parent=0 // pred_check_branch
    %25 = sbr.rel (0) target = $region13
  $region12: #{forward.1} parent=0 // pred_region
    _
  $region13: #{forward.1} parent=0 // pred_fallthru
    _
  // Predicated region
  $region14: #{forward.1} parent=0 // pred_check
    _
  $region15: #{forward.1} parent=0 // pred_check_branch
    %27 = sbr.rel (0) target = $region17
  $region16: #{forward.1} parent=0 // pred_region
    _
  $region17: #{forward.1} parent=0 // pred_fallthru
    _
  // Predicated region
  $region18: #{forward.1} parent=0 // pred_check
    _
  $region19: #{forward.1} parent=0 // pred_check_branch
    %29 = sbr.rel (0) target = $region21
  $region20: #{forward.1} parent=0 // pred_region
    _
  $region21: #{forward.1} parent=0 // pred_fallthru
    _
  // Predicated region
  $region22: #{forward.1} parent=0 // pred_check
    _
  $region23: #{forward.1} parent=0 // pred_check_branch
    %31 = sbr.rel (0) target = $region25
  $region24: #{forward.1} parent=0 // pred_region
    _
  $region25: #{forward.1} parent=0 // pred_fallthru
    _
  // Predicated region
  $region26: #{forward.1} parent=0 // pred_check
    _
  $region27: #{forward.1} parent=0 // pred_check_branch
    %33 = sbr.rel (0) target = $region29
  $region28: #{forward.1} parent=0 // pred_region
    _
  $region29: #{forward.1} parent=0 // pred_fallthru
    _
  // Predicated region
  $region30: #{forward.1} parent=0 // pred_check
    _
  $region31: #{forward.1} parent=0 // pred_check_branch
    %35 = sbr.rel (0) target = $region33
  $region32: #{forward.1} parent=0 // pred_region
    _
  $region33: #{forward.1} parent=0 // pred_fallthru
    _
  // Predicated region
  $region34: #{forward.1} parent=0 // pred_check
    _
  $region35: #{forward.1} parent=0 // pred_check_branch
    %37 = sbr.rel (0) target = $region37
  $region36: #{forward.1} parent=0 // pred_region
    _
  $region37: #{forward.1} parent=0 // pred_fallthru
    _
  // Predicated region
  $region38: #{forward.1} parent=0 // pred_check
    _
  $region39: #{forward.1} parent=0 // pred_check_branch
    %39 = sbr.rel (0) target = $region41
  $region40: #{forward.1} parent=0 // pred_region
    _
  $region41: #{forward.1} parent=0 // pred_fallthru
    _
  // Predicated region
  $region42: #{forward.1} parent=0 // pred_check
    _
  $region43: #{forward.1} parent=0 // pred_check_branch
    %41 = sbr.rel (0) target = $region45
  $region44: #{forward.1} parent=0 // pred_region
    _
  $region45: #{forward.1} parent=0 // pred_fallthru
    _
  // Predicated region
  $region46: #{forward.1} parent=0 // pred_check
    _
  $region47: #{forward.1} parent=0 // pred_check_branch
    %43 = sbr.rel (0) target = $region49
  $region48: #{forward.1} parent=0 // pred_region
    _
  $region49: #{forward.1} parent=0 // pred_fallthru
    _
  // Predicated region
  $region50: #{forward.1} parent=0 // pred_check
    _
  $region51: #{forward.1} parent=0 // pred_check_branch
    %45 = sbr.rel (0) target = $region53
  $region52: #{forward.1} parent=0 // pred_region
    _
  $region53: #{forward.1} parent=0 // pred_fallthru
    _
  // Predicated region
  $region54: #{forward.1} parent=0 // pred_check
    _
  $region55: #{forward.1} parent=0 // pred_check_branch
    %47 = sbr.rel (0) target = $region57
  $region56: #{forward.1} parent=0 // pred_region
    _
  $region57: #{forward.1} parent=0 // pred_fallthru
    _
  // Predicated region
  $region58: #{forward.1} parent=0 // pred_check
    _
  $region59: #{forward.1} parent=0 // pred_check_branch
    %49 = sbr.rel (0) target = $region61
  $region60: #{forward.1} parent=0 // pred_region
    _
  $region61: #{forward.1} parent=0 // pred_fallthru
    _
  %v50 = vld [vmem:[%s0] sm:$0xff]
  %v51 = vld [vmem:[%s0 + $0x8] sm:$0xff]
  %v52 = vld [vmem:[%s0 + $0x10] sm:$0xff]
  %v53 = vld [vmem:[%s0 + $0x18] sm:$0xff]
  %v54 = vld [vmem:[%s0 + $0x20] sm:$0xff]
  %v55 = vld [vmem:[%s0 + $0x28] sm:$0xff]
  %v56 = vld [vmem:[%s0 + $0x30] sm:$0xff]
  %v57 = vld [vmem:[%s0 + $0x38] sm:$0xff]
  %v58 = vld [vmem:[%s0 + $0x40] sm:$0xff]
  %v59 = vld [vmem:[%s0 + $0x48] sm:$0xff]
  %v60 = vld [vmem:[%s0 + $0x50] sm:$0xff]
  %v61 = vld [vmem:[%s0 + $0x58] sm:$0xff]
  %v62 = vld [vmem:[%s0 + $0x60] sm:$0xff]
  %v63 = vld [vmem:[%s0 + $0x68] sm:$0xff]
  %v64 = vld [vmem:[%s0 + $0x70] sm:$0xff]
  %v65 = vld [vmem:[%s0 + $0x78] sm:$0xff]
  %v66 = vld [vmem:[%s0 + $0x80] sm:$0xff]
  %v67 = vld [vmem:[%s0 + $0x88] sm:$0xff]
  %v68 = vld [vmem:[%s0 + $0x90] sm:$0xff]
  %v69 = vld [vmem:[%s0 + $0x98] sm:$0xff]
  %v70 = vld [vmem:[%s0 + $0xa0] sm:$0xff]
  %v71 = vld [vmem:[%s0 + $0xa8] sm:$0xff]
  %v72 = vld [vmem:[%s0 + $0xb0] sm:$0xff]
  %v73 = vld [vmem:[%s0 + $0xb8] sm:$0xff]
  %v74 = vld [vmem:[%s0 + $0xc0] sm:$0xff]
  %v75 = vld [vmem:[%s0 + $0xc8] sm:$0xff]
  %v76 = vld [vmem:[%s0 + $0xd0] sm:$0xff]
  %v77 = vld [vmem:[%s0 + $0xd8] sm:$0xff]
  %v78 = vld [vmem:[%s0 + $0xe0] sm:$0xff]
  %v79 = vld [vmem:[%s0 + $0xe8] sm:$0xff]
  %v80 = vld [vmem:[%s0 + $0xf0] sm:$0xff]
  %v81 = vld [vmem:[%s0 + $0xf8] sm:$0xff]
  %v82 = vld [vmem:[%s0 + $0x100] sm:$0xff]
  %v83 = vld [vmem:[%s0 + $0x108] sm:$0xff]
  %v84 = vld [vmem:[%s0 + $0x110] sm:$0xff]
  %v85 = vld [vmem:[%s0 + $0x118] sm:$0xff]
  %v86 = vld [vmem:[%s0 + $0x120] sm:$0xff]
  %v87 = vld [vmem:[%s0 + $0x128] sm:$0xff]
  %v88 = vld [vmem:[%s0 + $0x130] sm:$0xff]
  %v89 = vld [vmem:[%s0 + $0x138] sm:$0xff]
  %v90 = vld [vmem:[%s0 + $0x140] sm:$0xff]
  %v91 = vld [vmem:[%s0 + $0x148] sm:$0xff]
  %v92 = vld [vmem:[%s0 + $0x150] sm:$0xff]
  %v93 = vld [vmem:[%s0 + $0x158] sm:$0xff]
  %v94 = vld [vmem:[%s0 + $0x160] sm:$0xff]
  %v95 = vld [vmem:[%s0 + $0x168] sm:$0xff]
  %v96 = vld [vmem:[%s0 + $0x170] sm:$0xff]
  %v97 = vld [vmem:[%s0 + $0x178] sm:$0xff]
  %v98 = vld [vmem:[%s0 + $0x180] sm:$0xff]
  %v99 = vld [vmem:[%s0 + $0x188] sm:$0xff]
  %v100 = vld [vmem:[%s0 + $0x190] sm:$0xff]
  %v101 = vld [vmem:[%s0 + $0x198] sm:$0xff]
  %v102 = vld [vmem:[%s0 + $0x1a0] sm:$0xff]
  %v103 = vld [vmem:[%s0 + $0x1a8] sm:$0xff]
  %v104 = vld [vmem:[%s0 + $0x1b0] sm:$0xff]
  %v105 = vld [vmem:[%s0 + $0x1b8] sm:$0xff]
  %v106 = vld [vmem:[%s0 + $0x1c0] sm:$0xff]
  %v107 = vld [vmem:[%s0 + $0x1c8] sm:$0xff]
  %v108 = vld [vmem:[%s0 + $0x1d0] sm:$0xff]
  %v109 = vld [vmem:[%s0 + $0x1d8] sm:$0xff]
  %v110 = vld [vmem:[%s0 + $0x1e0] sm:$0xff]
  %v111 = vld [vmem:[%s0 + $0x1e8] sm:$0xff]
  %v112 = vld [vmem:[%s0 + $0x1f0] sm:$0xff]
  %v113 = vld [vmem:[%s0 + $0x1f8] sm:$0xff]
  %v114 = vld [vmem:[%s0 + $0x200] sm:$0xff]
  %v115 = vld [vmem:[%s0 + $0x208] sm:$0xff]
  %v116 = vld [vmem:[%s0 + $0x210] sm:$0xff]
  %v117 = vld [vmem:[%s0 + $0x218] sm:$0xff]
  %v118 = vld [vmem:[%s0 + $0x220] sm:$0xff]
  %v119 = vld [vmem:[%s0 + $0x228] sm:$0xff]
  %v120 = vld [vmem:[%s0 + $0x230] sm:$0xff]
  %v121 = vld [vmem:[%s0 + $0x238] sm:$0xff]
  %v122 = vld [vmem:[%s1] sm:$0xff]
  %v123 = vld [vmem:[%s1 + $0x8] sm:$0x1]
  %vm124 = vcmask 72704
  %v126 = vsel %vm124, %v50, 0
  %v129 = vsel %vm124, %v51, 0
  %v132 = vsel %vm124, %v52, 0
  %v135 = vsel %vm124, %v53, 0
  %v138 = vsel %vm124, %v54, 0
  %v141 = vsel %vm124, %v55, 0
  %v144 = vsel %vm124, %v56, 0
  %v147 = vsel %vm124, %v57, 0
  %v150 = vsel %vm124, %v58, 0
  %v153 = vsel %vm124, %v59, 0
  %v156 = vsel %vm124, %v60, 0
  %v159 = vsel %vm124, %v61, 0
  %v162 = vsel %vm124, %v62, 0
  %v165 = vsel %vm124, %v63, 0
  %v168 = vsel %vm124, %v64, 0
  %v171 = vsel %vm124, %v65, 0
  %v174 = vsel %vm124, %v66, 0
  %v177 = vsel %vm124, %v67, 0
  %v180 = vsel %vm124, %v68, 0
  %v183 = vsel %vm124, %v69, 0
  %v186 = vsel %vm124, %v70, 0
  %v189 = vsel %vm124, %v71, 0
  %v192 = vsel %vm124, %v72, 0
  %v195 = vsel %vm124, %v73, 0
  %v198 = vsel %vm124, %v74, 0
  %v201 = vsel %vm124, %v75, 0
  %v204 = vsel %vm124, %v76, 0
  %v207 = vsel %vm124, %v77, 0
  %v210 = vsel %vm124, %v78, 0
  %v213 = vsel %vm124, %v79, 0
  %v216 = vsel %vm124, %v80, 0
  %v219 = vsel %vm124, %v81, 0
  %v222 = vsel %vm124, %v82, 0
  %v225 = vsel %vm124, %v83, 0
  %v228 = vsel %vm124, %v84, 0
  %v231 = vsel %vm124, %v85, 0
  %v234 = vsel %vm124, %v86, 0
  %v237 = vsel %vm124, %v87, 0
  %v240 = vsel %vm124, %v88, 0
  %v243 = vsel %vm124, %v89, 0
  %v246 = vsel %vm124, %v90, 0
  %v249 = vsel %vm124, %v91, 0
  %v252 = vsel %vm124, %v92, 0
  %v255 = vsel %vm124, %v93, 0
  %v258 = vsel %vm124, %v94, 0
  %v261 = vsel %vm124, %v95, 0
  %v264 = vsel %vm124, %v96, 0
  %v267 = vsel %vm124, %v97, 0
  %v270 = vsel %vm124, %v98, 0
  %v273 = vsel %vm124, %v99, 0
  %v276 = vsel %vm124, %v100, 0
  %v279 = vsel %vm124, %v101, 0
  %v282 = vsel %vm124, %v102, 0
  %v285 = vsel %vm124, %v103, 0
  %v288 = vsel %vm124, %v104, 0
  %v291 = vsel %vm124, %v105, 0
  %v294 = vsel %vm124, %v106, 0
  %v297 = vsel %vm124, %v107, 0
  %v300 = vsel %vm124, %v108, 0
  %v303 = vsel %vm124, %v109, 0
  %v306 = vsel %vm124, %v110, 0
  %v309 = vsel %vm124, %v111, 0
  %v312 = vsel %vm124, %v112, 0
  %v315 = vsel %vm124, %v113, 0
  %v318 = vsel %vm124, %v114, 0
  %v321 = vsel %vm124, %v115, 0
  %v324 = vsel %vm124, %v116, 0
  %v327 = vsel %vm124, %v117, 0
  %v330 = vsel %vm124, %v118, 0
  %v333 = vsel %vm124, %v119, 0
  %v336 = vsel %vm124, %v120, 0
  %v339 = vsel %vm124, %v121, 0
  %vm341 = vcmask 1040384
  %v343 = vsel %vm341, %v123, 0
  %345 = vmatprep.subr.mxu0 0.0
  %346 = vmatpush1.msra.mxu0 %v122
  %347 = vmatprep.subr.mxu0 0.0
  %348 = vmatpush1.msra.mxu0 %v343
  %349 = vmatprep.subr.mxu0 0.0
  %350 = vmatpush1.msra.mxu0 0.0
  %351 = vmatprep.subr.mxu0 0.0
  %352 = vmatpush1.msra.mxu0 0.0
  %353 = vmatprep.subr.mxu0 0.0
  %354 = vmatpush1.msra.mxu0 0.0
  %355 = vmatprep.subr.mxu0 0.0
  %356 = vmatpush1.msra.mxu0 0.0
  %357 = vmatprep.subr.mxu0 0.0
  %358 = vmatpush1.msra.mxu0 0.0
  %359 = vmatprep.subr.mxu0 0.0
  %360 = vmatpush1.msra.mxu0 0.0
  %361 = vmatprep.subr.mxu0 0.0
  %362 = vmatpush1.msra.mxu0 0.0
  %363 = vmatprep.subr.mxu0 0.0
  %364 = vmatpush1.msra.mxu0 0.0
  %365 = vmatprep.subr.mxu0 0.0
  %366 = vmatpush1.msra.mxu0 0.0
  %367 = vmatprep.subr.mxu0 0.0
  %368 = vmatpush1.msra.mxu0 0.0
  %369 = vmatprep.subr.mxu0 0.0
  %370 = vmatpush1.msra.mxu0 0.0
  %371 = vmatprep.subr.mxu0 0.0
  %372 = vmatpush1.msra.mxu0 0.0
  %373 = vmatprep.subr.mxu0 0.0
  %374 = vmatpush1.msra.mxu0 0.0
  %375 = vmatprep.subr.mxu0 0.0
  %376 = vmatpush1.msra.mxu0 0.0
  %377 = vmatprep.subr.mxu0 0.0
  %378 = vmatpush1.msra.mxu0 0.0
  %379 = vmatprep.subr.mxu0 0.0
  %380 = vmatpush1.msra.mxu0 0.0
  %381 = vmatprep.subr.mxu0 0.0
  %382 = vmatpush1.msra.mxu0 0.0
  %383 = vmatprep.subr.mxu0 0.0
  %384 = vmatpush1.msra.mxu0 0.0
  %385 = vmatprep.subr.mxu0 0.0
  %386 = vmatpush1.msra.mxu0 0.0
  %387 = vmatprep.subr.mxu0 0.0
  %388 = vmatpush1.msra.mxu0 0.0
  %389 = vmatprep.subr.mxu0 0.0
  %390 = vmatpush1.msra.mxu0 0.0
  %391 = vmatprep.subr.mxu0 0.0
  %392 = vmatpush1.msra.mxu0 0.0
  %393 = vmatprep.subr.mxu0 0.0
  %394 = vmatpush1.msra.mxu0 0.0
  %395 = vmatprep.subr.mxu0 0.0
  %396 = vmatpush1.msra.mxu0 0.0
  %397 = vmatprep.subr.mxu0 0.0
  %398 = vmatpush1.msra.mxu0 0.0
  %399 = vmatprep.subr.mxu0 0.0
  %400 = vmatpush1.msra.mxu0 0.0
  %401 = vmatprep.subr.mxu0 0.0
  %402 = vmatpush1.msra.mxu0 0.0
  %403 = vmatprep.subr.mxu0 0.0
  %404 = vmatpush1.msra.mxu0 0.0
  %405 = vmatprep.subr.mxu0 0.0
  %406 = vmatpush1.msra.mxu0 0.0
  %407 = vmatprep.subr.mxu0 0.0
  %408 = vmatpush1.msra.mxu0 0.0
  %409 = vmatprep.mubr.f32.mxu0 0.0
  %410 = vmatmul.mubr.f32.gmra.mrb[0].mxu0 %v126
  %v411 = vpop.f32.mrb[0].mxu0
  %v412 = vadd.f32 0.0, %v411
  %v413 = vpop.f32.mrb[0].mxu0
  %414 = vmatprep.mubr.f32.mxu0 0.0
  %415 = vmatmul.mubr.f32.gmra.mrb[0].mxu0 %v129
  %v416 = vpop.f32.mrb[0].mxu0
  %v417 = vadd.f32 0.0, %v416
  %v418 = vpop.f32.mrb[0].mxu0
  %419 = vmatprep.mubr.f32.mxu0 0.0
  %420 = vmatmul.mubr.f32.gmra.mrb[0].mxu0 %v132
  %v421 = vpop.f32.mrb[0].mxu0
  %v422 = vadd.f32 0.0, %v421
  %v423 = vpop.f32.mrb[0].mxu0
  %424 = vmatprep.mubr.f32.mxu0 0.0
  %425 = vmatmul.mubr.f32.gmra.mrb[0].mxu0 %v135
  %v426 = vpop.f32.mrb[0].mxu0
  %v427 = vadd.f32 0.0, %v426
  %v428 = vpop.f32.mrb[0].mxu0
  %429 = vmatprep.mubr.f32.mxu0 0.0
  %430 = vmatmul.mubr.f32.gmra.mrb[0].mxu0 %v138
  %v431 = vpop.f32.mrb[0].mxu0
  %v432 = vadd.f32 0.0, %v431
  %v433 = vpop.f32.mrb[0].mxu0
  %434 = vmatprep.mubr.f32.mxu0 0.0
  %435 = vmatmul.mubr.f32.gmra.mrb[0].mxu0 %v141
  %v436 = vpop.f32.mrb[0].mxu0
  %v437 = vadd.f32 0.0, %v436
  %v438 = vpop.f32.mrb[0].mxu0
  %439 = vmatprep.mubr.f32.mxu0 0.0
  %440 = vmatmul.mubr.f32.gmra.mrb[0].mxu0 %v144
  %v441 = vpop.f32.mrb[0].mxu0
  %v442 = vadd.f32 0.0, %v441
  %v443 = vpop.f32.mrb[0].mxu0
  %444 = vmatprep.mubr.f32.mxu0 0.0
  %445 = vmatmul.mubr.f32.gmra.mrb[0].mxu0 %v147
  %v446 = vpop.f32.mrb[0].mxu0
  %v447 = vadd.f32 0.0, %v446
  %v448 = vpop.f32.mrb[0].mxu0
  %449 = vmatprep.mubr.f32.mxu0 0.0
  %450 = vmatmul.mubr.f32.gmra.mrb[0].mxu0 %v150
  %v451 = vpop.f32.mrb[0].mxu0
  %v452 = vadd.f32 0.0, %v451
  %v453 = vpop.f32.mrb[0].mxu0
  %454 = vmatprep.mubr.f32.mxu0 0.0
  %455 = vmatmul.mubr.f32.gmra.mrb[0].mxu0 %v153
  %v456 = vpop.f32.mrb[0].mxu0
  %v457 = vadd.f32 0.0, %v456
  %v458 = vpop.f32.mrb[0].mxu0
  %459 = vmatprep.mubr.f32.mxu0 0.0
  %460 = vmatmul.mubr.f32.gmra.mrb[0].mxu0 %v156
  %v461 = vpop.f32.mrb[0].mxu0
  %v462 = vadd.f32 0.0, %v461
  %v463 = vpop.f32.mrb[0].mxu0
  %464 = vmatprep.mubr.f32.mxu0 0.0
  %465 = vmatmul.mubr.f32.gmra.mrb[0].mxu0 %v159
  %v466 = vpop.f32.mrb[0].mxu0
  %v467 = vadd.f32 0.0, %v466
  %v468 = vpop.f32.mrb[0].mxu0
  %469 = vmatprep.mubr.f32.mxu0 0.0
  %470 = vmatmul.mubr.f32.gmra.mrb[0].mxu0 %v162
  %v471 = vpop.f32.mrb[0].mxu0
  %v472 = vadd.f32 0.0, %v471
  %v473 = vpop.f32.mrb[0].mxu0
  %474 = vmatprep.mubr.f32.mxu0 0.0
  %475 = vmatmul.mubr.f32.gmra.mrb[0].mxu0 %v165
  %v476 = vpop.f32.mrb[0].mxu0
  %v477 = vadd.f32 0.0, %v476
  %v478 = vpop.f32.mrb[0].mxu0
  %479 = vmatprep.mubr.f32.mxu0 0.0
  %480 = vmatmul.mubr.f32.gmra.mrb[0].mxu0 %v168
  %v481 = vpop.f32.mrb[0].mxu0
  %v482 = vadd.f32 0.0, %v481
  %v483 = vpop.f32.mrb[0].mxu0
  %484 = vmatprep.mubr.f32.mxu0 0.0
  %485 = vmatmul.mubr.f32.gmra.mrb[0].mxu0 %v171
  %v486 = vpop.f32.mrb[0].mxu0
  %v487 = vadd.f32 0.0, %v486
  %v488 = vpop.f32.mrb[0].mxu0
  %489 = vmatprep.mubr.f32.mxu0 0.0
  %490 = vmatmul.mubr.f32.gmra.mrb[0].mxu0 %v174
  %v491 = vpop.f32.mrb[0].mxu0
  %v492 = vadd.f32 0.0, %v491
  %v493 = vpop.f32.mrb[0].mxu0
  %494 = vmatprep.mubr.f32.mxu0 0.0
  %495 = vmatmul.mubr.f32.gmra.mrb[0].mxu0 %v177
  %v496 = vpop.f32.mrb[0].mxu0
  %v497 = vadd.f32 0.0, %v496
  %v498 = vpop.f32.mrb[0].mxu0
  %499 = vmatprep.mubr.f32.mxu0 0.0
  %500 = vmatmul.mubr.f32.gmra.mrb[0].mxu0 %v180
  %v501 = vpop.f32.mrb[0].mxu0
  %v502 = vadd.f32 0.0, %v501
  %v503 = vpop.f32.mrb[0].mxu0
  %504 = vmatprep.mubr.f32.mxu0 0.0
  %505 = vmatmul.mubr.f32.gmra.mrb[0].mxu0 %v183
  %v506 = vpop.f32.mrb[0].mxu0
  %v507 = vadd.f32 0.0, %v506
  %v508 = vpop.f32.mrb[0].mxu0
  %509 = vmatprep.mubr.f32.mxu0 0.0
  %510 = vmatmul.mubr.f32.gmra.mrb[0].mxu0 %v186
  %v511 = vpop.f32.mrb[0].mxu0
  %v512 = vadd.f32 0.0, %v511
  %v513 = vpop.f32.mrb[0].mxu0
  %514 = vmatprep.mubr.f32.mxu0 0.0
  %515 = vmatmul.mubr.f32.gmra.mrb[0].mxu0 %v189
  %v516 = vpop.f32.mrb[0].mxu0
  %v517 = vadd.f32 0.0, %v516
  %v518 = vpop.f32.mrb[0].mxu0
  %519 = vmatprep.mubr.f32.mxu0 0.0
  %520 = vmatmul.mubr.f32.gmra.mrb[0].mxu0 %v192
  %v521 = vpop.f32.mrb[0].mxu0
  %v522 = vadd.f32 0.0, %v521
  %v523 = vpop.f32.mrb[0].mxu0
  %524 = vmatprep.mubr.f32.mxu0 0.0
  %525 = vmatmul.mubr.f32.gmra.mrb[0].mxu0 %v195
  %v526 = vpop.f32.mrb[0].mxu0
  %v527 = vadd.f32 0.0, %v526
  %v528 = vpop.f32.mrb[0].mxu0
  %529 = vmatprep.mubr.f32.mxu0 0.0
  %530 = vmatmul.mubr.f32.gmra.mrb[0].mxu0 %v198
  %v531 = vpop.f32.mrb[0].mxu0
  %v532 = vadd.f32 0.0, %v531
  %v533 = vpop.f32.mrb[0].mxu0
  %534 = vmatprep.mubr.f32.mxu0 0.0
  %535 = vmatmul.mubr.f32.gmra.mrb[0].mxu0 %v201
  %v536 = vpop.f32.mrb[0].mxu0
  %v537 = vadd.f32 0.0, %v536
  %v538 = vpop.f32.mrb[0].mxu0
  %539 = vmatprep.mubr.f32.mxu0 0.0
  %540 = vmatmul.mubr.f32.gmra.mrb[0].mxu0 %v204
  %v541 = vpop.f32.mrb[0].mxu0
  %v542 = vadd.f32 0.0, %v541
  %v543 = vpop.f32.mrb[0].mxu0
  %544 = vmatprep.mubr.f32.mxu0 0.0
  %545 = vmatmul.mubr.f32.gmra.mrb[0].mxu0 %v207
  %v546 = vpop.f32.mrb[0].mxu0
  %v547 = vadd.f32 0.0, %v546
  %v548 = vpop.f32.mrb[0].mxu0
  %549 = vmatprep.mubr.f32.mxu0 0.0
  %550 = vmatmul.mubr.f32.gmra.mrb[0].mxu0 %v210
  %v551 = vpop.f32.mrb[0].mxu0
  %v552 = vadd.f32 0.0, %v551
  %v553 = vpop.f32.mrb[0].mxu0
  %554 = vmatprep.mubr.f32.mxu0 0.0
  %555 = vmatmul.mubr.f32.gmra.mrb[0].mxu0 %v213
  %v556 = vpop.f32.mrb[0].mxu0
  %v557 = vadd.f32 0.0, %v556
  %v558 = vpop.f32.mrb[0].mxu0
  %559 = vmatprep.mubr.f32.mxu0 0.0
  %560 = vmatmul.mubr.f32.gmra.mrb[0].mxu0 %v216
  %v561 = vpop.f32.mrb[0].mxu0
  %v562 = vadd.f32 0.0, %v561
  %v563 = vpop.f32.mrb[0].mxu0
  %564 = vmatprep.mubr.f32.mxu0 0.0
  %565 = vmatmul.mubr.f32.gmra.mrb[0].mxu0 %v219
  %v566 = vpop.f32.mrb[0].mxu0
  %v567 = vadd.f32 0.0, %v566
  %v568 = vpop.f32.mrb[0].mxu0
  %569 = vmatprep.mubr.f32.mxu0 0.0
  %570 = vmatmul.mubr.f32.gmra.mrb[0].mxu0 %v222
  %v571 = vpop.f32.mrb[0].mxu0
  %v572 = vadd.f32 0.0, %v571
  %v573 = vpop.f32.mrb[0].mxu0
  %574 = vmatprep.mubr.f32.mxu0 0.0
  %575 = vmatmul.mubr.f32.gmra.mrb[0].mxu0 %v225
  %v576 = vpop.f32.mrb[0].mxu0
  %v577 = vadd.f32 0.0, %v576
  %v578 = vpop.f32.mrb[0].mxu0
  %579 = vmatprep.mubr.f32.mxu0 0.0
  %580 = vmatmul.mubr.f32.gmra.mrb[0].mxu0 %v228
  %v581 = vpop.f32.mrb[0].mxu0
  %v582 = vadd.f32 0.0, %v581
  %v583 = vpop.f32.mrb[0].mxu0
  %584 = vmatprep.mubr.f32.mxu0 0.0
  %585 = vmatmul.mubr.f32.gmra.mrb[0].mxu0 %v231
  %v586 = vpop.f32.mrb[0].mxu0
  %v587 = vadd.f32 0.0, %v586
  %v588 = vpop.f32.mrb[0].mxu0
  %589 = vmatprep.mubr.f32.mxu0 0.0
  %590 = vmatmul.mubr.f32.gmra.mrb[0].mxu0 %v234
  %v591 = vpop.f32.mrb[0].mxu0
  %v592 = vadd.f32 0.0, %v591
  %v593 = vpop.f32.mrb[0].mxu0
  %594 = vmatprep.mubr.f32.mxu0 0.0
  %595 = vmatmul.mubr.f32.gmra.mrb[0].mxu0 %v237
  %v596 = vpop.f32.mrb[0].mxu0
  %v597 = vadd.f32 0.0, %v596
  %v598 = vpop.f32.mrb[0].mxu0
  %599 = vmatprep.mubr.f32.mxu0 0.0
  %600 = vmatmul.mubr.f32.gmra.mrb[0].mxu0 %v240
  %v601 = vpop.f32.mrb[0].mxu0
  %v602 = vadd.f32 0.0, %v601
  %v603 = vpop.f32.mrb[0].mxu0
  %604 = vmatprep.mubr.f32.mxu0 0.0
  %605 = vmatmul.mubr.f32.gmra.mrb[0].mxu0 %v243
  %v606 = vpop.f32.mrb[0].mxu0
  %v607 = vadd.f32 0.0, %v606
  %v608 = vpop.f32.mrb[0].mxu0
  %609 = vmatprep.mubr.f32.mxu0 0.0
  %610 = vmatmul.mubr.f32.gmra.mrb[0].mxu0 %v246
  %v611 = vpop.f32.mrb[0].mxu0
  %v612 = vadd.f32 0.0, %v611
  %v613 = vpop.f32.mrb[0].mxu0
  %614 = vmatprep.mubr.f32.mxu0 0.0
  %615 = vmatmul.mubr.f32.gmra.mrb[0].mxu0 %v249
  %v616 = vpop.f32.mrb[0].mxu0
  %v617 = vadd.f32 0.0, %v616
  %v618 = vpop.f32.mrb[0].mxu0
  %619 = vmatprep.mubr.f32.mxu0 0.0
  %620 = vmatmul.mubr.f32.gmra.mrb[0].mxu0 %v252
  %v621 = vpop.f32.mrb[0].mxu0
  %v622 = vadd.f32 0.0, %v621
  %v623 = vpop.f32.mrb[0].mxu0
  %624 = vmatprep.mubr.f32.mxu0 0.0
  %625 = vmatmul.mubr.f32.gmra.mrb[0].mxu0 %v255
  %v626 = vpop.f32.mrb[0].mxu0
  %v627 = vadd.f32 0.0, %v626
  %v628 = vpop.f32.mrb[0].mxu0
  %629 = vmatprep.mubr.f32.mxu0 0.0
  %630 = vmatmul.mubr.f32.gmra.mrb[0].mxu0 %v258
  %v631 = vpop.f32.mrb[0].mxu0
  %v632 = vadd.f32 0.0, %v631
  %v633 = vpop.f32.mrb[0].mxu0
  %634 = vmatprep.mubr.f32.mxu0 0.0
  %635 = vmatmul.mubr.f32.gmra.mrb[0].mxu0 %v261
  %v636 = vpop.f32.mrb[0].mxu0
  %v637 = vadd.f32 0.0, %v636
  %v638 = vpop.f32.mrb[0].mxu0
  %639 = vmatprep.mubr.f32.mxu0 0.0
  %640 = vmatmul.mubr.f32.gmra.mrb[0].mxu0 %v264
  %v641 = vpop.f32.mrb[0].mxu0
  %v642 = vadd.f32 0.0, %v641
  %v643 = vpop.f32.mrb[0].mxu0
  %644 = vmatprep.mubr.f32.mxu0 0.0
  %645 = vmatmul.mubr.f32.gmra.mrb[0].mxu0 %v267
  %v646 = vpop.f32.mrb[0].mxu0
  %v647 = vadd.f32 0.0, %v646
  %v648 = vpop.f32.mrb[0].mxu0
  %649 = vmatprep.mubr.f32.mxu0 0.0
  %650 = vmatmul.mubr.f32.gmra.mrb[0].mxu0 %v270
  %v651 = vpop.f32.mrb[0].mxu0
  %v652 = vadd.f32 0.0, %v651
  %v653 = vpop.f32.mrb[0].mxu0
  %654 = vmatprep.mubr.f32.mxu0 0.0
  %655 = vmatmul.mubr.f32.gmra.mrb[0].mxu0 %v273
  %v656 = vpop.f32.mrb[0].mxu0
  %v657 = vadd.f32 0.0, %v656
  %v658 = vpop.f32.mrb[0].mxu0
  %659 = vmatprep.mubr.f32.mxu0 0.0
  %660 = vmatmul.mubr.f32.gmra.mrb[0].mxu0 %v276
  %v661 = vpop.f32.mrb[0].mxu0
  %v662 = vadd.f32 0.0, %v661
  %v663 = vpop.f32.mrb[0].mxu0
  %664 = vmatprep.mubr.f32.mxu0 0.0
  %665 = vmatmul.mubr.f32.gmra.mrb[0].mxu0 %v279
  %v666 = vpop.f32.mrb[0].mxu0
  %v667 = vadd.f32 0.0, %v666
  %v668 = vpop.f32.mrb[0].mxu0
  %669 = vmatprep.mubr.f32.mxu0 0.0
  %670 = vmatmul.mubr.f32.gmra.mrb[0].mxu0 %v282
  %v671 = vpop.f32.mrb[0].mxu0
  %v672 = vadd.f32 0.0, %v671
  %v673 = vpop.f32.mrb[0].mxu0
  %674 = vmatprep.mubr.f32.mxu0 0.0
  %675 = vmatmul.mubr.f32.gmra.mrb[0].mxu0 %v285
  %v676 = vpop.f32.mrb[0].mxu0
  %v677 = vadd.f32 0.0, %v676
  %v678 = vpop.f32.mrb[0].mxu0
  %679 = vmatprep.mubr.f32.mxu0 0.0
  %680 = vmatmul.mubr.f32.gmra.mrb[0].mxu0 %v288
  %v681 = vpop.f32.mrb[0].mxu0
  %v682 = vadd.f32 0.0, %v681
  %v683 = vpop.f32.mrb[0].mxu0
  %684 = vmatprep.mubr.f32.mxu0 0.0
  %685 = vmatmul.mubr.f32.gmra.mrb[0].mxu0 %v291
  %v686 = vpop.f32.mrb[0].mxu0
  %v687 = vadd.f32 0.0, %v686
  %v688 = vpop.f32.mrb[0].mxu0
  %689 = vmatprep.mubr.f32.mxu0 0.0
  %690 = vmatmul.mubr.f32.gmra.mrb[0].mxu0 %v294
  %v691 = vpop.f32.mrb[0].mxu0
  %v692 = vadd.f32 0.0, %v691
  %v693 = vpop.f32.mrb[0].mxu0
  %694 = vmatprep.mubr.f32.mxu0 0.0
  %695 = vmatmul.mubr.f32.gmra.mrb[0].mxu0 %v297
  %v696 = vpop.f32.mrb[0].mxu0
  %v697 = vadd.f32 0.0, %v696
  %v698 = vpop.f32.mrb[0].mxu0
  %699 = vmatprep.mubr.f32.mxu0 0.0
  %700 = vmatmul.mubr.f32.gmra.mrb[0].mxu0 %v300
  %v701 = vpop.f32.mrb[0].mxu0
  %v702 = vadd.f32 0.0, %v701
  %v703 = vpop.f32.mrb[0].mxu0
  %704 = vmatprep.mubr.f32.mxu0 0.0
  %705 = vmatmul.mubr.f32.gmra.mrb[0].mxu0 %v303
  %v706 = vpop.f32.mrb[0].mxu0
  %v707 = vadd.f32 0.0, %v706
  %v708 = vpop.f32.mrb[0].mxu0
  %709 = vmatprep.mubr.f32.mxu0 0.0
  %710 = vmatmul.mubr.f32.gmra.mrb[0].mxu0 %v306
  %v711 = vpop.f32.mrb[0].mxu0
  %v712 = vadd.f32 0.0, %v711
  %v713 = vpop.f32.mrb[0].mxu0
  %714 = vmatprep.mubr.f32.mxu0 0.0
  %715 = vmatmul.mubr.f32.gmra.mrb[0].mxu0 %v309
  %v716 = vpop.f32.mrb[0].mxu0
  %v717 = vadd.f32 0.0, %v716
  %v718 = vpop.f32.mrb[0].mxu0
  %719 = vmatprep.mubr.f32.mxu0 0.0
  %720 = vmatmul.mubr.f32.gmra.mrb[0].mxu0 %v312
  %v721 = vpop.f32.mrb[0].mxu0
  %v722 = vadd.f32 0.0, %v721
  %v723 = vpop.f32.mrb[0].mxu0
  %724 = vmatprep.mubr.f32.mxu0 0.0
  %725 = vmatmul.mubr.f32.gmra.mrb[0].mxu0 %v315
  %v726 = vpop.f32.mrb[0].mxu0
  %v727 = vadd.f32 0.0, %v726
  %v728 = vpop.f32.mrb[0].mxu0
  %729 = vmatprep.mubr.f32.mxu0 0.0
  %730 = vmatmul.mubr.f32.gmra.mrb[0].mxu0 %v318
  %v731 = vpop.f32.mrb[0].mxu0
  %v732 = vadd.f32 0.0, %v731
  %v733 = vpop.f32.mrb[0].mxu0
  %734 = vmatprep.mubr.f32.mxu0 0.0
  %735 = vmatmul.mubr.f32.gmra.mrb[0].mxu0 %v321
  %v736 = vpop.f32.mrb[0].mxu0
  %v737 = vadd.f32 0.0, %v736
  %v738 = vpop.f32.mrb[0].mxu0
  %739 = vmatprep.mubr.f32.mxu0 0.0
  %740 = vmatmul.mubr.f32.gmra.mrb[0].mxu0 %v324
  %v741 = vpop.f32.mrb[0].mxu0
  %v742 = vadd.f32 0.0, %v741
  %v743 = vpop.f32.mrb[0].mxu0
  %744 = vmatprep.mubr.f32.mxu0 0.0
  %745 = vmatmul.mubr.f32.gmra.mrb[0].mxu0 %v327
  %v746 = vpop.f32.mrb[0].mxu0
  %v747 = vadd.f32 0.0, %v746
  %v748 = vpop.f32.mrb[0].mxu0
  %749 = vmatprep.mubr.f32.mxu0 0.0
  %750 = vmatmul.mubr.f32.gmra.mrb[0].mxu0 %v330
  %v751 = vpop.f32.mrb[0].mxu0
  %v752 = vadd.f32 0.0, %v751
  %v753 = vpop.f32.mrb[0].mxu0
  %754 = vmatprep.mubr.f32.mxu0 0.0
  %755 = vmatmul.mubr.f32.gmra.mrb[0].mxu0 %v333
  %v756 = vpop.f32.mrb[0].mxu0
  %v757 = vadd.f32 0.0, %v756
  %v758 = vpop.f32.mrb[0].mxu0
  %759 = vmatprep.mubr.f32.mxu0 0.0
  %760 = vmatmul.mubr.f32.gmra.mrb[0].mxu0 %v336
  %v761 = vpop.f32.mrb[0].mxu0
  %v762 = vadd.f32 0.0, %v761
  %v763 = vpop.f32.mrb[0].mxu0
  %764 = vmatprep.mubr.f32.mxu0 0.0
  %765 = vmatmul.mubr.f32.gmra.mrb[0].mxu0 %v339
  %v766 = vpop.f32.mrb[0].mxu0
  %v767 = vadd.f32 0.0, %v766
  %v768 = vpop.f32.mrb[0].mxu0
  %769 = vdwg.mxu0
  %v770 = vmax.f32 %v412, %v502
  %v771 = vmax.f32 %v417, %v507
  %v772 = vmax.f32 %v422, %v512
  %v773 = vmax.f32 %v427, %v517
  %v774 = vmax.f32 %v432, %v522
  %v775 = vmax.f32 %v437, %v527
  %v776 = vmax.f32 %v442, %v532
  %v777 = vmax.f32 %v447, %v537
  %v778 = vmax.f32 %v452, %v542
  %v779 = vmax.f32 %v457, %v547
  %v780 = vmax.f32 %v462, %v552
  %v781 = vmax.f32 %v467, %v557
  %v782 = vmax.f32 %v472, %v562
  %v783 = vmax.f32 %v477, %v567
  %v784 = vmax.f32 %v482, %v572
  %v785 = vmax.f32 %v487, %v577
  %v786 = vmax.f32 %v492, %v582
  %v787 = vmax.f32 %v497, %v587
  %v788 = vmax.f32 %v592, %v682
  %v789 = vmax.f32 %v597, %v687
  %v790 = vmax.f32 %v602, %v692
  %v791 = vmax.f32 %v607, %v697
  %v792 = vmax.f32 %v612, %v702
  %v793 = vmax.f32 %v617, %v707
  %v794 = vmax.f32 %v622, %v712
  %v795 = vmax.f32 %v627, %v717
  %v796 = vmax.f32 %v632, %v722
  %v797 = vmax.f32 %v637, %v727
  %v798 = vmax.f32 %v642, %v732
  %v799 = vmax.f32 %v647, %v737
  %v800 = vmax.f32 %v652, %v742
  %v801 = vmax.f32 %v657, %v747
  %v802 = vmax.f32 %v662, %v752
  %v803 = vmax.f32 %v667, %v757
  %v804 = vmax.f32 %v672, %v762
  %v805 = vmax.f32 %v677, %v767
  %v806 = vmax.f32 %v770, %v788
  %v807 = vmax.f32 %v771, %v789
  %v808 = vmax.f32 %v772, %v790
  %v809 = vmax.f32 %v773, %v791
  %v810 = vmax.f32 %v774, %v792
  %v811 = vmax.f32 %v775, %v793
  %v812 = vmax.f32 %v776, %v794
  %v813 = vmax.f32 %v777, %v795
  %v814 = vmax.f32 %v778, %v796
  %v815 = vmax.f32 %v779, %v797
  %v816 = vmax.f32 %v780, %v798
  %v817 = vmax.f32 %v781, %v799
  %v818 = vmax.f32 %v782, %v800
  %v819 = vmax.f32 %v783, %v801
  %v820 = vmax.f32 %v784, %v802
  %v821 = vmax.f32 %v785, %v803
  %v822 = vmax.f32 %v786, %v804
  %v823 = vmax.f32 %v787, %v805
  %v824 = vld [vmem:[%s2] sm:$0x1]
  %v826 = vlaneseq
  %v827 = vshrl.u32 %v826, 7
  %v828 = vsub.s32 0, %v827
  %v829 = vrot.slane %v824, %v828
  %v831 = vadd.f32 %v806, %v829
  %v832 = vadd.f32 %v807, %v829
  %v833 = vadd.f32 %v808, %v829
  %v834 = vadd.f32 %v809, %v829
  %v835 = vadd.f32 %v810, %v829
  %v836 = vadd.f32 %v811, %v829
  %v837 = vadd.f32 %v812, %v829
  %v838 = vadd.f32 %v813, %v829
  %v839 = vadd.f32 %v814, %v829
  %v840 = vadd.f32 %v815, %v829
  %v841 = vadd.f32 %v816, %v829
  %v842 = vadd.f32 %v817, %v829
  %v843 = vadd.f32 %v818, %v829
  %v844 = vadd.f32 %v819, %v829
  %v845 = vadd.f32 %v820, %v829
  %v846 = vadd.f32 %v821, %v829
  %v847 = vadd.f32 %v822, %v829
  %v848 = vadd.f32 %v823, %v829
  %v849 = vmax.f32 %v831, 0.0
  %v850 = vmax.f32 %v832, 0.0
  %v851 = vmax.f32 %v833, 0.0
  %v852 = vmax.f32 %v834, 0.0
  %v853 = vmax.f32 %v835, 0.0
  %v854 = vmax.f32 %v836, 0.0
  %v855 = vmax.f32 %v837, 0.0
  %v856 = vmax.f32 %v838, 0.0
  %v857 = vmax.f32 %v839, 0.0
  %v858 = vmax.f32 %v840, 0.0
  %v859 = vmax.f32 %v841, 0.0
  %v860 = vmax.f32 %v842, 0.0
  %v861 = vmax.f32 %v843, 0.0
  %v862 = vmax.f32 %v844, 0.0
  %v863 = vmax.f32 %v845, 0.0
  %v864 = vmax.f32 %v846, 0.0
  %v865 = vmax.f32 %v847, 0.0
  %v866 = vmax.f32 %v848, 0.0
  %vm886 = vcmask 1046528
  %v887 = vrot.slane %v849, 1
  %v888 = vrot.slane %v850, 1
  %v889 = vsel %vm886, %v887, %v888
  %v890 = vrot.slane %v851, 1
  %v891 = vsel %vm886, %v888, %v890
  %v892 = vrot.slane %v852, 1
  %v893 = vsel %vm886, %v890, %v892
  %v894 = vrot.slane %v853, 1
  %v895 = vsel %vm886, %v892, %v894
  %v896 = vrot.slane %v854, 1
  %v897 = vsel %vm886, %v894, %v896
  %v898 = vrot.slane %v855, 1
  %v899 = vsel %vm886, %v896, %v898
  %v900 = vrot.slane %v856, 1
  %v901 = vsel %vm886, %v898, %v900
  %v902 = vrot.slane %v857, 1
  %v903 = vsel %vm886, %v900, %v902
  %v904 = vrot.slane %v858, 1
  %v905 = vsel %vm886, %v902, %v904
  %v906 = vrot.slane %v859, 1
  %v907 = vsel %vm886, %v904, %v906
  %v908 = vrot.slane %v860, 1
  %v909 = vsel %vm886, %v906, %v908
  %v910 = vrot.slane %v861, 1
  %v911 = vsel %vm886, %v908, %v910
  %v912 = vrot.slane %v862, 1
  %v913 = vsel %vm886, %v910, %v912
  %v914 = vrot.slane %v863, 1
  %v915 = vsel %vm886, %v912, %v914
  %v916 = vrot.slane %v864, 1
  %v917 = vsel %vm886, %v914, %v916
  %v918 = vrot.slane %v865, 1
  %v919 = vsel %vm886, %v916, %v918
  %v920 = vrot.slane %v866, 1
  %v921 = vsel %vm886, %v918, %v920
  %v922 = vrot.slane 0.0, 1
  %v923 = vsel %vm886, %v920, %v922
  %924 = vrot.lane.b32.xlu0 %v889, 32
  %v925 = vpop.permute.xlu0 %924
  %926 = vrot.lane.b32.xlu0 %v891, 32
  %v927 = vpop.permute.xlu0 %926
  %928 = vrot.lane.b32.xlu0 %v893, 32
  %v929 = vpop.permute.xlu0 %928
  %930 = vrot.lane.b32.xlu0 %v895, 32
  %v931 = vpop.permute.xlu0 %930
  %932 = vrot.lane.b32.xlu0 %v897, 32
  %v933 = vpop.permute.xlu0 %932
  %934 = vrot.lane.b32.xlu0 %v899, 32
  %v935 = vpop.permute.xlu0 %934
  %936 = vrot.lane.b32.xlu0 %v901, 32
  %v937 = vpop.permute.xlu0 %936
  %938 = vrot.lane.b32.xlu0 %v903, 32
  %v939 = vpop.permute.xlu0 %938
  %940 = vrot.lane.b32.xlu0 %v905, 32
  %v941 = vpop.permute.xlu0 %940
  %942 = vrot.lane.b32.xlu0 %v907, 32
  %v943 = vpop.permute.xlu0 %942
  %944 = vrot.lane.b32.xlu0 %v909, 32
  %v945 = vpop.permute.xlu0 %944
  %946 = vrot.lane.b32.xlu0 %v911, 32
  %v947 = vpop.permute.xlu0 %946
  %948 = vrot.lane.b32.xlu0 %v913, 32
  %v949 = vpop.permute.xlu0 %948
  %950 = vrot.lane.b32.xlu0 %v915, 32
  %v951 = vpop.permute.xlu0 %950
  %952 = vrot.lane.b32.xlu0 %v917, 32
  %v953 = vpop.permute.xlu0 %952
  %954 = vrot.lane.b32.xlu0 %v919, 32
  %v955 = vpop.permute.xlu0 %954
  %956 = vrot.lane.b32.xlu0 %v921, 32
  %v957 = vpop.permute.xlu0 %956
  %958 = vrot.lane.b32.xlu0 %v923, 32
  %v959 = vpop.permute.xlu0 %958
  %vm978 = vcmask 1045504
  %v979 = vrot.slane %v849, 2
  %v980 = vrot.slane %v850, 2
  %v981 = vsel %vm978, %v979, %v980
  %v982 = vrot.slane %v851, 2
  %v983 = vsel %vm978, %v980, %v982
  %v984 = vrot.slane %v852, 2
  %v985 = vsel %vm978, %v982, %v984
  %v986 = vrot.slane %v853, 2
  %v987 = vsel %vm978, %v984, %v986
  %v988 = vrot.slane %v854, 2
  %v989 = vsel %vm978, %v986, %v988
  %v990 = vrot.slane %v855, 2
  %v991 = vsel %vm978, %v988, %v990
  %v992 = vrot.slane %v856, 2
  %v993 = vsel %vm978, %v990, %v992
  %v994 = vrot.slane %v857, 2
  %v995 = vsel %vm978, %v992, %v994
  %v996 = vrot.slane %v858, 2
  %v997 = vsel %vm978, %v994, %v996
  %v998 = vrot.slane %v859, 2
  %v999 = vsel %vm978, %v996, %v998
  %v1000 = vrot.slane %v860, 2
  %v1001 = vsel %vm978, %v998, %v1000
  %v1002 = vrot.slane %v861, 2
  %v1003 = vsel %vm978, %v1000, %v1002
  %v1004 = vrot.slane %v862, 2
  %v1005 = vsel %vm978, %v1002, %v1004
  %v1006 = vrot.slane %v863, 2
  %v1007 = vsel %vm978, %v1004, %v1006
  %v1008 = vrot.slane %v864, 2
  %v1009 = vsel %vm978, %v1006, %v1008
  %v1010 = vrot.slane %v865, 2
  %v1011 = vsel %vm978, %v1008, %v1010
  %v1012 = vrot.slane %v866, 2
  %v1013 = vsel %vm978, %v1010, %v1012
  %v1014 = vrot.slane 0.0, 2
  %v1015 = vsel %vm978, %v1012, %v1014
  %1016 = vrot.lane.b32.xlu0 %v981, 64
  %v1017 = vpop.permute.xlu0 %1016
  %1018 = vrot.lane.b32.xlu0 %v983, 64
  %v1019 = vpop.permute.xlu0 %1018
  %1020 = vrot.lane.b32.xlu0 %v985, 64
  %v1021 = vpop.permute.xlu0 %1020
  %1022 = vrot.lane.b32.xlu0 %v987, 64
  %v1023 = vpop.permute.xlu0 %1022
  %1024 = vrot.lane.b32.xlu0 %v989, 64
  %v1025 = vpop.permute.xlu0 %1024
  %1026 = vrot.lane.b32.xlu0 %v991, 64
  %v1027 = vpop.permute.xlu0 %1026
  %1028 = vrot.lane.b32.xlu0 %v993, 64
  %v1029 = vpop.permute.xlu0 %1028
  %1030 = vrot.lane.b32.xlu0 %v995, 64
  %v1031 = vpop.permute.xlu0 %1030
  %1032 = vrot.lane.b32.xlu0 %v997, 64
  %v1033 = vpop.permute.xlu0 %1032
  %1034 = vrot.lane.b32.xlu0 %v999, 64
  %v1035 = vpop.permute.xlu0 %1034
  %1036 = vrot.lane.b32.xlu0 %v1001, 64
  %v1037 = vpop.permute.xlu0 %1036
  %1038 = vrot.lane.b32.xlu0 %v1003, 64
  %v1039 = vpop.permute.xlu0 %1038
  %1040 = vrot.lane.b32.xlu0 %v1005, 64
  %v1041 = vpop.permute.xlu0 %1040
  %1042 = vrot.lane.b32.xlu0 %v1007, 64
  %v1043 = vpop.permute.xlu0 %1042
  %1044 = vrot.lane.b32.xlu0 %v1009, 64
  %v1045 = vpop.permute.xlu0 %1044
  %1046 = vrot.lane.b32.xlu0 %v1011, 64
  %v1047 = vpop.permute.xlu0 %1046
  %1048 = vrot.lane.b32.xlu0 %v1013, 64
  %v1049 = vpop.permute.xlu0 %1048
  %1050 = vrot.lane.b32.xlu0 %v1015, 64
  %v1051 = vpop.permute.xlu0 %1050
  %vm1070 = vcmask 1041408
  %v1071 = vrot.slane %v849, 6
  %v1072 = vrot.slane %v850, 6
  %v1073 = vsel %vm1070, %v1071, %v1072
  %v1074 = vrot.slane %v851, 6
  %v1075 = vsel %vm1070, %v1072, %v1074
  %v1076 = vrot.slane %v852, 6
  %v1077 = vsel %vm1070, %v1074, %v1076
  %v1078 = vrot.slane %v853, 6
  %v1079 = vsel %vm1070, %v1076, %v1078
  %v1080 = vrot.slane %v854, 6
  %v1081 = vsel %vm1070, %v1078, %v1080
  %v1082 = vrot.slane %v855, 6
  %v1083 = vsel %vm1070, %v1080, %v1082
  %v1084 = vrot.slane %v856, 6
  %v1085 = vsel %vm1070, %v1082, %v1084
  %v1086 = vrot.slane %v857, 6
  %v1087 = vsel %vm1070, %v1084, %v1086
  %v1088 = vrot.slane %v858, 6
  %v1089 = vsel %vm1070, %v1086, %v1088
  %v1090 = vrot.slane %v859, 6
  %v1091 = vsel %vm1070, %v1088, %v1090
  %v1092 = vrot.slane %v860, 6
  %v1093 = vsel %vm1070, %v1090, %v1092
  %v1094 = vrot.slane %v861, 6
  %v1095 = vsel %vm1070, %v1092, %v1094
  %v1096 = vrot.slane %v862, 6
  %v1097 = vsel %vm1070, %v1094, %v1096
  %v1098 = vrot.slane %v863, 6
  %v1099 = vsel %vm1070, %v1096, %v1098
  %v1100 = vrot.slane %v864, 6
  %v1101 = vsel %vm1070, %v1098, %v1100
  %v1102 = vrot.slane %v865, 6
  %v1103 = vsel %vm1070, %v1100, %v1102
  %v1104 = vrot.slane %v866, 6
  %v1105 = vsel %vm1070, %v1102, %v1104
  %v1106 = vrot.slane 0.0, 6
  %v1107 = vsel %vm1070, %v1104, %v1106
  %1108 = vrot.lane.b32.xlu0 %v1073, 96
  %v1109 = vpop.permute.xlu0 %1108
  %1110 = vrot.lane.b32.xlu0 %v1075, 96
  %v1111 = vpop.permute.xlu0 %1110
  %1112 = vrot.lane.b32.xlu0 %v1077, 96
  %v1113 = vpop.permute.xlu0 %1112
  %1114 = vrot.lane.b32.xlu0 %v1079, 96
  %v1115 = vpop.permute.xlu0 %1114
  %1116 = vrot.lane.b32.xlu0 %v1081, 96
  %v1117 = vpop.permute.xlu0 %1116
  %1118 = vrot.lane.b32.xlu0 %v1083, 96
  %v1119 = vpop.permute.xlu0 %1118
  %1120 = vrot.lane.b32.xlu0 %v1085, 96
  %v1121 = vpop.permute.xlu0 %1120
  %1122 = vrot.lane.b32.xlu0 %v1087, 96
  %v1123 = vpop.permute.xlu0 %1122
  %1124 = vrot.lane.b32.xlu0 %v1089, 96
  %v1125 = vpop.permute.xlu0 %1124
  %1126 = vrot.lane.b32.xlu0 %v1091, 96
  %v1127 = vpop.permute.xlu0 %1126
  %1128 = vrot.lane.b32.xlu0 %v1093, 96
  %v1129 = vpop.permute.xlu0 %1128
  %1130 = vrot.lane.b32.xlu0 %v1095, 96
  %v1131 = vpop.permute.xlu0 %1130
  %1132 = vrot.lane.b32.xlu0 %v1097, 96
  %v1133 = vpop.permute.xlu0 %1132
  %1134 = vrot.lane.b32.xlu0 %v1099, 96
  %v1135 = vpop.permute.xlu0 %1134
  %1136 = vrot.lane.b32.xlu0 %v1101, 96
  %v1137 = vpop.permute.xlu0 %1136
  %1138 = vrot.lane.b32.xlu0 %v1103, 96
  %v1139 = vpop.permute.xlu0 %1138
  %1140 = vrot.lane.b32.xlu0 %v1105, 96
  %v1141 = vpop.permute.xlu0 %1140
  %1142 = vrot.lane.b32.xlu0 %v1107, 96
  %v1143 = vpop.permute.xlu0 %1142
  %v1162 = vrot.slane %v849, 7
  %v1163 = vrot.slane %v850, 7
  %v1164 = vsel %vm341, %v1162, %v1163
  %v1165 = vrot.slane %v851, 7
  %v1166 = vsel %vm341, %v1163, %v1165
  %v1167 = vrot.slane %v852, 7
  %v1168 = vsel %vm341, %v1165, %v1167
  %v1169 = vrot.slane %v853, 7
  %v1170 = vsel %vm341, %v1167, %v1169
  %v1171 = vrot.slane %v854, 7
  %v1172 = vsel %vm341, %v1169, %v1171
  %v1173 = vrot.slane %v855, 7
  %v1174 = vsel %vm341, %v1171, %v1173
  %v1175 = vrot.slane %v856, 7
  %v1176 = vsel %vm341, %v1173, %v1175
  %v1177 = vrot.slane %v857, 7
  %v1178 = vsel %vm341, %v1175, %v1177
  %v1179 = vrot.slane %v858, 7
  %v1180 = vsel %vm341, %v1177, %v1179
  %v1181 = vrot.slane %v859, 7
  %v1182 = vsel %vm341, %v1179, %v1181
  %v1183 = vrot.slane %v860, 7
  %v1184 = vsel %vm341, %v1181, %v1183
  %v1185 = vrot.slane %v861, 7
  %v1186 = vsel %vm341, %v1183, %v1185
  %v1187 = vrot.slane %v862, 7
  %v1188 = vsel %vm341, %v1185, %v1187
  %v1189 = vrot.slane %v863, 7
  %v1190 = vsel %vm341, %v1187, %v1189
  %v1191 = vrot.slane %v864, 7
  %v1192 = vsel %vm341, %v1189, %v1191
  %v1193 = vrot.slane %v865, 7
  %v1194 = vsel %vm341, %v1191, %v1193
  %v1195 = vrot.slane %v866, 7
  %v1196 = vsel %vm341, %v1193, %v1195
  %v1197 = vrot.slane 0.0, 7
  %v1198 = vsel %vm341, %v1195, %v1197
  %1217 = vrot.lane.b32.xlu0 %v850, 32
  %v1218 = vpop.permute.xlu0 %1217
  %1219 = vrot.lane.b32.xlu0 %v851, 32
  %v1220 = vpop.permute.xlu0 %1219
  %1221 = vrot.lane.b32.xlu0 %v852, 32
  %v1222 = vpop.permute.xlu0 %1221
  %1223 = vrot.lane.b32.xlu0 %v853, 32
  %v1224 = vpop.permute.xlu0 %1223
  %1225 = vrot.lane.b32.xlu0 %v854, 32
  %v1226 = vpop.permute.xlu0 %1225
  %1227 = vrot.lane.b32.xlu0 %v855, 32
  %v1228 = vpop.permute.xlu0 %1227
  %1229 = vrot.lane.b32.xlu0 %v856, 32
  %v1230 = vpop.permute.xlu0 %1229
  %1231 = vrot.lane.b32.xlu0 %v857, 32
  %v1232 = vpop.permute.xlu0 %1231
  %1233 = vrot.lane.b32.xlu0 %v858, 32
  %v1234 = vpop.permute.xlu0 %1233
  %1235 = vrot.lane.b32.xlu0 %v859, 32
  %v1236 = vpop.permute.xlu0 %1235
  %1237 = vrot.lane.b32.xlu0 %v860, 32
  %v1238 = vpop.permute.xlu0 %1237
  %1239 = vrot.lane.b32.xlu0 %v861, 32
  %v1240 = vpop.permute.xlu0 %1239
  %1241 = vrot.lane.b32.xlu0 %v862, 32
  %v1242 = vpop.permute.xlu0 %1241
  %1243 = vrot.lane.b32.xlu0 %v863, 32
  %v1244 = vpop.permute.xlu0 %1243
  %1245 = vrot.lane.b32.xlu0 %v864, 32
  %v1246 = vpop.permute.xlu0 %1245
  %1247 = vrot.lane.b32.xlu0 %v865, 32
  %v1248 = vpop.permute.xlu0 %1247
  %1249 = vrot.lane.b32.xlu0 %v866, 32
  %v1250 = vpop.permute.xlu0 %1249
  %1251 = vrot.lane.b32.xlu0 0.0, 32
  %v1252 = vpop.permute.xlu0 %1251
  %vm1271 = vcmask 1043456
  %v1272 = vrot.slane %v850, 4
  %v1273 = vrot.slane %v851, 4
  %v1274 = vsel %vm1271, %v1272, %v1273
  %v1275 = vrot.slane %v852, 4
  %v1276 = vsel %vm1271, %v1273, %v1275
  %v1277 = vrot.slane %v853, 4
  %v1278 = vsel %vm1271, %v1275, %v1277
  %v1279 = vrot.slane %v854, 4
  %v1280 = vsel %vm1271, %v1277, %v1279
  %v1281 = vrot.slane %v855, 4
  %v1282 = vsel %vm1271, %v1279, %v1281
  %v1283 = vrot.slane %v856, 4
  %v1284 = vsel %vm1271, %v1281, %v1283
  %v1285 = vrot.slane %v857, 4
  %v1286 = vsel %vm1271, %v1283, %v1285
  %v1287 = vrot.slane %v858, 4
  %v1288 = vsel %vm1271, %v1285, %v1287
  %v1289 = vrot.slane %v859, 4
  %v1290 = vsel %vm1271, %v1287, %v1289
  %v1291 = vrot.slane %v860, 4
  %v1292 = vsel %vm1271, %v1289, %v1291
  %v1293 = vrot.slane %v861, 4
  %v1294 = vsel %vm1271, %v1291, %v1293
  %v1295 = vrot.slane %v862, 4
  %v1296 = vsel %vm1271, %v1293, %v1295
  %v1297 = vrot.slane %v863, 4
  %v1298 = vsel %vm1271, %v1295, %v1297
  %v1299 = vrot.slane %v864, 4
  %v1300 = vsel %vm1271, %v1297, %v1299
  %v1301 = vrot.slane %v865, 4
  %v1302 = vsel %vm1271, %v1299, %v1301
  %v1303 = vrot.slane %v866, 4
  %v1304 = vsel %vm1271, %v1301, %v1303
  %v1305 = vrot.slane 0.0, 4
  %v1306 = vsel %vm1271, %v1303, %v1305
  %v1307 = vsel %vm1271, %v1305, %v1305
  %1308 = vrot.lane.b32.xlu0 %v1274, 64
  %v1309 = vpop.permute.xlu0 %1308
  %1310 = vrot.lane.b32.xlu0 %v1276, 64
  %v1311 = vpop.permute.xlu0 %1310
  %1312 = vrot.lane.b32.xlu0 %v1278, 64
  %v1313 = vpop.permute.xlu0 %1312
  %1314 = vrot.lane.b32.xlu0 %v1280, 64
  %v1315 = vpop.permute.xlu0 %1314
  %1316 = vrot.lane.b32.xlu0 %v1282, 64
  %v1317 = vpop.permute.xlu0 %1316
  %1318 = vrot.lane.b32.xlu0 %v1284, 64
  %v1319 = vpop.permute.xlu0 %1318
  %1320 = vrot.lane.b32.xlu0 %v1286, 64
  %v1321 = vpop.permute.xlu0 %1320
  %1322 = vrot.lane.b32.xlu0 %v1288, 64
  %v1323 = vpop.permute.xlu0 %1322
  %1324 = vrot.lane.b32.xlu0 %v1290, 64
  %v1325 = vpop.permute.xlu0 %1324
  %1326 = vrot.lane.b32.xlu0 %v1292, 64
  %v1327 = vpop.permute.xlu0 %1326
  %1328 = vrot.lane.b32.xlu0 %v1294, 64
  %v1329 = vpop.permute.xlu0 %1328
  %1330 = vrot.lane.b32.xlu0 %v1296, 64
  %v1331 = vpop.permute.xlu0 %1330
  %1332 = vrot.lane.b32.xlu0 %v1298, 64
  %v1333 = vpop.permute.xlu0 %1332
  %1334 = vrot.lane.b32.xlu0 %v1300, 64
  %v1335 = vpop.permute.xlu0 %1334
  %1336 = vrot.lane.b32.xlu0 %v1302, 64
  %v1337 = vpop.permute.xlu0 %1336
  %1338 = vrot.lane.b32.xlu0 %v1304, 64
  %v1339 = vpop.permute.xlu0 %1338
  %1340 = vrot.lane.b32.xlu0 %v1306, 64
  %v1341 = vpop.permute.xlu0 %1340
  %1342 = vrot.lane.b32.xlu0 %v1307, 64
  %v1343 = vpop.permute.xlu0 %1342
  %vm1362 = vcmask 1042432
  %v1363 = vrot.slane %v850, 5
  %v1364 = vrot.slane %v851, 5
  %v1365 = vsel %vm1362, %v1363, %v1364
  %v1366 = vrot.slane %v852, 5
  %v1367 = vsel %vm1362, %v1364, %v1366
  %v1368 = vrot.slane %v853, 5
  %v1369 = vsel %vm1362, %v1366, %v1368
  %v1370 = vrot.slane %v854, 5
  %v1371 = vsel %vm1362, %v1368, %v1370
  %v1372 = vrot.slane %v855, 5
  %v1373 = vsel %vm1362, %v1370, %v1372
  %v1374 = vrot.slane %v856, 5
  %v1375 = vsel %vm1362, %v1372, %v1374
  %v1376 = vrot.slane %v857, 5
  %v1377 = vsel %vm1362, %v1374, %v1376
  %v1378 = vrot.slane %v858, 5
  %v1379 = vsel %vm1362, %v1376, %v1378
  %v1380 = vrot.slane %v859, 5
  %v1381 = vsel %vm1362, %v1378, %v1380
  %v1382 = vrot.slane %v860, 5
  %v1383 = vsel %vm1362, %v1380, %v1382
  %v1384 = vrot.slane %v861, 5
  %v1385 = vsel %vm1362, %v1382, %v1384
  %v1386 = vrot.slane %v862, 5
  %v1387 = vsel %vm1362, %v1384, %v1386
  %v1388 = vrot.slane %v863, 5
  %v1389 = vsel %vm1362, %v1386, %v1388
  %v1390 = vrot.slane %v864, 5
  %v1391 = vsel %vm1362, %v1388, %v1390
  %v1392 = vrot.slane %v865, 5
  %v1393 = vsel %vm1362, %v1390, %v1392
  %v1394 = vrot.slane %v866, 5
  %v1395 = vsel %vm1362, %v1392, %v1394
  %v1396 = vrot.slane 0.0, 5
  %v1397 = vsel %vm1362, %v1394, %v1396
  %v1398 = vsel %vm1362, %v1396, %v1396
  %1399 = vrot.lane.b32.xlu0 %v1365, 96
  %v1400 = vpop.permute.xlu0 %1399
  %1401 = vrot.lane.b32.xlu0 %v1367, 96
  %v1402 = vpop.permute.xlu0 %1401
  %1403 = vrot.lane.b32.xlu0 %v1369, 96
  %v1404 = vpop.permute.xlu0 %1403
  %1405 = vrot.lane.b32.xlu0 %v1371, 96
  %v1406 = vpop.permute.xlu0 %1405
  %1407 = vrot.lane.b32.xlu0 %v1373, 96
  %v1408 = vpop.permute.xlu0 %1407
  %1409 = vrot.lane.b32.xlu0 %v1375, 96
  %v1410 = vpop.permute.xlu0 %1409
  %1411 = vrot.lane.b32.xlu0 %v1377, 96
  %v1412 = vpop.permute.xlu0 %1411
  %1413 = vrot.lane.b32.xlu0 %v1379, 96
  %v1414 = vpop.permute.xlu0 %1413
  %1415 = vrot.lane.b32.xlu0 %v1381, 96
  %v1416 = vpop.permute.xlu0 %1415
  %1417 = vrot.lane.b32.xlu0 %v1383, 96
  %v1418 = vpop.permute.xlu0 %1417
  %1419 = vrot.lane.b32.xlu0 %v1385, 96
  %v1420 = vpop.permute.xlu0 %1419
  %1421 = vrot.lane.b32.xlu0 %v1387, 96
  %v1422 = vpop.permute.xlu0 %1421
  %1423 = vrot.lane.b32.xlu0 %v1389, 96
  %v1424 = vpop.permute.xlu0 %1423
  %1425 = vrot.lane.b32.xlu0 %v1391, 96
  %v1426 = vpop.permute.xlu0 %1425
  %1427 = vrot.lane.b32.xlu0 %v1393, 96
  %v1428 = vpop.permute.xlu0 %1427
  %1429 = vrot.lane.b32.xlu0 %v1395, 96
  %v1430 = vpop.permute.xlu0 %1429
  %1431 = vrot.lane.b32.xlu0 %v1397, 96
  %v1432 = vpop.permute.xlu0 %1431
  %1433 = vrot.lane.b32.xlu0 %v1398, 96
  %v1434 = vpop.permute.xlu0 %1433
  %v1453 = vsel %vm1070, %v1106, %v1106
  %vm1454 = vcmask 261120
  %v1455 = vsel %vm1454, %v849, %v925
  %v1456 = vsel %vm1454, %v850, %v927
  %v1457 = vsel %vm1454, %v851, %v929
  %v1458 = vsel %vm1454, %v852, %v931
  %v1459 = vsel %vm1454, %v853, %v933
  %v1460 = vsel %vm1454, %v854, %v935
  %v1461 = vsel %vm1454, %v855, %v937
  %v1462 = vsel %vm1454, %v856, %v939
  %v1463 = vsel %vm1454, %v857, %v941
  %v1464 = vsel %vm1454, %v858, %v943
  %v1465 = vsel %vm1454, %v859, %v945
  %v1466 = vsel %vm1454, %v860, %v947
  %v1467 = vsel %vm1454, %v861, %v949
  %v1468 = vsel %vm1454, %v862, %v951
  %v1469 = vsel %vm1454, %v863, %v953
  %v1470 = vsel %vm1454, %v864, %v955
  %v1471 = vsel %vm1454, %v865, %v957
  %v1472 = vsel %vm1454, %v866, %v959
  %vm1473 = vcmask 523264
  %v1474 = vsel %vm1473, %v1455, %v1017
  %v1475 = vsel %vm1473, %v1456, %v1019
  %v1476 = vsel %vm1473, %v1457, %v1021
  %v1477 = vsel %vm1473, %v1458, %v1023
  %v1478 = vsel %vm1473, %v1459, %v1025
  %v1479 = vsel %vm1473, %v1460, %v1027
  %v1480 = vsel %vm1473, %v1461, %v1029
  %v1481 = vsel %vm1473, %v1462, %v1031
  %v1482 = vsel %vm1473, %v1463, %v1033
  %v1483 = vsel %vm1473, %v1464, %v1035
  %v1484 = vsel %vm1473, %v1465, %v1037
  %v1485 = vsel %vm1473, %v1466, %v1039
  %v1486 = vsel %vm1473, %v1467, %v1041
  %v1487 = vsel %vm1473, %v1468, %v1043
  %v1488 = vsel %vm1473, %v1469, %v1045
  %v1489 = vsel %vm1473, %v1470, %v1047
  %v1490 = vsel %vm1473, %v1471, %v1049
  %v1491 = vsel %vm1473, %v1472, %v1051
  %vm1492 = vcmask 785408
  %v1493 = vsel %vm1492, %v1474, %v1109
  %v1494 = vsel %vm1492, %v1475, %v1111
  %v1495 = vsel %vm1492, %v1476, %v1113
  %v1496 = vsel %vm1492, %v1477, %v1115
  %v1497 = vsel %vm1492, %v1478, %v1117
  %v1498 = vsel %vm1492, %v1479, %v1119
  %v1499 = vsel %vm1492, %v1480, %v1121
  %v1500 = vsel %vm1492, %v1481, %v1123
  %v1501 = vsel %vm1492, %v1482, %v1125
  %v1502 = vsel %vm1492, %v1483, %v1127
  %v1503 = vsel %vm1492, %v1484, %v1129
  %v1504 = vsel %vm1492, %v1485, %v1131
  %v1505 = vsel %vm1492, %v1486, %v1133
  %v1506 = vsel %vm1492, %v1487, %v1135
  %v1507 = vsel %vm1492, %v1488, %v1137
  %v1508 = vsel %vm1492, %v1489, %v1139
  %v1509 = vsel %vm1492, %v1490, %v1141
  %v1510 = vsel %vm1492, %v1491, %v1143
  %v1511 = vsel %vm1454, %v1164, %v1218
  %v1512 = vsel %vm1454, %v1166, %v1220
  %v1513 = vsel %vm1454, %v1168, %v1222
  %v1514 = vsel %vm1454, %v1170, %v1224
  %v1515 = vsel %vm1454, %v1172, %v1226
  %v1516 = vsel %vm1454, %v1174, %v1228
  %v1517 = vsel %vm1454, %v1176, %v1230
  %v1518 = vsel %vm1454, %v1178, %v1232
  %v1519 = vsel %vm1454, %v1180, %v1234
  %v1520 = vsel %vm1454, %v1182, %v1236
  %v1521 = vsel %vm1454, %v1184, %v1238
  %v1522 = vsel %vm1454, %v1186, %v1240
  %v1523 = vsel %vm1454, %v1188, %v1242
  %v1524 = vsel %vm1454, %v1190, %v1244
  %v1525 = vsel %vm1454, %v1192, %v1246
  %v1526 = vsel %vm1454, %v1194, %v1248
  %v1527 = vsel %vm1454, %v1196, %v1250
  %v1528 = vsel %vm1454, %v1198, %v1252
  %v1529 = vsel %vm1473, %v1511, %v1309
  %v1530 = vsel %vm1473, %v1512, %v1311
  %v1531 = vsel %vm1473, %v1513, %v1313
  %v1532 = vsel %vm1473, %v1514, %v1315
  %v1533 = vsel %vm1473, %v1515, %v1317
  %v1534 = vsel %vm1473, %v1516, %v1319
  %v1535 = vsel %vm1473, %v1517, %v1321
  %v1536 = vsel %vm1473, %v1518, %v1323
  %v1537 = vsel %vm1473, %v1519, %v1325
  %v1538 = vsel %vm1473, %v1520, %v1327
  %v1539 = vsel %vm1473, %v1521, %v1329
  %v1540 = vsel %vm1473, %v1522, %v1331
  %v1541 = vsel %vm1473, %v1523, %v1333
  %v1542 = vsel %vm1473, %v1524, %v1335
  %v1543 = vsel %vm1473, %v1525, %v1337
  %v1544 = vsel %vm1473, %v1526, %v1339
  %v1545 = vsel %vm1473, %v1527, %v1341
  %v1546 = vsel %vm1473, %v1528, %v1343
  %v1547 = vsel %vm1492, %v1529, %v1400
  %v1548 = vsel %vm1492, %v1530, %v1402
  %v1549 = vsel %vm1492, %v1531, %v1404
  %v1550 = vsel %vm1492, %v1532, %v1406
  %v1551 = vsel %vm1492, %v1533, %v1408
  %v1552 = vsel %vm1492, %v1534, %v1410
  %v1553 = vsel %vm1492, %v1535, %v1412
  %v1554 = vsel %vm1492, %v1536, %v1414
  %v1555 = vsel %vm1492, %v1537, %v1416
  %v1556 = vsel %vm1492, %v1538, %v1418
  %v1557 = vsel %vm1492, %v1539, %v1420
  %v1558 = vsel %vm1492, %v1540, %v1422
  %v1559 = vsel %vm1492, %v1541, %v1424
  %v1560 = vsel %vm1492, %v1542, %v1426
  %v1561 = vsel %vm1492, %v1543, %v1428
  %v1562 = vsel %vm1492, %v1544, %v1430
  %v1563 = vsel %vm1492, %v1545, %v1432
  %v1564 = vsel %vm1492, %v1546, %v1434
  %v1565 = vld [vmem:[%s3] sm:$0xff]
  %v1566 = vld [vmem:[%s3 + $0x8] sm:$0xff]
  %v1567 = vld [vmem:[%s3 + $0x10] sm:$0xff]
  %v1568 = vld [vmem:[%s3 + $0x18] sm:$0xff]
  %v1569 = vld [vmem:[%s3 + $0x20] sm:$0xff]
  %v1570 = vld [vmem:[%s3 + $0x28] sm:$0xff]
  %v1571 = vld [vmem:[%s3 + $0x30] sm:$0xff]
  %v1572 = vld [vmem:[%s3 + $0x38] sm:$0xff]
  %v1573 = vld [vmem:[%s3 + $0x40] sm:$0xff]
  %v1574 = vld [vmem:[%s3 + $0x48] sm:$0xff]
  %v1575 = vld [vmem:[%s3 + $0x50] sm:$0xff]
  %v1576 = vld [vmem:[%s3 + $0x58] sm:$0xff]
  %v1577 = vld [vmem:[%s3 + $0x60] sm:$0xff]
  %v1578 = vld [vmem:[%s3 + $0x68] sm:$0xff]
  %v1579 = vld [vmem:[%s3 + $0x70] sm:$0xff]
  %v1580 = vld [vmem:[%s3 + $0x78] sm:$0xff]
  %v1581 = vld [vmem:[%s3 + $0x80] sm:$0xff]
  %v1582 = vld [vmem:[%s3 + $0x88] sm:$0xff]
  %v1583 = vld [vmem:[%s3 + $0x90] sm:$0xff]
  %v1584 = vld [vmem:[%s3 + $0x98] sm:$0xff]
  %v1585 = vld [vmem:[%s3 + $0xa0] sm:$0xff]
  %v1586 = vld [vmem:[%s3 + $0xa8] sm:$0xff]
  %v1587 = vld [vmem:[%s3 + $0xb0] sm:$0xff]
  %v1588 = vld [vmem:[%s3 + $0xb8] sm:$0xff]
  %v1589 = vld [vmem:[%s3 + $0xc0] sm:$0xff]
  %v1590 = vld [vmem:[%s3 + $0xc8] sm:$0xff]
  %v1591 = vld [vmem:[%s3 + $0xd0] sm:$0xff]
  %v1592 = vld [vmem:[%s3 + $0xd8] sm:$0xff]
  %v1593 = vld [vmem:[%s3 + $0xe0] sm:$0xff]
  %v1594 = vld [vmem:[%s3 + $0xe8] sm:$0xff]
  %v1595 = vld [vmem:[%s3 + $0xf0] sm:$0xff]
  %v1596 = vld [vmem:[%s3 + $0xf8] sm:$0xff]
  %v1597 = vld [vmem:[%s3 + $0x100] sm:$0xff]
  %v1598 = vld [vmem:[%s3 + $0x108] sm:$0xff]
  %v1599 = vld [vmem:[%s3 + $0x110] sm:$0xff]
  %v1600 = vld [vmem:[%s3 + $0x118] sm:$0xff]
  %v1601 = vsel %vm1454, %v1075, 0
  %v1603 = vsel %vm1454, %v1077, 0
  %v1605 = vsel %vm1454, %v1079, 0
  %v1607 = vsel %vm1454, %v1081, 0
  %v1609 = vsel %vm1454, %v1083, 0
  %v1611 = vsel %vm1454, %v1085, 0
  %v1613 = vsel %vm1454, %v1087, 0
  %v1615 = vsel %vm1454, %v1089, 0
  %v1617 = vsel %vm1454, %v1091, 0
  %v1619 = vsel %vm1454, %v1093, 0
  %v1621 = vsel %vm1454, %v1095, 0
  %v1623 = vsel %vm1454, %v1097, 0
  %v1625 = vsel %vm1454, %v1099, 0
  %v1627 = vsel %vm1454, %v1101, 0
  %v1629 = vsel %vm1454, %v1103, 0
  %v1631 = vsel %vm1454, %v1105, 0
  %v1633 = vsel %vm1454, %v1107, 0
  %v1635 = vsel %vm1454, %v1453, 0
  %1637 = vmatprep.subr.mxu0 0.0
  %1638 = vmatpush1.msra.mxu0 %v1565
  %1639 = vmatprep.subr.mxu0 0.0
  %1640 = vmatpush1.msra.mxu0 %v1566
  %1641 = vmatprep.subr.mxu0 0.0
  %1642 = vmatpush1.msra.mxu0 %v1567
  %1643 = vmatprep.subr.mxu0 0.0
  %1644 = vmatpush1.msra.mxu0 %v1568
  %1645 = vmatprep.subr.mxu0 0.0
  %1646 = vmatpush1.msra.mxu0 %v1569
  %1647 = vmatprep.subr.mxu0 0.0
  %1648 = vmatpush1.msra.mxu0 %v1570
  %1649 = vmatprep.subr.mxu0 0.0
  %1650 = vmatpush1.msra.mxu0 %v1571
  %1651 = vmatprep.subr.mxu0 0.0
  %1652 = vmatpush1.msra.mxu0 %v1572
  %1653 = vmatprep.subr.mxu0 0.0
  %1654 = vmatpush1.msra.mxu0 %v1573
  %1655 = vmatprep.subr.mxu0 0.0
  %1656 = vmatpush1.msra.mxu0 %v1574
  %1657 = vmatprep.subr.mxu0 0.0
  %1658 = vmatpush1.msra.mxu0 %v1575
  %1659 = vmatprep.subr.mxu0 0.0
  %1660 = vmatpush1.msra.mxu0 %v1576
  %1661 = vmatprep.subr.mxu0 0.0
  %1662 = vmatpush1.msra.mxu0 %v1577
  %1663 = vmatprep.subr.mxu0 0.0
  %1664 = vmatpush1.msra.mxu0 %v1578
  %1665 = vmatprep.subr.mxu0 0.0
  %1666 = vmatpush1.msra.mxu0 %v1579
  %1667 = vmatprep.subr.mxu0 0.0
  %1668 = vmatpush1.msra.mxu0 %v1580
  %1669 = vmatprep.subr.mxu0 0.0
  %1670 = vmatpush1.msra.mxu0 %v1581
  %1671 = vmatprep.subr.mxu0 0.0
  %1672 = vmatpush1.msra.mxu0 %v1582
  %1673 = vmatprep.subr.mxu0 0.0
  %1674 = vmatpush1.msra.mxu0 %v1583
  %1675 = vmatprep.subr.mxu0 0.0
  %1676 = vmatpush1.msra.mxu0 %v1584
  %1677 = vmatprep.subr.mxu0 0.0
  %1678 = vmatpush1.msra.mxu0 %v1585
  %1679 = vmatprep.subr.mxu0 0.0
  %1680 = vmatpush1.msra.mxu0 %v1586
  %1681 = vmatprep.subr.mxu0 0.0
  %1682 = vmatpush1.msra.mxu0 %v1587
  %1683 = vmatprep.subr.mxu0 0.0
  %1684 = vmatpush1.msra.mxu0 %v1588
  %1685 = vmatprep.subr.mxu0 0.0
  %1686 = vmatpush1.msra.mxu0 %v1589
  %1687 = vmatprep.subr.mxu0 0.0
  %1688 = vmatpush1.msra.mxu0 %v1590
  %1689 = vmatprep.subr.mxu0 0.0
  %1690 = vmatpush1.msra.mxu0 %v1591
  %1691 = vmatprep.subr.mxu0 0.0
  %1692 = vmatpush1.msra.mxu0 %v1592
  %1693 = vmatprep.subr.mxu0 0.0
  %1694 = vmatpush1.msra.mxu0 %v1593
  %1695 = vmatprep.subr.mxu0 0.0
  %1696 = vmatpush1.msra.mxu0 %v1594
  %1697 = vmatprep.subr.mxu0 0.0
  %1698 = vmatpush1.msra.mxu0 %v1595
  %1699 = vmatprep.subr.mxu0 0.0
  %1700 = vmatpush1.msra.mxu0 %v1596
  %1701 = vmatprep.mubr.f32.mxu0 %v1547
  %1702 = vmatmul.mubr.f32.gmra.mrb[0].mxu0 %v1493
  %v1703 = vpop.f32.mrb[0].mxu0
  %v1704 = vadd.f32 0.0, %v1703
  %v1705 = vpop.f32.mrb[0].mxu0
  %1706 = vmatprep.mubr.f32.mxu0 %v1548
  %1707 = vmatmul.mubr.f32.gmra.mrb[0].mxu0 %v1494
  %v1708 = vpop.f32.mrb[0].mxu0
  %v1709 = vadd.f32 0.0, %v1708
  %v1710 = vpop.f32.mrb[0].mxu0
  %1711 = vmatprep.mubr.f32.mxu0 %v1549
  %1712 = vmatmul.mubr.f32.gmra.mrb[0].mxu0 %v1495
  %v1713 = vpop.f32.mrb[0].mxu0
  %v1714 = vadd.f32 0.0, %v1713
  %v1715 = vpop.f32.mrb[0].mxu0
  %1716 = vmatprep.mubr.f32.mxu0 %v1550
  %1717 = vmatmul.mubr.f32.gmra.mrb[0].mxu0 %v1496
  %v1718 = vpop.f32.mrb[0].mxu0
  %v1719 = vadd.f32 0.0, %v1718
  %v1720 = vpop.f32.mrb[0].mxu0
  %1721 = vmatprep.mubr.f32.mxu0 %v1551
  %1722 = vmatmul.mubr.f32.gmra.mrb[0].mxu0 %v1497
  %v1723 = vpop.f32.mrb[0].mxu0
  %v1724 = vadd.f32 0.0, %v1723
  %v1725 = vpop.f32.mrb[0].mxu0
  %1726 = vmatprep.mubr.f32.mxu0 %v1552
  %1727 = vmatmul.mubr.f32.gmra.mrb[0].mxu0 %v1498
  %v1728 = vpop.f32.mrb[0].mxu0
  %v1729 = vadd.f32 0.0, %v1728
  %v1730 = vpop.f32.mrb[0].mxu0
  %1731 = vmatprep.mubr.f32.mxu0 %v1553
  %1732 = vmatmul.mubr.f32.gmra.mrb[0].mxu0 %v1499
  %v1733 = vpop.f32.mrb[0].mxu0
  %v1734 = vadd.f32 0.0, %v1733
  %v1735 = vpop.f32.mrb[0].mxu0
  %1736 = vmatprep.mubr.f32.mxu0 %v1554
  %1737 = vmatmul.mubr.f32.gmra.mrb[0].mxu0 %v1500
  %v1738 = vpop.f32.mrb[0].mxu0
  %v1739 = vadd.f32 0.0, %v1738
  %v1740 = vpop.f32.mrb[0].mxu0
  %1741 = vmatprep.mubr.f32.mxu0 %v1555
  %1742 = vmatmul.mubr.f32.gmra.mrb[0].mxu0 %v1501
  %v1743 = vpop.f32.mrb[0].mxu0
  %v1744 = vadd.f32 0.0, %v1743
  %v1745 = vpop.f32.mrb[0].mxu0
  %1746 = vmatprep.mubr.f32.mxu0 %v1556
  %1747 = vmatmul.mubr.f32.gmra.mrb[0].mxu0 %v1502
  %v1748 = vpop.f32.mrb[0].mxu0
  %v1749 = vadd.f32 0.0, %v1748
  %v1750 = vpop.f32.mrb[0].mxu0
  %1751 = vmatprep.mubr.f32.mxu0 %v1557
  %1752 = vmatmul.mubr.f32.gmra.mrb[0].mxu0 %v1503
  %v1753 = vpop.f32.mrb[0].mxu0
  %v1754 = vadd.f32 0.0, %v1753
  %v1755 = vpop.f32.mrb[0].mxu0
  %1756 = vmatprep.mubr.f32.mxu0 %v1558
  %1757 = vmatmul.mubr.f32.gmra.mrb[0].mxu0 %v1504
  %v1758 = vpop.f32.mrb[0].mxu0
  %v1759 = vadd.f32 0.0, %v1758
  %v1760 = vpop.f32.mrb[0].mxu0
  %1761 = vmatprep.mubr.f32.mxu0 %v1559
  %1762 = vmatmul.mubr.f32.gmra.mrb[0].mxu0 %v1505
  %v1763 = vpop.f32.mrb[0].mxu0
  %v1764 = vadd.f32 0.0, %v1763
  %v1765 = vpop.f32.mrb[0].mxu0
  %1766 = vmatprep.mubr.f32.mxu0 %v1560
  %1767 = vmatmul.mubr.f32.gmra.mrb[0].mxu0 %v1506
  %v1768 = vpop.f32.mrb[0].mxu0
  %v1769 = vadd.f32 0.0, %v1768
  %v1770 = vpop.f32.mrb[0].mxu0
  %1771 = vmatprep.mubr.f32.mxu0 %v1561
  %1772 = vmatmul.mubr.f32.gmra.mrb[0].mxu0 %v1507
  %v1773 = vpop.f32.mrb[0].mxu0
  %v1774 = vadd.f32 0.0, %v1773
  %v1775 = vpop.f32.mrb[0].mxu0
  %1776 = vmatprep.mubr.f32.mxu0 %v1562
  %1777 = vmatmul.mubr.f32.gmra.mrb[0].mxu0 %v1508
  %v1778 = vpop.f32.mrb[0].mxu0
  %v1779 = vadd.f32 0.0, %v1778
  %v1780 = vpop.f32.mrb[0].mxu0
  %1781 = vmatprep.mubr.f32.mxu0 %v1563
  %1782 = vmatmul.mubr.f32.gmra.mrb[0].mxu0 %v1509
  %v1783 = vpop.f32.mrb[0].mxu0
  %v1784 = vadd.f32 0.0, %v1783
  %v1785 = vpop.f32.mrb[0].mxu0
  %1786 = vmatprep.mubr.f32.mxu0 %v1564
  %1787 = vmatmul.mubr.f32.gmra.mrb[0].mxu0 %v1510
  %v1788 = vpop.f32.mrb[0].mxu0
  %v1789 = vadd.f32 0.0, %v1788
  %v1790 = vpop.f32.mrb[0].mxu0
  %1791 = vdwg.mxu0
  %1792 = vmatprep.subr.mxu0 0.0
  %1793 = vmatpush1.msra.mxu0 %v1597
  %1794 = vmatprep.subr.mxu0 0.0
  %1795 = vmatpush1.msra.mxu0 %v1598
  %1796 = vmatprep.subr.mxu0 0.0
  %1797 = vmatpush1.msra.mxu0 %v1599
  %1798 = vmatprep.subr.mxu0 0.0
  %1799 = vmatpush1.msra.mxu0 %v1600
  %1800 = vmatprep.subr.mxu0 0.0
  %1801 = vmatpush1.msra.mxu0 0.0
  %1802 = vmatprep.subr.mxu0 0.0
  %1803 = vmatpush1.msra.mxu0 0.0
  %1804 = vmatprep.subr.mxu0 0.0
  %1805 = vmatpush1.msra.mxu0 0.0
  %1806 = vmatprep.subr.mxu0 0.0
  %1807 = vmatpush1.msra.mxu0 0.0
  %1808 = vmatprep.subr.mxu0 0.0
  %1809 = vmatpush1.msra.mxu0 0.0
  %1810 = vmatprep.subr.mxu0 0.0
  %1811 = vmatpush1.msra.mxu0 0.0
  %1812 = vmatprep.subr.mxu0 0.0
  %1813 = vmatpush1.msra.mxu0 0.0
  %1814 = vmatprep.subr.mxu0 0.0
  %1815 = vmatpush1.msra.mxu0 0.0
  %1816 = vmatprep.subr.mxu0 0.0
  %1817 = vmatpush1.msra.mxu0 0.0
  %1818 = vmatprep.subr.mxu0 0.0
  %1819 = vmatpush1.msra.mxu0 0.0
  %1820 = vmatprep.subr.mxu0 0.0
  %1821 = vmatpush1.msra.mxu0 0.0
  %1822 = vmatprep.subr.mxu0 0.0
  %1823 = vmatpush1.msra.mxu0 0.0
  %1824 = vmatprep.subr.mxu0 0.0
  %1825 = vmatpush1.msra.mxu0 0.0
  %1826 = vmatprep.subr.mxu0 0.0
  %1827 = vmatpush1.msra.mxu0 0.0
  %1828 = vmatprep.subr.mxu0 0.0
  %1829 = vmatpush1.msra.mxu0 0.0
  %1830 = vmatprep.subr.mxu0 0.0
  %1831 = vmatpush1.msra.mxu0 0.0
  %1832 = vmatprep.subr.mxu0 0.0
  %1833 = vmatpush1.msra.mxu0 0.0
  %1834 = vmatprep.subr.mxu0 0.0
  %1835 = vmatpush1.msra.mxu0 0.0
  %1836 = vmatprep.subr.mxu0 0.0
  %1837 = vmatpush1.msra.mxu0 0.0
  %1838 = vmatprep.subr.mxu0 0.0
  %1839 = vmatpush1.msra.mxu0 0.0
  %1840 = vmatprep.subr.mxu0 0.0
  %1841 = vmatpush1.msra.mxu0 0.0
  %1842 = vmatprep.subr.mxu0 0.0
  %1843 = vmatpush1.msra.mxu0 0.0
  %1844 = vmatprep.subr.mxu0 0.0
  %1845 = vmatpush1.msra.mxu0 0.0
  %1846 = vmatprep.subr.mxu0 0.0
  %1847 = vmatpush1.msra.mxu0 0.0
  %1848 = vmatprep.subr.mxu0 0.0
  %1849 = vmatpush1.msra.mxu0 0.0
  %1850 = vmatprep.subr.mxu0 0.0
  %1851 = vmatpush1.msra.mxu0 0.0
  %1852 = vmatprep.subr.mxu0 0.0
  %1853 = vmatpush1.msra.mxu0 0.0
  %1854 = vmatprep.subr.mxu0 0.0
  %1855 = vmatpush1.msra.mxu0 0.0
  %1856 = vmatprep.mubr.f32.mxu0 0.0
  %1857 = vmatmul.mubr.f32.gmra.mrb[0].mxu0 %v1601
  %v1858 = vpop.f32.mrb[0].mxu0
  %v1859 = vadd.f32 %v1704, %v1858
  %v1860 = vpop.f32.mrb[0].mxu0
  %1861 = vmatprep.mubr.f32.mxu0 0.0
  %1862 = vmatmul.mubr.f32.gmra.mrb[0].mxu0 %v1603
  %v1863 = vpop.f32.mrb[0].mxu0
  %v1864 = vadd.f32 %v1709, %v1863
  %v1865 = vpop.f32.mrb[0].mxu0
  %1866 = vmatprep.mubr.f32.mxu0 0.0
  %1867 = vmatmul.mubr.f32.gmra.mrb[0].mxu0 %v1605
  %v1868 = vpop.f32.mrb[0].mxu0
  %v1869 = vadd.f32 %v1714, %v1868
  %v1870 = vpop.f32.mrb[0].mxu0
  %1871 = vmatprep.mubr.f32.mxu0 0.0
  %1872 = vmatmul.mubr.f32.gmra.mrb[0].mxu0 %v1607
  %v1873 = vpop.f32.mrb[0].mxu0
  %v1874 = vadd.f32 %v1719, %v1873
  %v1875 = vpop.f32.mrb[0].mxu0
  %1876 = vmatprep.mubr.f32.mxu0 0.0
  %1877 = vmatmul.mubr.f32.gmra.mrb[0].mxu0 %v1609
  %v1878 = vpop.f32.mrb[0].mxu0
  %v1879 = vadd.f32 %v1724, %v1878
  %v1880 = vpop.f32.mrb[0].mxu0
  %1881 = vmatprep.mubr.f32.mxu0 0.0
  %1882 = vmatmul.mubr.f32.gmra.mrb[0].mxu0 %v1611
  %v1883 = vpop.f32.mrb[0].mxu0
  %v1884 = vadd.f32 %v1729, %v1883
  %v1885 = vpop.f32.mrb[0].mxu0
  %1886 = vmatprep.mubr.f32.mxu0 0.0
  %1887 = vmatmul.mubr.f32.gmra.mrb[0].mxu0 %v1613
  %v1888 = vpop.f32.mrb[0].mxu0
  %v1889 = vadd.f32 %v1734, %v1888
  %v1890 = vpop.f32.mrb[0].mxu0
  %1891 = vmatprep.mubr.f32.mxu0 0.0
  %1892 = vmatmul.mubr.f32.gmra.mrb[0].mxu0 %v1615
  %v1893 = vpop.f32.mrb[0].mxu0
  %v1894 = vadd.f32 %v1739, %v1893
  %v1895 = vpop.f32.mrb[0].mxu0
  %1896 = vmatprep.mubr.f32.mxu0 0.0
  %1897 = vmatmul.mubr.f32.gmra.mrb[0].mxu0 %v1617
  %v1898 = vpop.f32.mrb[0].mxu0
  %v1899 = vadd.f32 %v1744, %v1898
  %v1900 = vpop.f32.mrb[0].mxu0
  %1901 = vmatprep.mubr.f32.mxu0 0.0
  %1902 = vmatmul.mubr.f32.gmra.mrb[0].mxu0 %v1619
  %v1903 = vpop.f32.mrb[0].mxu0
  %v1904 = vadd.f32 %v1749, %v1903
  %v1905 = vpop.f32.mrb[0].mxu0
  %1906 = vmatprep.mubr.f32.mxu0 0.0
  %1907 = vmatmul.mubr.f32.gmra.mrb[0].mxu0 %v1621
  %v1908 = vpop.f32.mrb[0].mxu0
  %v1909 = vadd.f32 %v1754, %v1908
  %v1910 = vpop.f32.mrb[0].mxu0
  %1911 = vmatprep.mubr.f32.mxu0 0.0
  %1912 = vmatmul.mubr.f32.gmra.mrb[0].mxu0 %v1623
  %v1913 = vpop.f32.mrb[0].mxu0
  %v1914 = vadd.f32 %v1759, %v1913
  %v1915 = vpop.f32.mrb[0].mxu0
  %1916 = vmatprep.mubr.f32.mxu0 0.0
  %1917 = vmatmul.mubr.f32.gmra.mrb[0].mxu0 %v1625
  %v1918 = vpop.f32.mrb[0].mxu0
  %v1919 = vadd.f32 %v1764, %v1918
  %v1920 = vpop.f32.mrb[0].mxu0
  %1921 = vmatprep.mubr.f32.mxu0 0.0
  %1922 = vmatmul.mubr.f32.gmra.mrb[0].mxu0 %v1627
  %v1923 = vpop.f32.mrb[0].mxu0
  %v1924 = vadd.f32 %v1769, %v1923
  %v1925 = vpop.f32.mrb[0].mxu0
  %1926 = vmatprep.mubr.f32.mxu0 0.0
  %1927 = vmatmul.mubr.f32.gmra.mrb[0].mxu0 %v1629
  %v1928 = vpop.f32.mrb[0].mxu0
  %v1929 = vadd.f32 %v1774, %v1928
  %v1930 = vpop.f32.mrb[0].mxu0
  %1931 = vmatprep.mubr.f32.mxu0 0.0
  %1932 = vmatmul.mubr.f32.gmra.mrb[0].mxu0 %v1631
  %v1933 = vpop.f32.mrb[0].mxu0
  %v1934 = vadd.f32 %v1779, %v1933
  %v1935 = vpop.f32.mrb[0].mxu0
  %1936 = vmatprep.mubr.f32.mxu0 0.0
  %1937 = vmatmul.mubr.f32.gmra.mrb[0].mxu0 %v1633
  %v1938 = vpop.f32.mrb[0].mxu0
  %v1939 = vadd.f32 %v1784, %v1938
  %v1940 = vpop.f32.mrb[0].mxu0
  %1941 = vmatprep.mubr.f32.mxu0 0.0
  %1942 = vmatmul.mubr.f32.gmra.mrb[0].mxu0 %v1635
  %v1943 = vpop.f32.mrb[0].mxu0
  %v1944 = vadd.f32 %v1789, %v1943
  %v1945 = vpop.f32.mrb[0].mxu0
  %1946 = vdwg.mxu0
  %v1965 = vrot.slane %v1859, 1
  %v1966 = vrot.slane %v1864, 1
  %v1967 = vsel %vm886, %v1965, %v1966
  %v1968 = vrot.slane %v1869, 1
  %v1969 = vsel %vm886, %v1966, %v1968
  %v1970 = vrot.slane %v1874, 1
  %v1971 = vsel %vm886, %v1968, %v1970
  %v1972 = vrot.slane %v1879, 1
  %v1973 = vsel %vm886, %v1970, %v1972
  %v1974 = vrot.slane %v1884, 1
  %v1975 = vsel %vm886, %v1972, %v1974
  %v1976 = vrot.slane %v1889, 1
  %v1977 = vsel %vm886, %v1974, %v1976
  %v1978 = vrot.slane %v1894, 1
  %v1979 = vsel %vm886, %v1976, %v1978
  %v1980 = vrot.slane %v1899, 1
  %v1981 = vsel %vm886, %v1978, %v1980
  %v1982 = vrot.slane %v1904, 1
  %v1983 = vsel %vm886, %v1980, %v1982
  %v1984 = vrot.slane %v1909, 1
  %v1985 = vsel %vm886, %v1982, %v1984
  %v1986 = vrot.slane %v1914, 1
  %v1987 = vsel %vm886, %v1984, %v1986
  %v1988 = vrot.slane %v1919, 1
  %v1989 = vsel %vm886, %v1986, %v1988
  %v1990 = vrot.slane %v1924, 1
  %v1991 = vsel %vm886, %v1988, %v1990
  %v1992 = vrot.slane %v1929, 1
  %v1993 = vsel %vm886, %v1990, %v1992
  %v1994 = vrot.slane %v1934, 1
  %v1995 = vsel %vm886, %v1992, %v1994
  %v1996 = vrot.slane %v1939, 1
  %v1997 = vsel %vm886, %v1994, %v1996
  %v1998 = vrot.slane %v1944, 1
  %v1999 = vsel %vm886, %v1996, %v1998
  %v2000 = vsel %vm886, %v1998, %v922
  %v2019 = vmax.f32 %v1859, %v1967
  %v2020 = vmax.f32 %v1864, %v1969
  %v2021 = vmax.f32 %v1869, %v1971
  %v2022 = vmax.f32 %v1874, %v1973
  %v2023 = vmax.f32 %v1879, %v1975
  %v2024 = vmax.f32 %v1884, %v1977
  %v2025 = vmax.f32 %v1889, %v1979
  %v2026 = vmax.f32 %v1894, %v1981
  %v2027 = vmax.f32 %v1899, %v1983
  %v2028 = vmax.f32 %v1904, %v1985
  %v2029 = vmax.f32 %v1909, %v1987
  %v2030 = vmax.f32 %v1914, %v1989
  %v2031 = vmax.f32 %v1919, %v1991
  %v2032 = vmax.f32 %v1924, %v1993
  %v2033 = vmax.f32 %v1929, %v1995
  %v2034 = vmax.f32 %v1934, %v1997
  %v2035 = vmax.f32 %v1939, %v1999
  %v2036 = vmax.f32 %v1944, %v2000
  %v2038 = vmax.f32 %v922, 0.0
  %v2058 = vrot.slane %v2019, 6
  %v2059 = vrot.slane %v2020, 6
  %v2060 = vsel %vm1070, %v2058, %v2059
  %v2061 = vrot.slane %v2021, 6
  %v2062 = vsel %vm1070, %v2059, %v2061
  %v2063 = vrot.slane %v2022, 6
  %v2064 = vsel %vm1070, %v2061, %v2063
  %v2065 = vrot.slane %v2023, 6
  %v2066 = vsel %vm1070, %v2063, %v2065
  %v2067 = vrot.slane %v2024, 6
  %v2068 = vsel %vm1070, %v2065, %v2067
  %v2069 = vrot.slane %v2025, 6
  %v2070 = vsel %vm1070, %v2067, %v2069
  %v2071 = vrot.slane %v2026, 6
  %v2072 = vsel %vm1070, %v2069, %v2071
  %v2073 = vrot.slane %v2027, 6
  %v2074 = vsel %vm1070, %v2071, %v2073
  %v2075 = vrot.slane %v2028, 6
  %v2076 = vsel %vm1070, %v2073, %v2075
  %v2077 = vrot.slane %v2029, 6
  %v2078 = vsel %vm1070, %v2075, %v2077
  %v2079 = vrot.slane %v2030, 6
  %v2080 = vsel %vm1070, %v2077, %v2079
  %v2081 = vrot.slane %v2031, 6
  %v2082 = vsel %vm1070, %v2079, %v2081
  %v2083 = vrot.slane %v2032, 6
  %v2084 = vsel %vm1070, %v2081, %v2083
  %v2085 = vrot.slane %v2033, 6
  %v2086 = vsel %vm1070, %v2083, %v2085
  %v2087 = vrot.slane %v2034, 6
  %v2088 = vsel %vm1070, %v2085, %v2087
  %v2089 = vrot.slane %v2035, 6
  %v2090 = vsel %vm1070, %v2087, %v2089
  %v2091 = vrot.slane %v2036, 6
  %v2092 = vsel %vm1070, %v2089, %v2091
  %v2093 = vrot.slane %v2038, 6
  %v2094 = vsel %vm1070, %v2091, %v2093
  %v2113 = vmax.f32 %v2019, %v2060
  %v2114 = vmax.f32 %v2020, %v2062
  %v2115 = vmax.f32 %v2021, %v2064
  %v2116 = vmax.f32 %v2022, %v2066
  %v2117 = vmax.f32 %v2023, %v2068
  %v2118 = vmax.f32 %v2024, %v2070
  %v2119 = vmax.f32 %v2025, %v2072
  %v2120 = vmax.f32 %v2026, %v2074
  %v2121 = vmax.f32 %v2027, %v2076
  %v2122 = vmax.f32 %v2028, %v2078
  %v2123 = vmax.f32 %v2029, %v2080
  %v2124 = vmax.f32 %v2030, %v2082
  %v2125 = vmax.f32 %v2031, %v2084
  %v2126 = vmax.f32 %v2032, %v2086
  %v2127 = vmax.f32 %v2033, %v2088
  %v2128 = vmax.f32 %v2034, %v2090
  %v2129 = vmax.f32 %v2035, %v2092
  %v2130 = vmax.f32 %v2036, %v2094
  %v2131 = vld [vmem:[%s4] sm:$0x1]
  %v2133 = vlaneseq
  %v2134 = vshrl.u32 %v2133, 7
  %v2135 = vsub.s32 0, %v2134
  %v2136 = vrot.slane %v2131, %v2135
  %v2138 = vadd.f32 %v2113, %v2136
  %v2139 = vadd.f32 %v2114, %v2136
  %v2140 = vadd.f32 %v2115, %v2136
  %v2141 = vadd.f32 %v2116, %v2136
  %v2142 = vadd.f32 %v2117, %v2136
  %v2143 = vadd.f32 %v2118, %v2136
  %v2144 = vadd.f32 %v2119, %v2136
  %v2145 = vadd.f32 %v2120, %v2136
  %v2146 = vadd.f32 %v2121, %v2136
  %v2147 = vadd.f32 %v2122, %v2136
  %v2148 = vadd.f32 %v2123, %v2136
  %v2149 = vadd.f32 %v2124, %v2136
  %v2150 = vadd.f32 %v2125, %v2136
  %v2151 = vadd.f32 %v2126, %v2136
  %v2152 = vadd.f32 %v2127, %v2136
  %v2153 = vadd.f32 %v2128, %v2136
  %v2154 = vadd.f32 %v2129, %v2136
  %v2155 = vadd.f32 %v2130, %v2136
  %v2156 = vmax.f32 %v2138, 0.0
  %v2157 = vmax.f32 %v2139, 0.0
  %v2158 = vmax.f32 %v2140, 0.0
  %v2159 = vmax.f32 %v2141, 0.0
  %v2160 = vmax.f32 %v2142, 0.0
  %v2161 = vmax.f32 %v2143, 0.0
  %v2162 = vmax.f32 %v2144, 0.0
  %v2163 = vmax.f32 %v2145, 0.0
  %v2164 = vmax.f32 %v2146, 0.0
  %v2165 = vmax.f32 %v2147, 0.0
  %v2166 = vmax.f32 %v2148, 0.0
  %v2167 = vmax.f32 %v2149, 0.0
  %v2168 = vmax.f32 %v2150, 0.0
  %v2169 = vmax.f32 %v2151, 0.0
  %v2170 = vmax.f32 %v2152, 0.0
  %v2171 = vmax.f32 %v2153, 0.0
  %v2172 = vmax.f32 %v2154, 0.0
  %v2173 = vmax.f32 %v2155, 0.0
  %v2192 = vrot.slane %v2156, 2
  %v2193 = vrot.slane %v2157, 2
  %v2194 = vsel %vm978, %v2192, %v2193
  %v2195 = vrot.slane %v2158, 2
  %v2196 = vsel %vm978, %v2193, %v2195
  %v2197 = vrot.slane %v2159, 2
  %v2198 = vsel %vm978, %v2195, %v2197
  %v2199 = vrot.slane %v2160, 2
  %v2200 = vsel %vm978, %v2197, %v2199
  %v2201 = vrot.slane %v2161, 2
  %v2202 = vsel %vm978, %v2199, %v2201
  %v2203 = vrot.slane %v2162, 2
  %v2204 = vsel %vm978, %v2201, %v2203
  %v2205 = vrot.slane %v2163, 2
  %v2206 = vsel %vm978, %v2203, %v2205
  %v2207 = vrot.slane %v2164, 2
  %v2208 = vsel %vm978, %v2205, %v2207
  %v2209 = vrot.slane %v2165, 2
  %v2210 = vsel %vm978, %v2207, %v2209
  %v2211 = vrot.slane %v2166, 2
  %v2212 = vsel %vm978, %v2209, %v2211
  %v2213 = vrot.slane %v2167, 2
  %v2214 = vsel %vm978, %v2211, %v2213
  %v2215 = vrot.slane %v2168, 2
  %v2216 = vsel %vm978, %v2213, %v2215
  %v2217 = vrot.slane %v2169, 2
  %v2218 = vsel %vm978, %v2215, %v2217
  %v2219 = vrot.slane %v2170, 2
  %v2220 = vsel %vm978, %v2217, %v2219
  %v2221 = vrot.slane %v2171, 2
  %v2222 = vsel %vm978, %v2219, %v2221
  %v2223 = vrot.slane %v2172, 2
  %v2224 = vsel %vm978, %v2221, %v2223
  %v2225 = vrot.slane %v2173, 2
  %v2226 = vsel %vm978, %v2223, %v2225
  %v2227 = vsel %vm978, %v2225, %v1014
  %2228 = vrot.lane.b32.xlu0 %v2194, 64
  %v2229 = vpop.permute.xlu0 %2228
  %2230 = vrot.lane.b32.xlu0 %v2196, 64
  %v2231 = vpop.permute.xlu0 %2230
  %2232 = vrot.lane.b32.xlu0 %v2198, 64
  %v2233 = vpop.permute.xlu0 %2232
  %2234 = vrot.lane.b32.xlu0 %v2200, 64
  %v2235 = vpop.permute.xlu0 %2234
  %2236 = vrot.lane.b32.xlu0 %v2202, 64
  %v2237 = vpop.permute.xlu0 %2236
  %2238 = vrot.lane.b32.xlu0 %v2204, 64
  %v2239 = vpop.permute.xlu0 %2238
  %2240 = vrot.lane.b32.xlu0 %v2206, 64
  %v2241 = vpop.permute.xlu0 %2240
  %2242 = vrot.lane.b32.xlu0 %v2208, 64
  %v2243 = vpop.permute.xlu0 %2242
  %2244 = vrot.lane.b32.xlu0 %v2210, 64
  %v2245 = vpop.permute.xlu0 %2244
  %2246 = vrot.lane.b32.xlu0 %v2212, 64
  %v2247 = vpop.permute.xlu0 %2246
  %2248 = vrot.lane.b32.xlu0 %v2214, 64
  %v2249 = vpop.permute.xlu0 %2248
  %2250 = vrot.lane.b32.xlu0 %v2216, 64
  %v2251 = vpop.permute.xlu0 %2250
  %2252 = vrot.lane.b32.xlu0 %v2218, 64
  %v2253 = vpop.permute.xlu0 %2252
  %2254 = vrot.lane.b32.xlu0 %v2220, 64
  %v2255 = vpop.permute.xlu0 %2254
  %2256 = vrot.lane.b32.xlu0 %v2222, 64
  %v2257 = vpop.permute.xlu0 %2256
  %2258 = vrot.lane.b32.xlu0 %v2224, 64
  %v2259 = vpop.permute.xlu0 %2258
  %2260 = vrot.lane.b32.xlu0 %v2226, 64
  %v2261 = vpop.permute.xlu0 %2260
  %2262 = vrot.lane.b32.xlu0 %v2227, 64
  %v2263 = vpop.permute.xlu0 %2262
  %v2282 = vrot.slane %v2157, 4
  %v2283 = vrot.slane %v2158, 4
  %v2284 = vsel %vm1271, %v2282, %v2283
  %v2285 = vrot.slane %v2159, 4
  %v2286 = vsel %vm1271, %v2283, %v2285
  %v2287 = vrot.slane %v2160, 4
  %v2288 = vsel %vm1271, %v2285, %v2287
  %v2289 = vrot.slane %v2161, 4
  %v2290 = vsel %vm1271, %v2287, %v2289
  %v2291 = vrot.slane %v2162, 4
  %v2292 = vsel %vm1271, %v2289, %v2291
  %v2293 = vrot.slane %v2163, 4
  %v2294 = vsel %vm1271, %v2291, %v2293
  %v2295 = vrot.slane %v2164, 4
  %v2296 = vsel %vm1271, %v2293, %v2295
  %v2297 = vrot.slane %v2165, 4
  %v2298 = vsel %vm1271, %v2295, %v2297
  %v2299 = vrot.slane %v2166, 4
  %v2300 = vsel %vm1271, %v2297, %v2299
  %v2301 = vrot.slane %v2167, 4
  %v2302 = vsel %vm1271, %v2299, %v2301
  %v2303 = vrot.slane %v2168, 4
  %v2304 = vsel %vm1271, %v2301, %v2303
  %v2305 = vrot.slane %v2169, 4
  %v2306 = vsel %vm1271, %v2303, %v2305
  %v2307 = vrot.slane %v2170, 4
  %v2308 = vsel %vm1271, %v2305, %v2307
  %v2309 = vrot.slane %v2171, 4
  %v2310 = vsel %vm1271, %v2307, %v2309
  %v2311 = vrot.slane %v2172, 4
  %v2312 = vsel %vm1271, %v2309, %v2311
  %v2313 = vrot.slane %v2173, 4
  %v2314 = vsel %vm1271, %v2311, %v2313
  %v2315 = vsel %vm1271, %v2313, %v1305
  %v2334 = vrot.slane %v2157, 6
  %v2335 = vrot.slane %v2158, 6
  %v2336 = vsel %vm1070, %v2334, %v2335
  %v2337 = vrot.slane %v2159, 6
  %v2338 = vsel %vm1070, %v2335, %v2337
  %v2339 = vrot.slane %v2160, 6
  %v2340 = vsel %vm1070, %v2337, %v2339
  %v2341 = vrot.slane %v2161, 6
  %v2342 = vsel %vm1070, %v2339, %v2341
  %v2343 = vrot.slane %v2162, 6
  %v2344 = vsel %vm1070, %v2341, %v2343
  %v2345 = vrot.slane %v2163, 6
  %v2346 = vsel %vm1070, %v2343, %v2345
  %v2347 = vrot.slane %v2164, 6
  %v2348 = vsel %vm1070, %v2345, %v2347
  %v2349 = vrot.slane %v2165, 6
  %v2350 = vsel %vm1070, %v2347, %v2349
  %v2351 = vrot.slane %v2166, 6
  %v2352 = vsel %vm1070, %v2349, %v2351
  %v2353 = vrot.slane %v2167, 6
  %v2354 = vsel %vm1070, %v2351, %v2353
  %v2355 = vrot.slane %v2168, 6
  %v2356 = vsel %vm1070, %v2353, %v2355
  %v2357 = vrot.slane %v2169, 6
  %v2358 = vsel %vm1070, %v2355, %v2357
  %v2359 = vrot.slane %v2170, 6
  %v2360 = vsel %vm1070, %v2357, %v2359
  %v2361 = vrot.slane %v2171, 6
  %v2362 = vsel %vm1070, %v2359, %v2361
  %v2363 = vrot.slane %v2172, 6
  %v2364 = vsel %vm1070, %v2361, %v2363
  %v2365 = vrot.slane %v2173, 6
  %v2366 = vsel %vm1070, %v2363, %v2365
  %v2367 = vsel %vm1070, %v2365, %v1106
  %2368 = vrot.lane.b32.xlu0 %v2336, 64
  %v2369 = vpop.permute.xlu0 %2368
  %2370 = vrot.lane.b32.xlu0 %v2338, 64
  %v2371 = vpop.permute.xlu0 %2370
  %2372 = vrot.lane.b32.xlu0 %v2340, 64
  %v2373 = vpop.permute.xlu0 %2372
  %2374 = vrot.lane.b32.xlu0 %v2342, 64
  %v2375 = vpop.permute.xlu0 %2374
  %2376 = vrot.lane.b32.xlu0 %v2344, 64
  %v2377 = vpop.permute.xlu0 %2376
  %2378 = vrot.lane.b32.xlu0 %v2346, 64
  %v2379 = vpop.permute.xlu0 %2378
  %2380 = vrot.lane.b32.xlu0 %v2348, 64
  %v2381 = vpop.permute.xlu0 %2380
  %2382 = vrot.lane.b32.xlu0 %v2350, 64
  %v2383 = vpop.permute.xlu0 %2382
  %2384 = vrot.lane.b32.xlu0 %v2352, 64
  %v2385 = vpop.permute.xlu0 %2384
  %2386 = vrot.lane.b32.xlu0 %v2354, 64
  %v2387 = vpop.permute.xlu0 %2386
  %2388 = vrot.lane.b32.xlu0 %v2356, 64
  %v2389 = vpop.permute.xlu0 %2388
  %2390 = vrot.lane.b32.xlu0 %v2358, 64
  %v2391 = vpop.permute.xlu0 %2390
  %2392 = vrot.lane.b32.xlu0 %v2360, 64
  %v2393 = vpop.permute.xlu0 %2392
  %2394 = vrot.lane.b32.xlu0 %v2362, 64
  %v2395 = vpop.permute.xlu0 %2394
  %2396 = vrot.lane.b32.xlu0 %v2364, 64
  %v2397 = vpop.permute.xlu0 %2396
  %2398 = vrot.lane.b32.xlu0 %v2366, 64
  %v2399 = vpop.permute.xlu0 %2398
  %2400 = vrot.lane.b32.xlu0 %v2367, 64
  %v2401 = vpop.permute.xlu0 %2400
  %2402 = vrot.lane.b32.xlu0 %v1453, 64
  %v2403 = vpop.permute.xlu0 %2402
  %v2422 = vsel %vm1473, %v2156, %v2229
  %v2423 = vsel %vm1473, %v2157, %v2231
  %v2424 = vsel %vm1473, %v2158, %v2233
  %v2425 = vsel %vm1473, %v2159, %v2235
  %v2426 = vsel %vm1473, %v2160, %v2237
  %v2427 = vsel %vm1473, %v2161, %v2239
  %v2428 = vsel %vm1473, %v2162, %v2241
  %v2429 = vsel %vm1473, %v2163, %v2243
  %v2430 = vsel %vm1473, %v2164, %v2245
  %v2431 = vsel %vm1473, %v2165, %v2247
  %v2432 = vsel %vm1473, %v2166, %v2249
  %v2433 = vsel %vm1473, %v2167, %v2251
  %v2434 = vsel %vm1473, %v2168, %v2253
  %v2435 = vsel %vm1473, %v2169, %v2255
  %v2436 = vsel %vm1473, %v2170, %v2257
  %v2437 = vsel %vm1473, %v2171, %v2259
  %v2438 = vsel %vm1473, %v2172, %v2261
  %v2439 = vsel %vm1473, %v2173, %v2263
  %v2440 = vsel %vm1473, %v2284, %v2369
  %v2441 = vsel %vm1473, %v2286, %v2371
  %v2442 = vsel %vm1473, %v2288, %v2373
  %v2443 = vsel %vm1473, %v2290, %v2375
  %v2444 = vsel %vm1473, %v2292, %v2377
  %v2445 = vsel %vm1473, %v2294, %v2379
  %v2446 = vsel %vm1473, %v2296, %v2381
  %v2447 = vsel %vm1473, %v2298, %v2383
  %v2448 = vsel %vm1473, %v2300, %v2385
  %v2449 = vsel %vm1473, %v2302, %v2387
  %v2450 = vsel %vm1473, %v2304, %v2389
  %v2451 = vsel %vm1473, %v2306, %v2391
  %v2452 = vsel %vm1473, %v2308, %v2393
  %v2453 = vsel %vm1473, %v2310, %v2395
  %v2454 = vsel %vm1473, %v2312, %v2397
  %v2455 = vsel %vm1473, %v2314, %v2399
  %v2456 = vsel %vm1473, %v2315, %v2401
  %v2457 = vsel %vm1473, %v1307, %v2403
  %v2458 = vld [vmem:[%s5] sm:$0xff]
  %v2459 = vld [vmem:[%s5 + $0x8] sm:$0xff]
  %v2460 = vld [vmem:[%s5 + $0x10] sm:$0xff]
  %v2461 = vld [vmem:[%s5 + $0x18] sm:$0xff]
  %v2462 = vld [vmem:[%s5 + $0x20] sm:$0xff]
  %v2463 = vld [vmem:[%s5 + $0x28] sm:$0xff]
  %v2464 = vld [vmem:[%s5 + $0x30] sm:$0xff]
  %v2465 = vld [vmem:[%s5 + $0x38] sm:$0xff]
  %v2466 = vld [vmem:[%s5 + $0x40] sm:$0xff]
  %v2467 = vld [vmem:[%s5 + $0x48] sm:$0xff]
  %v2468 = vld [vmem:[%s5 + $0x50] sm:$0xff]
  %v2469 = vld [vmem:[%s5 + $0x58] sm:$0xff]
  %v2470 = vld [vmem:[%s5 + $0x60] sm:$0xff]
  %v2471 = vld [vmem:[%s5 + $0x68] sm:$0xff]
  %v2472 = vld [vmem:[%s5 + $0x70] sm:$0xff]
  %v2473 = vld [vmem:[%s5 + $0x78] sm:$0xff]
  %v2474 = vld [vmem:[%s5 + $0x80] sm:$0xff]
  %v2475 = vld [vmem:[%s5 + $0x88] sm:$0xff]
  %v2476 = vld [vmem:[%s5 + $0x90] sm:$0xff]
  %v2477 = vld [vmem:[%s5 + $0x98] sm:$0xff]
  %v2478 = vld [vmem:[%s5 + $0xa0] sm:$0xff]
  %v2479 = vld [vmem:[%s5 + $0xa8] sm:$0xff]
  %v2480 = vld [vmem:[%s5 + $0xb0] sm:$0xff]
  %v2481 = vld [vmem:[%s5 + $0xb8] sm:$0xff]
  %v2482 = vld [vmem:[%s5 + $0xc0] sm:$0xff]
  %v2483 = vld [vmem:[%s5 + $0xc8] sm:$0xff]
  %v2484 = vld [vmem:[%s5 + $0xd0] sm:$0xff]
  %v2485 = vld [vmem:[%s5 + $0xd8] sm:$0xff]
  %v2486 = vld [vmem:[%s5 + $0xe0] sm:$0xff]
  %v2487 = vld [vmem:[%s5 + $0xe8] sm:$0xff]
  %v2488 = vld [vmem:[%s5 + $0xf0] sm:$0xff]
  %v2489 = vld [vmem:[%s5 + $0xf8] sm:$0xff]
  %v2490 = vld [vmem:[%s5 + $0x100] sm:$0xff]
  %v2491 = vld [vmem:[%s5 + $0x108] sm:$0xff]
  %v2492 = vld [vmem:[%s5 + $0x110] sm:$0xff]
  %v2493 = vld [vmem:[%s5 + $0x118] sm:$0xff]
  %v2494 = vld [vmem:[%s5 + $0x120] sm:$0xff]
  %v2495 = vld [vmem:[%s5 + $0x128] sm:$0xff]
  %v2496 = vld [vmem:[%s5 + $0x130] sm:$0xff]
  %v2497 = vld [vmem:[%s5 + $0x138] sm:$0xff]
  %v2498 = vld [vmem:[%s5 + $0x140] sm:$0xff]
  %v2499 = vld [vmem:[%s5 + $0x148] sm:$0xff]
  %v2500 = vld [vmem:[%s5 + $0x150] sm:$0xff]
  %v2501 = vld [vmem:[%s5 + $0x158] sm:$0xff]
  %v2502 = vld [vmem:[%s5 + $0x160] sm:$0xff]
  %v2503 = vld [vmem:[%s5 + $0x168] sm:$0xff]
  %v2504 = vld [vmem:[%s5 + $0x170] sm:$0xff]
  %v2505 = vld [vmem:[%s5 + $0x178] sm:$0xff]
  %v2506 = vld [vmem:[%s5 + $0x180] sm:$0xff]
  %v2507 = vld [vmem:[%s5 + $0x188] sm:$0xff]
  %v2508 = vld [vmem:[%s5 + $0x190] sm:$0xff]
  %v2509 = vld [vmem:[%s5 + $0x198] sm:$0xff]
  %v2510 = vld [vmem:[%s5 + $0x1a0] sm:$0xff]
  %v2511 = vld [vmem:[%s5 + $0x1a8] sm:$0xff]
  %v2512 = vld [vmem:[%s5 + $0x1b0] sm:$0xff]
  %v2513 = vld [vmem:[%s5 + $0x1b8] sm:$0xff]
  %v2514 = vld [vmem:[%s5 + $0x1c0] sm:$0xff]
  %v2515 = vld [vmem:[%s5 + $0x1c8] sm:$0xff]
  %v2516 = vld [vmem:[%s5 + $0x1d0] sm:$0xff]
  %v2517 = vld [vmem:[%s5 + $0x1d8] sm:$0xff]
  %v2518 = vld [vmem:[%s5 + $0x1e0] sm:$0xff]
  %v2519 = vld [vmem:[%s5 + $0x1e8] sm:$0xff]
  %v2520 = vld [vmem:[%s5 + $0x1f0] sm:$0xff]
  %v2521 = vld [vmem:[%s5 + $0x1f8] sm:$0xff]
  %v2522 = vld [vmem:[%s6] sm:$0x3]
  %v2524 = vlaneseq
  %v2525 = vshrl.u32 %v2524, 7
  %v2526 = vsub.s32 0, %v2525
  %v2527 = vrot.slane %v2522, %v2526
  %v2528 = vlaneseq
  %v2529 = vshrl.u32 %v2528, 7
  %v2530 = vsub.s32 1, %v2529
  %v2531 = vrot.slane %v2522, %v2530
  %2534 = vmatprep.subr.mxu0 %v2459
  %2535 = vmatpush1.msra.mxu0 %v2458
  %2536 = vmatprep.subr.mxu0 %v2461
  %2537 = vmatpush1.msra.mxu0 %v2460
  %2538 = vmatprep.subr.mxu0 %v2463
  %2539 = vmatpush1.msra.mxu0 %v2462
  %2540 = vmatprep.subr.mxu0 %v2465
  %2541 = vmatpush1.msra.mxu0 %v2464
  %2542 = vmatprep.subr.mxu0 %v2467
  %2543 = vmatpush1.msra.mxu0 %v2466
  %2544 = vmatprep.subr.mxu0 %v2469
  %2545 = vmatpush1.msra.mxu0 %v2468
  %2546 = vmatprep.subr.mxu0 %v2471
  %2547 = vmatpush1.msra.mxu0 %v2470
  %2548 = vmatprep.subr.mxu0 %v2473
  %2549 = vmatpush1.msra.mxu0 %v2472
  %2550 = vmatprep.subr.mxu0 %v2475
  %2551 = vmatpush1.msra.mxu0 %v2474
  %2552 = vmatprep.subr.mxu0 %v2477
  %2553 = vmatpush1.msra.mxu0 %v2476
  %2554 = vmatprep.subr.mxu0 %v2479
  %2555 = vmatpush1.msra.mxu0 %v2478
  %2556 = vmatprep.subr.mxu0 %v2481
  %2557 = vmatpush1.msra.mxu0 %v2480
  %2558 = vmatprep.subr.mxu0 %v2483
  %2559 = vmatpush1.msra.mxu0 %v2482
  %2560 = vmatprep.subr.mxu0 %v2485
  %2561 = vmatpush1.msra.mxu0 %v2484
  %2562 = vmatprep.subr.mxu0 %v2487
  %2563 = vmatpush1.msra.mxu0 %v2486
  %2564 = vmatprep.subr.mxu0 %v2489
  %2565 = vmatpush1.msra.mxu0 %v2488
  %2566 = vmatprep.subr.mxu0 %v2491
  %2567 = vmatpush1.msra.mxu0 %v2490
  %2568 = vmatprep.subr.mxu0 %v2493
  %2569 = vmatpush1.msra.mxu0 %v2492
  %2570 = vmatprep.subr.mxu0 %v2495
  %2571 = vmatpush1.msra.mxu0 %v2494
  %2572 = vmatprep.subr.mxu0 %v2497
  %2573 = vmatpush1.msra.mxu0 %v2496
  %2574 = vmatprep.subr.mxu0 %v2499
  %2575 = vmatpush1.msra.mxu0 %v2498
  %2576 = vmatprep.subr.mxu0 %v2501
  %2577 = vmatpush1.msra.mxu0 %v2500
  %2578 = vmatprep.subr.mxu0 %v2503
  %2579 = vmatpush1.msra.mxu0 %v2502
  %2580 = vmatprep.subr.mxu0 %v2505
  %2581 = vmatpush1.msra.mxu0 %v2504
  %2582 = vmatprep.subr.mxu0 %v2507
  %2583 = vmatpush1.msra.mxu0 %v2506
  %2584 = vmatprep.subr.mxu0 %v2509
  %2585 = vmatpush1.msra.mxu0 %v2508
  %2586 = vmatprep.subr.mxu0 %v2511
  %2587 = vmatpush1.msra.mxu0 %v2510
  %2588 = vmatprep.subr.mxu0 %v2513
  %2589 = vmatpush1.msra.mxu0 %v2512
  %2590 = vmatprep.subr.mxu0 %v2515
  %2591 = vmatpush1.msra.mxu0 %v2514
  %2592 = vmatprep.subr.mxu0 %v2517
  %2593 = vmatpush1.msra.mxu0 %v2516
  %2594 = vmatprep.subr.mxu0 %v2519
  %2595 = vmatpush1.msra.mxu0 %v2518
  %2596 = vmatprep.subr.mxu0 %v2521
  %2597 = vmatpush1.msra.mxu0 %v2520
  %2598 = vmatprep.mubr.f32.mxu0 %v2440
  %2599 = vmatmul.mubr.f32.gmra.mrb[0].mxu0 %v2422
  %v2600 = vpop.f32.mrb[0].mxu0
  %v2601 = vadd.f32 %v2527, %v2600
  %v2602 = vpop.f32.mrb[0].mxu0
  %v2603 = vadd.f32 %v2531, %v2602
  %2604 = vmatprep.mubr.f32.mxu0 %v2441
  %2605 = vmatmul.mubr.f32.gmra.mrb[0].mxu0 %v2423
  %v2606 = vpop.f32.mrb[0].mxu0
  %v2607 = vadd.f32 %v2527, %v2606
  %v2608 = vpop.f32.mrb[0].mxu0
  %v2609 = vadd.f32 %v2531, %v2608
  %2610 = vmatprep.mubr.f32.mxu0 %v2442
  %2611 = vmatmul.mubr.f32.gmra.mrb[0].mxu0 %v2424
  %v2612 = vpop.f32.mrb[0].mxu0
  %v2613 = vadd.f32 %v2527, %v2612
  %v2614 = vpop.f32.mrb[0].mxu0
  %v2615 = vadd.f32 %v2531, %v2614
  %2616 = vmatprep.mubr.f32.mxu0 %v2443
  %2617 = vmatmul.mubr.f32.gmra.mrb[0].mxu0 %v2425
  %v2618 = vpop.f32.mrb[0].mxu0
  %v2619 = vadd.f32 %v2527, %v2618
  %v2620 = vpop.f32.mrb[0].mxu0
  %v2621 = vadd.f32 %v2531, %v2620
  %2622 = vmatprep.mubr.f32.mxu0 %v2444
  %2623 = vmatmul.mubr.f32.gmra.mrb[0].mxu0 %v2426
  %v2624 = vpop.f32.mrb[0].mxu0
  %v2625 = vadd.f32 %v2527, %v2624
  %v2626 = vpop.f32.mrb[0].mxu0
  %v2627 = vadd.f32 %v2531, %v2626
  %2628 = vmatprep.mubr.f32.mxu0 %v2445
  %2629 = vmatmul.mubr.f32.gmra.mrb[0].mxu0 %v2427
  %v2630 = vpop.f32.mrb[0].mxu0
  %v2631 = vadd.f32 %v2527, %v2630
  %v2632 = vpop.f32.mrb[0].mxu0
  %v2633 = vadd.f32 %v2531, %v2632
  %2634 = vmatprep.mubr.f32.mxu0 %v2446
  %2635 = vmatmul.mubr.f32.gmra.mrb[0].mxu0 %v2428
  %v2636 = vpop.f32.mrb[0].mxu0
  %v2637 = vadd.f32 %v2527, %v2636
  %v2638 = vpop.f32.mrb[0].mxu0
  %v2639 = vadd.f32 %v2531, %v2638
  %2640 = vmatprep.mubr.f32.mxu0 %v2447
  %2641 = vmatmul.mubr.f32.gmra.mrb[0].mxu0 %v2429
  %v2642 = vpop.f32.mrb[0].mxu0
  %v2643 = vadd.f32 %v2527, %v2642
  %v2644 = vpop.f32.mrb[0].mxu0
  %v2645 = vadd.f32 %v2531, %v2644
  %2646 = vmatprep.mubr.f32.mxu0 %v2448
  %2647 = vmatmul.mubr.f32.gmra.mrb[0].mxu0 %v2430
  %v2648 = vpop.f32.mrb[0].mxu0
  %v2649 = vadd.f32 %v2527, %v2648
  %v2650 = vpop.f32.mrb[0].mxu0
  %v2651 = vadd.f32 %v2531, %v2650
  %2652 = vmatprep.mubr.f32.mxu0 %v2449
  %2653 = vmatmul.mubr.f32.gmra.mrb[0].mxu0 %v2431
  %v2654 = vpop.f32.mrb[0].mxu0
  %v2655 = vadd.f32 %v2527, %v2654
  %v2656 = vpop.f32.mrb[0].mxu0
  %v2657 = vadd.f32 %v2531, %v2656
  %2658 = vmatprep.mubr.f32.mxu0 %v2450
  %2659 = vmatmul.mubr.f32.gmra.mrb[0].mxu0 %v2432
  %v2660 = vpop.f32.mrb[0].mxu0
  %v2661 = vadd.f32 %v2527, %v2660
  %v2662 = vpop.f32.mrb[0].mxu0
  %v2663 = vadd.f32 %v2531, %v2662
  %2664 = vmatprep.mubr.f32.mxu0 %v2451
  %2665 = vmatmul.mubr.f32.gmra.mrb[0].mxu0 %v2433
  %v2666 = vpop.f32.mrb[0].mxu0
  %v2667 = vadd.f32 %v2527, %v2666
  %v2668 = vpop.f32.mrb[0].mxu0
  %v2669 = vadd.f32 %v2531, %v2668
  %2670 = vmatprep.mubr.f32.mxu0 %v2452
  %2671 = vmatmul.mubr.f32.gmra.mrb[0].mxu0 %v2434
  %v2672 = vpop.f32.mrb[0].mxu0
  %v2673 = vadd.f32 %v2527, %v2672
  %v2674 = vpop.f32.mrb[0].mxu0
  %v2675 = vadd.f32 %v2531, %v2674
  %2676 = vmatprep.mubr.f32.mxu0 %v2453
  %2677 = vmatmul.mubr.f32.gmra.mrb[0].mxu0 %v2435
  %v2678 = vpop.f32.mrb[0].mxu0
  %v2679 = vadd.f32 %v2527, %v2678
  %v2680 = vpop.f32.mrb[0].mxu0
  %v2681 = vadd.f32 %v2531, %v2680
  %2682 = vmatprep.mubr.f32.mxu0 %v2454
  %2683 = vmatmul.mubr.f32.gmra.mrb[0].mxu0 %v2436
  %v2684 = vpop.f32.mrb[0].mxu0
  %v2685 = vadd.f32 %v2527, %v2684
  %v2686 = vpop.f32.mrb[0].mxu0
  %v2687 = vadd.f32 %v2531, %v2686
  %2688 = vmatprep.mubr.f32.mxu0 %v2455
  %2689 = vmatmul.mubr.f32.gmra.mrb[0].mxu0 %v2437
  %v2690 = vpop.f32.mrb[0].mxu0
  %v2691 = vadd.f32 %v2527, %v2690
  %v2692 = vpop.f32.mrb[0].mxu0
  %v2693 = vadd.f32 %v2531, %v2692
  %2694 = vmatprep.mubr.f32.mxu0 %v2456
  %2695 = vmatmul.mubr.f32.gmra.mrb[0].mxu0 %v2438
  %v2696 = vpop.f32.mrb[0].mxu0
  %v2697 = vadd.f32 %v2527, %v2696
  %v2698 = vpop.f32.mrb[0].mxu0
  %v2699 = vadd.f32 %v2531, %v2698
  %2700 = vmatprep.mubr.f32.mxu0 %v2457
  %2701 = vmatmul.mubr.f32.gmra.mrb[0].mxu0 %v2439
  %v2702 = vpop.f32.mrb[0].mxu0
  %v2703 = vadd.f32 %v2527, %v2702
  %v2704 = vpop.f32.mrb[0].mxu0
  %v2705 = vadd.f32 %v2531, %v2704
  %2706 = vdwg.mxu0
  %v2707 = vmax.f32 %v2601, 0.0
  %v2708 = vmax.f32 %v2603, 0.0
  %v2709 = vmax.f32 %v2607, 0.0
  %v2710 = vmax.f32 %v2609, 0.0
  %v2711 = vmax.f32 %v2613, 0.0
  %v2712 = vmax.f32 %v2615, 0.0
  %v2713 = vmax.f32 %v2619, 0.0
  %v2714 = vmax.f32 %v2621, 0.0
  %v2715 = vmax.f32 %v2625, 0.0
  %v2716 = vmax.f32 %v2627, 0.0
  %v2717 = vmax.f32 %v2631, 0.0
  %v2718 = vmax.f32 %v2633, 0.0
  %v2719 = vmax.f32 %v2637, 0.0
  %v2720 = vmax.f32 %v2639, 0.0
  %v2721 = vmax.f32 %v2643, 0.0
  %v2722 = vmax.f32 %v2645, 0.0
  %v2723 = vmax.f32 %v2649, 0.0
  %v2724 = vmax.f32 %v2651, 0.0
  %v2725 = vmax.f32 %v2655, 0.0
  %v2726 = vmax.f32 %v2657, 0.0
  %v2727 = vmax.f32 %v2661, 0.0
  %v2728 = vmax.f32 %v2663, 0.0
  %v2729 = vmax.f32 %v2667, 0.0
  %v2730 = vmax.f32 %v2669, 0.0
  %v2731 = vmax.f32 %v2673, 0.0
  %v2732 = vmax.f32 %v2675, 0.0
  %v2733 = vmax.f32 %v2679, 0.0
  %v2734 = vmax.f32 %v2681, 0.0
  %v2735 = vmax.f32 %v2685, 0.0
  %v2736 = vmax.f32 %v2687, 0.0
  %v2737 = vmax.f32 %v2691, 0.0
  %v2738 = vmax.f32 %v2693, 0.0
  %v2739 = vmax.f32 %v2697, 0.0
  %v2740 = vmax.f32 %v2699, 0.0
  %v2741 = vmax.f32 %v2703, 0.0
  %v2742 = vmax.f32 %v2705, 0.0
  %v2743 = vld [vmem:[%s7] sm:$0xff]
  %v2744 = vld [vmem:[%s7 + $0x8] sm:$0xff]
  %v2745 = vld [vmem:[%s7 + $0x10] sm:$0xff]
  %v2746 = vld [vmem:[%s7 + $0x18] sm:$0xff]
  %v2747 = vld [vmem:[%s7 + $0x20] sm:$0xff]
  %v2748 = vld [vmem:[%s7 + $0x28] sm:$0xff]
  %v2749 = vld [vmem:[%s7 + $0x30] sm:$0xff]
  %v2750 = vld [vmem:[%s7 + $0x38] sm:$0xff]
  %v2751 = vld [vmem:[%s7 + $0x40] sm:$0xff]
  %v2752 = vld [vmem:[%s7 + $0x48] sm:$0xff]
  %v2753 = vld [vmem:[%s7 + $0x50] sm:$0xff]
  %v2754 = vld [vmem:[%s7 + $0x58] sm:$0xff]
  %v2755 = vld [vmem:[%s7 + $0x60] sm:$0xff]
  %v2756 = vld [vmem:[%s7 + $0x68] sm:$0xff]
  %v2757 = vld [vmem:[%s7 + $0x70] sm:$0xff]
  %v2758 = vld [vmem:[%s7 + $0x78] sm:$0xff]
  %v2759 = vld [vmem:[%s7 + $0x80] sm:$0xff]
  %v2760 = vld [vmem:[%s7 + $0x88] sm:$0xff]
  %v2761 = vld [vmem:[%s7 + $0x90] sm:$0xff]
  %v2762 = vld [vmem:[%s7 + $0x98] sm:$0xff]
  %v2763 = vld [vmem:[%s7 + $0xa0] sm:$0xff]
  %v2764 = vld [vmem:[%s7 + $0xa8] sm:$0xff]
  %v2765 = vld [vmem:[%s7 + $0xb0] sm:$0xff]
  %v2766 = vld [vmem:[%s7 + $0xb8] sm:$0xff]
  %v2767 = vld [vmem:[%s7 + $0xc0] sm:$0xff]
  %v2768 = vld [vmem:[%s7 + $0xc8] sm:$0xff]
  %v2769 = vld [vmem:[%s7 + $0xd0] sm:$0xff]
  %v2770 = vld [vmem:[%s7 + $0xd8] sm:$0xff]
  %v2771 = vld [vmem:[%s7 + $0xe0] sm:$0xff]
  %v2772 = vld [vmem:[%s7 + $0xe8] sm:$0xff]
  %v2773 = vld [vmem:[%s7 + $0xf0] sm:$0xff]
  %v2774 = vld [vmem:[%s7 + $0xf8] sm:$0xff]
  %v2775 = vld [vmem:[%s8] sm:$0x1]
  %v2777 = vlaneseq
  %v2778 = vshrl.u32 %v2777, 7
  %v2779 = vsub.s32 0, %v2778
  %v2780 = vrot.slane %v2775, %v2779
  %2782 = vmatprep.subr.mxu0 0.0
  %2783 = vmatpush1.msra.mxu0 %v2743
  %2784 = vmatprep.subr.mxu0 0.0
  %2785 = vmatpush1.msra.mxu0 %v2744
  %2786 = vmatprep.subr.mxu0 0.0
  %2787 = vmatpush1.msra.mxu0 %v2745
  %2788 = vmatprep.subr.mxu0 0.0
  %2789 = vmatpush1.msra.mxu0 %v2746
  %2790 = vmatprep.subr.mxu0 0.0
  %2791 = vmatpush1.msra.mxu0 %v2747
  %2792 = vmatprep.subr.mxu0 0.0
  %2793 = vmatpush1.msra.mxu0 %v2748
  %2794 = vmatprep.subr.mxu0 0.0
  %2795 = vmatpush1.msra.mxu0 %v2749
  %2796 = vmatprep.subr.mxu0 0.0
  %2797 = vmatpush1.msra.mxu0 %v2750
  %2798 = vmatprep.subr.mxu0 0.0
  %2799 = vmatpush1.msra.mxu0 %v2751
  %2800 = vmatprep.subr.mxu0 0.0
  %2801 = vmatpush1.msra.mxu0 %v2752
  %2802 = vmatprep.subr.mxu0 0.0
  %2803 = vmatpush1.msra.mxu0 %v2753
  %2804 = vmatprep.subr.mxu0 0.0
  %2805 = vmatpush1.msra.mxu0 %v2754
  %2806 = vmatprep.subr.mxu0 0.0
  %2807 = vmatpush1.msra.mxu0 %v2755
  %2808 = vmatprep.subr.mxu0 0.0
  %2809 = vmatpush1.msra.mxu0 %v2756
  %2810 = vmatprep.subr.mxu0 0.0
  %2811 = vmatpush1.msra.mxu0 %v2757
  %2812 = vmatprep.subr.mxu0 0.0
  %2813 = vmatpush1.msra.mxu0 %v2758
  %2814 = vmatprep.subr.mxu0 0.0
  %2815 = vmatpush1.msra.mxu0 %v2759
  %2816 = vmatprep.subr.mxu0 0.0
  %2817 = vmatpush1.msra.mxu0 %v2760
  %2818 = vmatprep.subr.mxu0 0.0
  %2819 = vmatpush1.msra.mxu0 %v2761
  %2820 = vmatprep.subr.mxu0 0.0
  %2821 = vmatpush1.msra.mxu0 %v2762
  %2822 = vmatprep.subr.mxu0 0.0
  %2823 = vmatpush1.msra.mxu0 %v2763
  %2824 = vmatprep.subr.mxu0 0.0
  %2825 = vmatpush1.msra.mxu0 %v2764
  %2826 = vmatprep.subr.mxu0 0.0
  %2827 = vmatpush1.msra.mxu0 %v2765
  %2828 = vmatprep.subr.mxu0 0.0
  %2829 = vmatpush1.msra.mxu0 %v2766
  %2830 = vmatprep.subr.mxu0 0.0
  %2831 = vmatpush1.msra.mxu0 %v2767
  %2832 = vmatprep.subr.mxu0 0.0
  %2833 = vmatpush1.msra.mxu0 %v2768
  %2834 = vmatprep.subr.mxu0 0.0
  %2835 = vmatpush1.msra.mxu0 %v2769
  %2836 = vmatprep.subr.mxu0 0.0
  %2837 = vmatpush1.msra.mxu0 %v2770
  %2838 = vmatprep.subr.mxu0 0.0
  %2839 = vmatpush1.msra.mxu0 %v2771
  %2840 = vmatprep.subr.mxu0 0.0
  %2841 = vmatpush1.msra.mxu0 %v2772
  %2842 = vmatprep.subr.mxu0 0.0
  %2843 = vmatpush1.msra.mxu0 %v2773
  %2844 = vmatprep.subr.mxu0 0.0
  %2845 = vmatpush1.msra.mxu0 %v2774
  %2846 = vmatprep.mubr.f32.mxu0 %v2708
  %2847 = vmatmul.mubr.f32.gmra.mrb[0].mxu0 %v2707
  %v2848 = vpop.f32.mrb[0].mxu0
  %v2849 = vadd.f32 %v2780, %v2848
  %v2850 = vpop.f32.mrb[0].mxu0
  %2851 = vmatprep.mubr.f32.mxu0 %v2710
  %2852 = vmatmul.mubr.f32.gmra.mrb[0].mxu0 %v2709
  %v2853 = vpop.f32.mrb[0].mxu0
  %v2854 = vadd.f32 %v2780, %v2853
  %v2855 = vpop.f32.mrb[0].mxu0
  %2856 = vmatprep.mubr.f32.mxu0 %v2712
  %2857 = vmatmul.mubr.f32.gmra.mrb[0].mxu0 %v2711
  %v2858 = vpop.f32.mrb[0].mxu0
  %v2859 = vadd.f32 %v2780, %v2858
  %v2860 = vpop.f32.mrb[0].mxu0
  %2861 = vmatprep.mubr.f32.mxu0 %v2714
  %2862 = vmatmul.mubr.f32.gmra.mrb[0].mxu0 %v2713
  %v2863 = vpop.f32.mrb[0].mxu0
  %v2864 = vadd.f32 %v2780, %v2863
  %v2865 = vpop.f32.mrb[0].mxu0
  %2866 = vmatprep.mubr.f32.mxu0 %v2716
  %2867 = vmatmul.mubr.f32.gmra.mrb[0].mxu0 %v2715
  %v2868 = vpop.f32.mrb[0].mxu0
  %v2869 = vadd.f32 %v2780, %v2868
  %v2870 = vpop.f32.mrb[0].mxu0
  %2871 = vmatprep.mubr.f32.mxu0 %v2718
  %2872 = vmatmul.mubr.f32.gmra.mrb[0].mxu0 %v2717
  %v2873 = vpop.f32.mrb[0].mxu0
  %v2874 = vadd.f32 %v2780, %v2873
  %v2875 = vpop.f32.mrb[0].mxu0
  %2876 = vmatprep.mubr.f32.mxu0 %v2720
  %2877 = vmatmul.mubr.f32.gmra.mrb[0].mxu0 %v2719
  %v2878 = vpop.f32.mrb[0].mxu0
  %v2879 = vadd.f32 %v2780, %v2878
  %v2880 = vpop.f32.mrb[0].mxu0
  %2881 = vmatprep.mubr.f32.mxu0 %v2722
  %2882 = vmatmul.mubr.f32.gmra.mrb[0].mxu0 %v2721
  %v2883 = vpop.f32.mrb[0].mxu0
  %v2884 = vadd.f32 %v2780, %v2883
  %v2885 = vpop.f32.mrb[0].mxu0
  %2886 = vmatprep.mubr.f32.mxu0 %v2724
  %2887 = vmatmul.mubr.f32.gmra.mrb[0].mxu0 %v2723
  %v2888 = vpop.f32.mrb[0].mxu0
  %v2889 = vadd.f32 %v2780, %v2888
  %v2890 = vpop.f32.mrb[0].mxu0
  %2891 = vmatprep.mubr.f32.mxu0 %v2726
  %2892 = vmatmul.mubr.f32.gmra.mrb[0].mxu0 %v2725
  %v2893 = vpop.f32.mrb[0].mxu0
  %v2894 = vadd.f32 %v2780, %v2893
  %v2895 = vpop.f32.mrb[0].mxu0
  %2896 = vmatprep.mubr.f32.mxu0 %v2728
  %2897 = vmatmul.mubr.f32.gmra.mrb[0].mxu0 %v2727
  %v2898 = vpop.f32.mrb[0].mxu0
  %v2899 = vadd.f32 %v2780, %v2898
  %v2900 = vpop.f32.mrb[0].mxu0
  %2901 = vmatprep.mubr.f32.mxu0 %v2730
  %2902 = vmatmul.mubr.f32.gmra.mrb[0].mxu0 %v2729
  %v2903 = vpop.f32.mrb[0].mxu0
  %v2904 = vadd.f32 %v2780, %v2903
  %v2905 = vpop.f32.mrb[0].mxu0
  %2906 = vmatprep.mubr.f32.mxu0 %v2732
  %2907 = vmatmul.mubr.f32.gmra.mrb[0].mxu0 %v2731
  %v2908 = vpop.f32.mrb[0].mxu0
  %v2909 = vadd.f32 %v2780, %v2908
  %v2910 = vpop.f32.mrb[0].mxu0
  %2911 = vmatprep.mubr.f32.mxu0 %v2734
  %2912 = vmatmul.mubr.f32.gmra.mrb[0].mxu0 %v2733
  %v2913 = vpop.f32.mrb[0].mxu0
  %v2914 = vadd.f32 %v2780, %v2913
  %v2915 = vpop.f32.mrb[0].mxu0
  %2916 = vmatprep.mubr.f32.mxu0 %v2736
  %2917 = vmatmul.mubr.f32.gmra.mrb[0].mxu0 %v2735
  %v2918 = vpop.f32.mrb[0].mxu0
  %v2919 = vadd.f32 %v2780, %v2918
  %v2920 = vpop.f32.mrb[0].mxu0
  %2921 = vmatprep.mubr.f32.mxu0 %v2738
  %2922 = vmatmul.mubr.f32.gmra.mrb[0].mxu0 %v2737
  %v2923 = vpop.f32.mrb[0].mxu0
  %v2924 = vadd.f32 %v2780, %v2923
  %v2925 = vpop.f32.mrb[0].mxu0
  %2926 = vmatprep.mubr.f32.mxu0 %v2740
  %2927 = vmatmul.mubr.f32.gmra.mrb[0].mxu0 %v2739
  %v2928 = vpop.f32.mrb[0].mxu0
  %v2929 = vadd.f32 %v2780, %v2928
  %v2930 = vpop.f32.mrb[0].mxu0
  %2931 = vmatprep.mubr.f32.mxu0 %v2742
  %2932 = vmatmul.mubr.f32.gmra.mrb[0].mxu0 %v2741
  %v2933 = vpop.f32.mrb[0].mxu0
  %v2934 = vadd.f32 %v2780, %v2933
  %v2935 = vpop.f32.mrb[0].mxu0
  %2936 = vdwg.mxu0
  %2946 = vrot.lane.b32.xlu0 %v2894, 10
  %v2947 = vpop.permute.xlu0 %2946
  %2948 = vrot.lane.b32.xlu0 %v2899, 10
  %v2949 = vpop.permute.xlu0 %2948
  %2950 = vrot.lane.b32.xlu0 %v2904, 10
  %v2951 = vpop.permute.xlu0 %2950
  %2952 = vrot.lane.b32.xlu0 %v2909, 10
  %v2953 = vpop.permute.xlu0 %2952
  %2954 = vrot.lane.b32.xlu0 %v2914, 10
  %v2955 = vpop.permute.xlu0 %2954
  %2956 = vrot.lane.b32.xlu0 %v2919, 10
  %v2957 = vpop.permute.xlu0 %2956
  %2958 = vrot.lane.b32.xlu0 %v2924, 10
  %v2959 = vpop.permute.xlu0 %2958
  %2960 = vrot.lane.b32.xlu0 %v2929, 10
  %v2961 = vpop.permute.xlu0 %2960
  %2962 = vrot.lane.b32.xlu0 %v2934, 10
  %v2963 = vpop.permute.xlu0 %2962
  %vm2973 = vcmask 80896
  %v2974 = vsel %vm2973, %v2849, %v2947
  %v2975 = vsel %vm2973, %v2854, %v2949
  %v2976 = vsel %vm2973, %v2859, %v2951
  %v2977 = vsel %vm2973, %v2864, %v2953
  %v2978 = vsel %vm2973, %v2869, %v2955
  %v2979 = vsel %vm2973, %v2874, %v2957
  %v2980 = vsel %vm2973, %v2879, %v2959
  %v2981 = vsel %vm2973, %v2884, %v2961
  %v2982 = vsel %vm2973, %v2889, %v2963
  %v2983 = vld [vmem:[%s9] sm:$0xff]
  %v2984 = vld [vmem:[%s9 + $0x8] sm:$0xff]
  %v2985 = vld [vmem:[%s9 + $0x10] sm:$0xff]
  %v2986 = vld [vmem:[%s9 + $0x18] sm:$0xff]
  %v2987 = vld [vmem:[%s9 + $0x20] sm:$0xff]
  %v2988 = vld [vmem:[%s9 + $0x28] sm:$0xff]
  %v2989 = vld [vmem:[%s9 + $0x30] sm:$0xf]
  %v2990 = vld [vmem:[%s9 + $0x38] sm:$0xf]
  %v2991 = vld [vmem:[%s9 + $0x40] sm:$0xf]
  %v2992 = vld [vmem:[%s10] sm:$0x7]
  %v2994 = vlaneseq
  %v2995 = vshrl.u32 %v2994, 7
  %v2996 = vsub.s32 0, %v2995
  %v2997 = vrot.slane %v2992, %v2996
  %v2998 = vlaneseq
  %v2999 = vshrl.u32 %v2998, 7
  %v3000 = vsub.s32 1, %v2999
  %v3001 = vrot.slane %v2992, %v3000
  %v3002 = vlaneseq
  %v3003 = vshrl.u32 %v3002, 7
  %v3004 = vsub.s32 2, %v3003
  %v3005 = vrot.slane %v2992, %v3004
  %vm3009 = vcmask 162816
  %v3011 = vsel %vm3009, %v2974, 0
  %v3014 = vsel %vm3009, %v2975, 0
  %v3017 = vsel %vm3009, %v2976, 0
  %v3020 = vsel %vm3009, %v2977, 0
  %v3023 = vsel %vm3009, %v2978, 0
  %v3026 = vsel %vm3009, %v2979, 0
  %v3029 = vsel %vm3009, %v2980, 0
  %v3032 = vsel %vm3009, %v2981, 0
  %v3035 = vsel %vm3009, %v2982, 0
  %v3038 = vsel %vm1271, %v2989, 0
  %v3041 = vsel %vm1271, %v2990, 0
  %v3044 = vsel %vm1271, %v2991, 0
  %3046 = vmatprep.subr.mxu0 %v2984
  %3047 = vmatpush1.msra.mxu0 %v2983
  %3048 = vmatprep.subr.mxu0 %v2987
  %3049 = vmatpush1.msra.mxu0 %v2986
  %3050 = vmatprep.subr.mxu0 %v3041
  %3051 = vmatpush1.msra.mxu0 %v3038
  %3052 = vmatprep.subr.mxu0 0.0
  %3053 = vmatpush1.msra.mxu0 0.0
  %3054 = vmatprep.subr.mxu0 0.0
  %3055 = vmatpush1.msra.mxu0 0.0
  %3056 = vmatprep.subr.mxu0 0.0
  %3057 = vmatpush1.msra.mxu0 0.0
  %3058 = vmatprep.subr.mxu0 0.0
  %3059 = vmatpush1.msra.mxu0 0.0
  %3060 = vmatprep.subr.mxu0 0.0
  %3061 = vmatpush1.msra.mxu0 0.0
  %3062 = vmatprep.subr.mxu0 0.0
  %3063 = vmatpush1.msra.mxu0 0.0
  %3064 = vmatprep.subr.mxu0 0.0
  %3065 = vmatpush1.msra.mxu0 0.0
  %3066 = vmatprep.subr.mxu0 0.0
  %3067 = vmatpush1.msra.mxu0 0.0
  %3068 = vmatprep.subr.mxu0 0.0
  %3069 = vmatpush1.msra.mxu0 0.0
  %3070 = vmatprep.subr.mxu0 0.0
  %3071 = vmatpush1.msra.mxu0 0.0
  %3072 = vmatprep.subr.mxu0 0.0
  %3073 = vmatpush1.msra.mxu0 0.0
  %3074 = vmatprep.subr.mxu0 0.0
  %3075 = vmatpush1.msra.mxu0 0.0
  %3076 = vmatprep.subr.mxu0 0.0
  %3077 = vmatpush1.msra.mxu0 0.0
  %3078 = vmatprep.subr.mxu0 0.0
  %3079 = vmatpush1.msra.mxu0 0.0
  %3080 = vmatprep.subr.mxu0 0.0
  %3081 = vmatpush1.msra.mxu0 0.0
  %3082 = vmatprep.subr.mxu0 0.0
  %3083 = vmatpush1.msra.mxu0 0.0
  %3084 = vmatprep.subr.mxu0 0.0
  %3085 = vmatpush1.msra.mxu0 0.0
  %3086 = vmatprep.subr.mxu0 0.0
  %3087 = vmatpush1.msra.mxu0 0.0
  %3088 = vmatprep.subr.mxu0 0.0
  %3089 = vmatpush1.msra.mxu0 0.0
  %3090 = vmatprep.subr.mxu0 0.0
  %3091 = vmatpush1.msra.mxu0 0.0
  %3092 = vmatprep.subr.mxu0 0.0
  %3093 = vmatpush1.msra.mxu0 0.0
  %3094 = vmatprep.subr.mxu0 0.0
  %3095 = vmatpush1.msra.mxu0 0.0
  %3096 = vmatprep.subr.mxu0 0.0
  %3097 = vmatpush1.msra.mxu0 0.0
  %3098 = vmatprep.subr.mxu0 0.0
  %3099 = vmatpush1.msra.mxu0 0.0
  %3100 = vmatprep.subr.mxu0 0.0
  %3101 = vmatpush1.msra.mxu0 0.0
  %3102 = vmatprep.subr.mxu0 0.0
  %3103 = vmatpush1.msra.mxu0 0.0
  %3104 = vmatprep.subr.mxu0 0.0
  %3105 = vmatpush1.msra.mxu0 0.0
  %3106 = vmatprep.subr.mxu0 0.0
  %3107 = vmatpush1.msra.mxu0 0.0
  %3108 = vmatprep.subr.mxu0 0.0
  %3109 = vmatpush1.msra.mxu0 0.0
  %3110 = vmatprep.mubr.f32.mxu0 0.0
  %3111 = vmatmul.mubr.f32.gmra.mrb[0].mxu0 %v3011
  %v3112 = vpop.f32.mrb[0].mxu0
  %v3113 = vadd.f32 %v2997, %v3112
  %v3114 = vpop.f32.mrb[0].mxu0
  %v3115 = vadd.f32 %v3001, %v3114
  %3116 = vmatprep.mubr.f32.mxu0 0.0
  %3117 = vmatmul.mubr.f32.gmra.mrb[0].mxu0 %v3014
  %v3118 = vpop.f32.mrb[0].mxu0
  %v3119 = vadd.f32 %v2997, %v3118
  %v3120 = vpop.f32.mrb[0].mxu0
  %v3121 = vadd.f32 %v3001, %v3120
  %3122 = vmatprep.mubr.f32.mxu0 0.0
  %3123 = vmatmul.mubr.f32.gmra.mrb[0].mxu0 %v3017
  %v3124 = vpop.f32.mrb[0].mxu0
  %v3125 = vadd.f32 %v2997, %v3124
  %v3126 = vpop.f32.mrb[0].mxu0
  %v3127 = vadd.f32 %v3001, %v3126
  %3128 = vmatprep.mubr.f32.mxu0 0.0
  %3129 = vmatmul.mubr.f32.gmra.mrb[0].mxu0 %v3020
  %v3130 = vpop.f32.mrb[0].mxu0
  %v3131 = vadd.f32 %v2997, %v3130
  %v3132 = vpop.f32.mrb[0].mxu0
  %v3133 = vadd.f32 %v3001, %v3132
  %3134 = vmatprep.mubr.f32.mxu0 0.0
  %3135 = vmatmul.mubr.f32.gmra.mrb[0].mxu0 %v3023
  %v3136 = vpop.f32.mrb[0].mxu0
  %v3137 = vadd.f32 %v2997, %v3136
  %v3138 = vpop.f32.mrb[0].mxu0
  %v3139 = vadd.f32 %v3001, %v3138
  %3140 = vmatprep.mubr.f32.mxu0 0.0
  %3141 = vmatmul.mubr.f32.gmra.mrb[0].mxu0 %v3026
  %v3142 = vpop.f32.mrb[0].mxu0
  %v3143 = vadd.f32 %v2997, %v3142
  %v3144 = vpop.f32.mrb[0].mxu0
  %v3145 = vadd.f32 %v3001, %v3144
  %3146 = vmatprep.mubr.f32.mxu0 0.0
  %3147 = vmatmul.mubr.f32.gmra.mrb[0].mxu0 %v3029
  %v3148 = vpop.f32.mrb[0].mxu0
  %v3149 = vadd.f32 %v2997, %v3148
  %v3150 = vpop.f32.mrb[0].mxu0
  %v3151 = vadd.f32 %v3001, %v3150
  %3152 = vmatprep.mubr.f32.mxu0 0.0
  %3153 = vmatmul.mubr.f32.gmra.mrb[0].mxu0 %v3032
  %v3154 = vpop.f32.mrb[0].mxu0
  %v3155 = vadd.f32 %v2997, %v3154
  %v3156 = vpop.f32.mrb[0].mxu0
  %v3157 = vadd.f32 %v3001, %v3156
  %3158 = vmatprep.mubr.f32.mxu0 0.0
  %3159 = vmatmul.mubr.f32.gmra.mrb[0].mxu0 %v3035
  %v3160 = vpop.f32.mrb[0].mxu0
  %v3161 = vadd.f32 %v2997, %v3160
  %v3162 = vpop.f32.mrb[0].mxu0
  %v3163 = vadd.f32 %v3001, %v3162
  %3164 = vdwg.mxu0
  %3165 = vmatprep.subr.mxu0 0.0
  %3166 = vmatpush1.msra.mxu0 %v2985
  %3167 = vmatprep.subr.mxu0 0.0
  %3168 = vmatpush1.msra.mxu0 %v2988
  %3169 = vmatprep.subr.mxu0 0.0
  %3170 = vmatpush1.msra.mxu0 %v3044
  %3171 = vmatprep.subr.mxu0 0.0
  %3172 = vmatpush1.msra.mxu0 0.0
  %3173 = vmatprep.subr.mxu0 0.0
  %3174 = vmatpush1.msra.mxu0 0.0
  %3175 = vmatprep.subr.mxu0 0.0
  %3176 = vmatpush1.msra.mxu0 0.0
  %3177 = vmatprep.subr.mxu0 0.0
  %3178 = vmatpush1.msra.mxu0 0.0
  %3179 = vmatprep.subr.mxu0 0.0
  %3180 = vmatpush1.msra.mxu0 0.0
  %3181 = vmatprep.subr.mxu0 0.0
  %3182 = vmatpush1.msra.mxu0 0.0
  %3183 = vmatprep.subr.mxu0 0.0
  %3184 = vmatpush1.msra.mxu0 0.0
  %3185 = vmatprep.subr.mxu0 0.0
  %3186 = vmatpush1.msra.mxu0 0.0
  %3187 = vmatprep.subr.mxu0 0.0
  %3188 = vmatpush1.msra.mxu0 0.0
  %3189 = vmatprep.subr.mxu0 0.0
  %3190 = vmatpush1.msra.mxu0 0.0
  %3191 = vmatprep.subr.mxu0 0.0
  %3192 = vmatpush1.msra.mxu0 0.0
  %3193 = vmatprep.subr.mxu0 0.0
  %3194 = vmatpush1.msra.mxu0 0.0
  %3195 = vmatprep.subr.mxu0 0.0
  %3196 = vmatpush1.msra.mxu0 0.0
  %3197 = vmatprep.subr.mxu0 0.0
  %3198 = vmatpush1.msra.mxu0 0.0
  %3199 = vmatprep.subr.mxu0 0.0
  %3200 = vmatpush1.msra.mxu0 0.0
  %3201 = vmatprep.subr.mxu0 0.0
  %3202 = vmatpush1.msra.mxu0 0.0
  %3203 = vmatprep.subr.mxu0 0.0
  %3204 = vmatpush1.msra.mxu0 0.0
  %3205 = vmatprep.subr.mxu0 0.0
  %3206 = vmatpush1.msra.mxu0 0.0
  %3207 = vmatprep.subr.mxu0 0.0
  %3208 = vmatpush1.msra.mxu0 0.0
  %3209 = vmatprep.subr.mxu0 0.0
  %3210 = vmatpush1.msra.mxu0 0.0
  %3211 = vmatprep.subr.mxu0 0.0
  %3212 = vmatpush1.msra.mxu0 0.0
  %3213 = vmatprep.subr.mxu0 0.0
  %3214 = vmatpush1.msra.mxu0 0.0
  %3215 = vmatprep.subr.mxu0 0.0
  %3216 = vmatpush1.msra.mxu0 0.0
  %3217 = vmatprep.subr.mxu0 0.0
  %3218 = vmatpush1.msra.mxu0 0.0
  %3219 = vmatprep.subr.mxu0 0.0
  %3220 = vmatpush1.msra.mxu0 0.0
  %3221 = vmatprep.subr.mxu0 0.0
  %3222 = vmatpush1.msra.mxu0 0.0
  %3223 = vmatprep.subr.mxu0 0.0
  %3224 = vmatpush1.msra.mxu0 0.0
  %3225 = vmatprep.subr.mxu0 0.0
  %3226 = vmatpush1.msra.mxu0 0.0
  %3227 = vmatprep.subr.mxu0 0.0
  %3228 = vmatpush1.msra.mxu0 0.0
  %3229 = vmatprep.mubr.f32.mxu0 0.0
  %3230 = vmatmul.mubr.f32.gmra.mrb[0].mxu0 %v3011
  %v3231 = vpop.f32.mrb[0].mxu0
  %v3232 = vadd.f32 %v3005, %v3231
  %v3233 = vpop.f32.mrb[0].mxu0
  %3234 = vmatprep.mubr.f32.mxu0 0.0
  %3235 = vmatmul.mubr.f32.gmra.mrb[0].mxu0 %v3014
  %v3236 = vpop.f32.mrb[0].mxu0
  %v3237 = vadd.f32 %v3005, %v3236
  %v3238 = vpop.f32.mrb[0].mxu0
  %3239 = vmatprep.mubr.f32.mxu0 0.0
  %3240 = vmatmul.mubr.f32.gmra.mrb[0].mxu0 %v3017
  %v3241 = vpop.f32.mrb[0].mxu0
  %v3242 = vadd.f32 %v3005, %v3241
  %v3243 = vpop.f32.mrb[0].mxu0
  %3244 = vmatprep.mubr.f32.mxu0 0.0
  %3245 = vmatmul.mubr.f32.gmra.mrb[0].mxu0 %v3020
  %v3246 = vpop.f32.mrb[0].mxu0
  %v3247 = vadd.f32 %v3005, %v3246
  %v3248 = vpop.f32.mrb[0].mxu0
  %3249 = vmatprep.mubr.f32.mxu0 0.0
  %3250 = vmatmul.mubr.f32.gmra.mrb[0].mxu0 %v3023
  %v3251 = vpop.f32.mrb[0].mxu0
  %v3252 = vadd.f32 %v3005, %v3251
  %v3253 = vpop.f32.mrb[0].mxu0
  %3254 = vmatprep.mubr.f32.mxu0 0.0
  %3255 = vmatmul.mubr.f32.gmra.mrb[0].mxu0 %v3026
  %v3256 = vpop.f32.mrb[0].mxu0
  %v3257 = vadd.f32 %v3005, %v3256
  %v3258 = vpop.f32.mrb[0].mxu0
  %3259 = vmatprep.mubr.f32.mxu0 0.0
  %3260 = vmatmul.mubr.f32.gmra.mrb[0].mxu0 %v3029
  %v3261 = vpop.f32.mrb[0].mxu0
  %v3262 = vadd.f32 %v3005, %v3261
  %v3263 = vpop.f32.mrb[0].mxu0
  %3264 = vmatprep.mubr.f32.mxu0 0.0
  %3265 = vmatmul.mubr.f32.gmra.mrb[0].mxu0 %v3032
  %v3266 = vpop.f32.mrb[0].mxu0
  %v3267 = vadd.f32 %v3005, %v3266
  %v3268 = vpop.f32.mrb[0].mxu0
  %3269 = vmatprep.mubr.f32.mxu0 0.0
  %3270 = vmatmul.mubr.f32.gmra.mrb[0].mxu0 %v3035
  %v3271 = vpop.f32.mrb[0].mxu0
  %v3272 = vadd.f32 %v3005, %v3271
  %v3273 = vpop.f32.mrb[0].mxu0
  %3274 = vdwg.mxu0
  %v3275 = vmax.f32 %v3113, 0.0
  %v3276 = vmax.f32 %v3115, 0.0
  %v3277 = vmax.f32 %v3232, 0.0
  %v3278 = vmax.f32 %v3119, 0.0
  %v3279 = vmax.f32 %v3121, 0.0
  %v3280 = vmax.f32 %v3237, 0.0
  %v3281 = vmax.f32 %v3125, 0.0
  %v3282 = vmax.f32 %v3127, 0.0
  %v3283 = vmax.f32 %v3242, 0.0
  %v3284 = vmax.f32 %v3131, 0.0
  %v3285 = vmax.f32 %v3133, 0.0
  %v3286 = vmax.f32 %v3247, 0.0
  %v3287 = vmax.f32 %v3137, 0.0
  %v3288 = vmax.f32 %v3139, 0.0
  %v3289 = vmax.f32 %v3252, 0.0
  %v3290 = vmax.f32 %v3143, 0.0
  %v3291 = vmax.f32 %v3145, 0.0
  %v3292 = vmax.f32 %v3257, 0.0
  %v3293 = vmax.f32 %v3149, 0.0
  %v3294 = vmax.f32 %v3151, 0.0
  %v3295 = vmax.f32 %v3262, 0.0
  %v3296 = vmax.f32 %v3155, 0.0
  %v3297 = vmax.f32 %v3157, 0.0
  %v3298 = vmax.f32 %v3267, 0.0
  %v3299 = vmax.f32 %v3161, 0.0
  %v3300 = vmax.f32 %v3163, 0.0
  %v3301 = vmax.f32 %v3272, 0.0
  %v3302 = vld [vmem:[%s11] sm:$0xff]
  %v3303 = vld [vmem:[%s11 + $0x8] sm:$0xff]
  %v3304 = vld [vmem:[%s11 + $0x10] sm:$0xff]
  %v3305 = vld [vmem:[%s11 + $0x18] sm:$0xff]
  %v3306 = vld [vmem:[%s11 + $0x20] sm:$0xff]
  %v3307 = vld [vmem:[%s11 + $0x28] sm:$0xff]
  %v3308 = vld [vmem:[%s11 + $0x30] sm:$0xff]
  %v3309 = vld [vmem:[%s11 + $0x38] sm:$0xff]
  %v3310 = vld [vmem:[%s11 + $0x40] sm:$0xff]
  %v3311 = vld [vmem:[%s11 + $0x48] sm:$0xff]
  %v3312 = vld [vmem:[%s11 + $0x50] sm:$0xff]
  %v3313 = vld [vmem:[%s11 + $0x58] sm:$0xff]
  %v3314 = vld [vmem:[%s11 + $0x60] sm:$0xff]
  %v3315 = vld [vmem:[%s11 + $0x68] sm:$0xff]
  %v3316 = vld [vmem:[%s11 + $0x70] sm:$0xff]
  %v3317 = vld [vmem:[%s11 + $0x78] sm:$0xff]
  %v3318 = vld [vmem:[%s11 + $0x80] sm:$0xff]
  %v3319 = vld [vmem:[%s11 + $0x88] sm:$0xff]
  %v3320 = vld [vmem:[%s11 + $0x90] sm:$0xff]
  %v3321 = vld [vmem:[%s11 + $0x98] sm:$0xff]
  %v3322 = vld [vmem:[%s11 + $0xa0] sm:$0xff]
  %v3323 = vld [vmem:[%s11 + $0xa8] sm:$0xff]
  %v3324 = vld [vmem:[%s11 + $0xb0] sm:$0xff]
  %v3325 = vld [vmem:[%s11 + $0xb8] sm:$0xff]
  %v3326 = vld [vmem:[%s11 + $0xc0] sm:$0xff]
  %v3327 = vld [vmem:[%s11 + $0xc8] sm:$0xff]
  %v3328 = vld [vmem:[%s11 + $0xd0] sm:$0xff]
  %v3329 = vld [vmem:[%s11 + $0xd8] sm:$0xff]
  %v3330 = vld [vmem:[%s11 + $0xe0] sm:$0xff]
  %v3331 = vld [vmem:[%s11 + $0xe8] sm:$0xff]
  %v3332 = vld [vmem:[%s11 + $0xf0] sm:$0xff]
  %v3333 = vld [vmem:[%s11 + $0xf8] sm:$0xff]
  %v3334 = vld [vmem:[%s11 + $0x100] sm:$0xff]
  %v3335 = vld [vmem:[%s11 + $0x108] sm:$0xff]
  %v3336 = vld [vmem:[%s11 + $0x110] sm:$0xff]
  %v3337 = vld [vmem:[%s11 + $0x118] sm:$0xff]
  %v3338 = vld [vmem:[%s11 + $0x120] sm:$0xff]
  %v3339 = vld [vmem:[%s11 + $0x128] sm:$0xff]
  %v3340 = vld [vmem:[%s11 + $0x130] sm:$0xff]
  %v3341 = vld [vmem:[%s11 + $0x138] sm:$0xff]
  %v3342 = vld [vmem:[%s11 + $0x140] sm:$0xff]
  %v3343 = vld [vmem:[%s11 + $0x148] sm:$0xff]
  %v3344 = vld [vmem:[%s11 + $0x150] sm:$0xff]
  %v3345 = vld [vmem:[%s11 + $0x158] sm:$0xff]
  %v3346 = vld [vmem:[%s11 + $0x160] sm:$0xff]
  %v3347 = vld [vmem:[%s11 + $0x168] sm:$0xff]
  %v3348 = vld [vmem:[%s11 + $0x170] sm:$0xff]
  %v3349 = vld [vmem:[%s11 + $0x178] sm:$0xff]
  %v3350 = vld [vmem:[%s11 + $0x180] sm:$0xff]
  %v3351 = vld [vmem:[%s11 + $0x188] sm:$0xff]
  %v3352 = vld [vmem:[%s11 + $0x190] sm:$0xff]
  %v3353 = vld [vmem:[%s11 + $0x198] sm:$0xff]
  %v3354 = vld [vmem:[%s11 + $0x1a0] sm:$0xff]
  %v3355 = vld [vmem:[%s11 + $0x1a8] sm:$0xff]
  %v3356 = vld [vmem:[%s11 + $0x1b0] sm:$0xff]
  %v3357 = vld [vmem:[%s11 + $0x1b8] sm:$0xff]
  %v3358 = vld [vmem:[%s11 + $0x1c0] sm:$0xff]
  %v3359 = vld [vmem:[%s11 + $0x1c8] sm:$0xff]
  %v3360 = vld [vmem:[%s11 + $0x1d0] sm:$0xff]
  %v3361 = vld [vmem:[%s11 + $0x1d8] sm:$0xff]
  %v3362 = vld [vmem:[%s11 + $0x1e0] sm:$0xff]
  %v3363 = vld [vmem:[%s11 + $0x1e8] sm:$0xff]
  %v3364 = vld [vmem:[%s11 + $0x1f0] sm:$0xff]
  %v3365 = vld [vmem:[%s11 + $0x1f8] sm:$0xff]
  %v3366 = vld [vmem:[%s11 + $0x200] sm:$0xff]
  %v3367 = vld [vmem:[%s11 + $0x208] sm:$0xff]
  %v3368 = vld [vmem:[%s11 + $0x210] sm:$0xff]
  %v3369 = vld [vmem:[%s11 + $0x218] sm:$0xff]
  %v3370 = vld [vmem:[%s11 + $0x220] sm:$0xff]
  %v3371 = vld [vmem:[%s11 + $0x228] sm:$0xff]
  %v3372 = vld [vmem:[%s11 + $0x230] sm:$0xff]
  %v3373 = vld [vmem:[%s11 + $0x238] sm:$0xff]
  %v3374 = vld [vmem:[%s11 + $0x240] sm:$0xff]
  %v3375 = vld [vmem:[%s11 + $0x248] sm:$0xff]
  %v3376 = vld [vmem:[%s11 + $0x250] sm:$0xff]
  %v3377 = vld [vmem:[%s11 + $0x258] sm:$0xff]
  %v3378 = vld [vmem:[%s11 + $0x260] sm:$0xff]
  %v3379 = vld [vmem:[%s11 + $0x268] sm:$0xff]
  %v3380 = vld [vmem:[%s11 + $0x270] sm:$0xff]
  %v3381 = vld [vmem:[%s11 + $0x278] sm:$0xff]
  %v3382 = vld [vmem:[%s11 + $0x280] sm:$0xff]
  %v3383 = vld [vmem:[%s11 + $0x288] sm:$0xff]
  %v3384 = vld [vmem:[%s11 + $0x290] sm:$0xff]
  %v3385 = vld [vmem:[%s11 + $0x298] sm:$0xff]
  %v3386 = vld [vmem:[%s11 + $0x2a0] sm:$0xff]
  %v3387 = vld [vmem:[%s11 + $0x2a8] sm:$0xff]
  %v3388 = vld [vmem:[%s11 + $0x2b0] sm:$0xff]
  %v3389 = vld [vmem:[%s11 + $0x2b8] sm:$0xff]
  %v3390 = vld [vmem:[%s11 + $0x2c0] sm:$0xff]
  %v3391 = vld [vmem:[%s11 + $0x2c8] sm:$0xff]
  %v3392 = vld [vmem:[%s11 + $0x2d0] sm:$0xff]
  %v3393 = vld [vmem:[%s11 + $0x2d8] sm:$0xff]
  %v3394 = vld [vmem:[%s11 + $0x2e0] sm:$0xff]
  %v3395 = vld [vmem:[%s11 + $0x2e8] sm:$0xff]
  %v3396 = vld [vmem:[%s11 + $0x2f0] sm:$0xff]
  %v3397 = vld [vmem:[%s11 + $0x2f8] sm:$0xff]
  %v3398 = vld [vmem:[%s11 + $0x300] sm:$0xff]
  %v3399 = vld [vmem:[%s11 + $0x308] sm:$0xff]
  %v3400 = vld [vmem:[%s11 + $0x310] sm:$0xff]
  %v3401 = vld [vmem:[%s11 + $0x318] sm:$0xff]
  %v3402 = vld [vmem:[%s11 + $0x320] sm:$0xff]
  %v3403 = vld [vmem:[%s11 + $0x328] sm:$0xff]
  %v3404 = vld [vmem:[%s11 + $0x330] sm:$0xff]
  %v3405 = vld [vmem:[%s11 + $0x338] sm:$0xff]
  %v3406 = vld [vmem:[%s11 + $0x340] sm:$0xff]
  %v3407 = vld [vmem:[%s11 + $0x348] sm:$0xff]
  %v3408 = vld [vmem:[%s11 + $0x350] sm:$0xff]
  %v3409 = vld [vmem:[%s11 + $0x358] sm:$0xff]
  %v3410 = vld [vmem:[%s11 + $0x360] sm:$0xff]
  %v3411 = vld [vmem:[%s11 + $0x368] sm:$0xff]
  %v3412 = vld [vmem:[%s11 + $0x370] sm:$0xff]
  %v3413 = vld [vmem:[%s11 + $0x378] sm:$0xff]
  %v3414 = vld [vmem:[%s11 + $0x380] sm:$0xff]
  %v3415 = vld [vmem:[%s11 + $0x388] sm:$0xff]
  %v3416 = vld [vmem:[%s11 + $0x390] sm:$0xff]
  %v3417 = vld [vmem:[%s11 + $0x398] sm:$0xff]
  %v3418 = vld [vmem:[%s11 + $0x3a0] sm:$0xff]
  %v3419 = vld [vmem:[%s11 + $0x3a8] sm:$0xff]
  %v3420 = vld [vmem:[%s11 + $0x3b0] sm:$0xff]
  %v3421 = vld [vmem:[%s11 + $0x3b8] sm:$0xff]
  %v3422 = vld [vmem:[%s11 + $0x3c0] sm:$0xff]
  %v3423 = vld [vmem:[%s11 + $0x3c8] sm:$0xff]
  %v3424 = vld [vmem:[%s11 + $0x3d0] sm:$0xff]
  %v3425 = vld [vmem:[%s11 + $0x3d8] sm:$0xff]
  %v3426 = vld [vmem:[%s11 + $0x3e0] sm:$0xff]
  %v3427 = vld [vmem:[%s11 + $0x3e8] sm:$0xff]
  %v3428 = vld [vmem:[%s11 + $0x3f0] sm:$0xff]
  %v3429 = vld [vmem:[%s11 + $0x3f8] sm:$0xff]
  %v3430 = vld [vmem:[%s11 + $0x400] sm:$0xff]
  %v3431 = vld [vmem:[%s11 + $0x408] sm:$0xff]
  %v3432 = vld [vmem:[%s11 + $0x410] sm:$0xff]
  %v3433 = vld [vmem:[%s11 + $0x418] sm:$0xff]
  %v3434 = vld [vmem:[%s11 + $0x420] sm:$0xff]
  %v3435 = vld [vmem:[%s11 + $0x428] sm:$0xff]
  %v3436 = vld [vmem:[%s11 + $0x430] sm:$0xff]
  %v3437 = vld [vmem:[%s11 + $0x438] sm:$0xff]
  %v3438 = vld [vmem:[%s11 + $0x440] sm:$0xff]
  %v3439 = vld [vmem:[%s11 + $0x448] sm:$0xff]
  %v3440 = vld [vmem:[%s11 + $0x450] sm:$0xff]
  %v3441 = vld [vmem:[%s11 + $0x458] sm:$0xff]
  %v3442 = vld [vmem:[%s11 + $0x460] sm:$0xff]
  %v3443 = vld [vmem:[%s11 + $0x468] sm:$0xff]
  %v3444 = vld [vmem:[%s11 + $0x470] sm:$0xff]
  %v3445 = vld [vmem:[%s11 + $0x478] sm:$0xff]
  %v3446 = vld [vmem:[%s12] sm:$0x7]
  %v3448 = vlaneseq
  %v3449 = vshrl.u32 %v3448, 7
  %v3450 = vsub.s32 0, %v3449
  %v3451 = vrot.slane %v3446, %v3450
  %v3452 = vlaneseq
  %v3453 = vshrl.u32 %v3452, 7
  %v3454 = vsub.s32 1, %v3453
  %v3455 = vrot.slane %v3446, %v3454
  %v3456 = vlaneseq
  %v3457 = vshrl.u32 %v3456, 7
  %v3458 = vsub.s32 2, %v3457
  %v3459 = vrot.slane %v3446, %v3458
  %3463 = vmatprep.subr.mxu0 %v3303
  %3464 = vmatpush1.msra.mxu0 %v3302
  %3465 = vmatprep.subr.mxu0 %v3306
  %3466 = vmatpush1.msra.mxu0 %v3305
  %3467 = vmatprep.subr.mxu0 %v3309
  %3468 = vmatpush1.msra.mxu0 %v3308
  %3469 = vmatprep.subr.mxu0 %v3312
  %3470 = vmatpush1.msra.mxu0 %v3311
  %3471 = vmatprep.subr.mxu0 %v3315
  %3472 = vmatpush1.msra.mxu0 %v3314
  %3473 = vmatprep.subr.mxu0 %v3318
  %3474 = vmatpush1.msra.mxu0 %v3317
  %3475 = vmatprep.subr.mxu0 %v3321
  %3476 = vmatpush1.msra.mxu0 %v3320
  %3477 = vmatprep.subr.mxu0 %v3324
  %3478 = vmatpush1.msra.mxu0 %v3323
  %3479 = vmatprep.subr.mxu0 %v3327
  %3480 = vmatpush1.msra.mxu0 %v3326
  %3481 = vmatprep.subr.mxu0 %v3330
  %3482 = vmatpush1.msra.mxu0 %v3329
  %3483 = vmatprep.subr.mxu0 %v3333
  %3484 = vmatpush1.msra.mxu0 %v3332
  %3485 = vmatprep.subr.mxu0 %v3336
  %3486 = vmatpush1.msra.mxu0 %v3335
  %3487 = vmatprep.subr.mxu0 %v3339
  %3488 = vmatpush1.msra.mxu0 %v3338
  %3489 = vmatprep.subr.mxu0 %v3342
  %3490 = vmatpush1.msra.mxu0 %v3341
  %3491 = vmatprep.subr.mxu0 %v3345
  %3492 = vmatpush1.msra.mxu0 %v3344
  %3493 = vmatprep.subr.mxu0 %v3348
  %3494 = vmatpush1.msra.mxu0 %v3347
  %3495 = vmatprep.subr.mxu0 %v3351
  %3496 = vmatpush1.msra.mxu0 %v3350
  %3497 = vmatprep.subr.mxu0 %v3354
  %3498 = vmatpush1.msra.mxu0 %v3353
  %3499 = vmatprep.subr.mxu0 %v3357
  %3500 = vmatpush1.msra.mxu0 %v3356
  %3501 = vmatprep.subr.mxu0 %v3360
  %3502 = vmatpush1.msra.mxu0 %v3359
  %3503 = vmatprep.subr.mxu0 %v3363
  %3504 = vmatpush1.msra.mxu0 %v3362
  %3505 = vmatprep.subr.mxu0 %v3366
  %3506 = vmatpush1.msra.mxu0 %v3365
  %3507 = vmatprep.subr.mxu0 %v3369
  %3508 = vmatpush1.msra.mxu0 %v3368
  %3509 = vmatprep.subr.mxu0 %v3372
  %3510 = vmatpush1.msra.mxu0 %v3371
  %3511 = vmatprep.subr.mxu0 %v3375
  %3512 = vmatpush1.msra.mxu0 %v3374
  %3513 = vmatprep.subr.mxu0 %v3378
  %3514 = vmatpush1.msra.mxu0 %v3377
  %3515 = vmatprep.subr.mxu0 %v3381
  %3516 = vmatpush1.msra.mxu0 %v3380
  %3517 = vmatprep.subr.mxu0 %v3384
  %3518 = vmatpush1.msra.mxu0 %v3383
  %3519 = vmatprep.subr.mxu0 %v3387
  %3520 = vmatpush1.msra.mxu0 %v3386
  %3521 = vmatprep.subr.mxu0 %v3390
  %3522 = vmatpush1.msra.mxu0 %v3389
  %3523 = vmatprep.subr.mxu0 %v3393
  %3524 = vmatpush1.msra.mxu0 %v3392
  %3525 = vmatprep.subr.mxu0 %v3396
  %3526 = vmatpush1.msra.mxu0 %v3395
  %3527 = vmatprep.mubr.f32.mxu0 %v3276
  %3528 = vmatmul.mubr.f32.gmra.mrb[0].mxu0 %v3275
  %v3529 = vpop.f32.mrb[0].mxu0
  %v3530 = vadd.f32 %v3451, %v3529
  %v3531 = vpop.f32.mrb[0].mxu0
  %v3532 = vadd.f32 %v3455, %v3531
  %3533 = vmatprep.mubr.f32.mxu0 %v3279
  %3534 = vmatmul.mubr.f32.gmra.mrb[0].mxu0 %v3278
  %v3535 = vpop.f32.mrb[0].mxu0
  %v3536 = vadd.f32 %v3451, %v3535
  %v3537 = vpop.f32.mrb[0].mxu0
  %v3538 = vadd.f32 %v3455, %v3537
  %3539 = vmatprep.mubr.f32.mxu0 %v3282
  %3540 = vmatmul.mubr.f32.gmra.mrb[0].mxu0 %v3281
  %v3541 = vpop.f32.mrb[0].mxu0
  %v3542 = vadd.f32 %v3451, %v3541
  %v3543 = vpop.f32.mrb[0].mxu0
  %v3544 = vadd.f32 %v3455, %v3543
  %3545 = vmatprep.mubr.f32.mxu0 %v3285
  %3546 = vmatmul.mubr.f32.gmra.mrb[0].mxu0 %v3284
  %v3547 = vpop.f32.mrb[0].mxu0
  %v3548 = vadd.f32 %v3451, %v3547
  %v3549 = vpop.f32.mrb[0].mxu0
  %v3550 = vadd.f32 %v3455, %v3549
  %3551 = vmatprep.mubr.f32.mxu0 %v3288
  %3552 = vmatmul.mubr.f32.gmra.mrb[0].mxu0 %v3287
  %v3553 = vpop.f32.mrb[0].mxu0
  %v3554 = vadd.f32 %v3451, %v3553
  %v3555 = vpop.f32.mrb[0].mxu0
  %v3556 = vadd.f32 %v3455, %v3555
  %3557 = vmatprep.mubr.f32.mxu0 %v3291
  %3558 = vmatmul.mubr.f32.gmra.mrb[0].mxu0 %v3290
  %v3559 = vpop.f32.mrb[0].mxu0
  %v3560 = vadd.f32 %v3451, %v3559
  %v3561 = vpop.f32.mrb[0].mxu0
  %v3562 = vadd.f32 %v3455, %v3561
  %3563 = vmatprep.mubr.f32.mxu0 %v3294
  %3564 = vmatmul.mubr.f32.gmra.mrb[0].mxu0 %v3293
  %v3565 = vpop.f32.mrb[0].mxu0
  %v3566 = vadd.f32 %v3451, %v3565
  %v3567 = vpop.f32.mrb[0].mxu0
  %v3568 = vadd.f32 %v3455, %v3567
  %3569 = vmatprep.mubr.f32.mxu0 %v3297
  %3570 = vmatmul.mubr.f32.gmra.mrb[0].mxu0 %v3296
  %v3571 = vpop.f32.mrb[0].mxu0
  %v3572 = vadd.f32 %v3451, %v3571
  %v3573 = vpop.f32.mrb[0].mxu0
  %v3574 = vadd.f32 %v3455, %v3573
  %3575 = vmatprep.mubr.f32.mxu0 %v3300
  %3576 = vmatmul.mubr.f32.gmra.mrb[0].mxu0 %v3299
  %v3577 = vpop.f32.mrb[0].mxu0
  %v3578 = vadd.f32 %v3451, %v3577
  %v3579 = vpop.f32.mrb[0].mxu0
  %v3580 = vadd.f32 %v3455, %v3579
  %3581 = vdwg.mxu0
  %3582 = vmatprep.subr.mxu0 %v3399
  %3583 = vmatpush1.msra.mxu0 %v3398
  %3584 = vmatprep.subr.mxu0 %v3402
  %3585 = vmatpush1.msra.mxu0 %v3401
  %3586 = vmatprep.subr.mxu0 %v3405
  %3587 = vmatpush1.msra.mxu0 %v3404
  %3588 = vmatprep.subr.mxu0 %v3408
  %3589 = vmatpush1.msra.mxu0 %v3407
  %3590 = vmatprep.subr.mxu0 %v3411
  %3591 = vmatpush1.msra.mxu0 %v3410
  %3592 = vmatprep.subr.mxu0 %v3414
  %3593 = vmatpush1.msra.mxu0 %v3413
  %3594 = vmatprep.subr.mxu0 %v3417
  %3595 = vmatpush1.msra.mxu0 %v3416
  %3596 = vmatprep.subr.mxu0 %v3420
  %3597 = vmatpush1.msra.mxu0 %v3419
  %3598 = vmatprep.subr.mxu0 %v3423
  %3599 = vmatpush1.msra.mxu0 %v3422
  %3600 = vmatprep.subr.mxu0 %v3426
  %3601 = vmatpush1.msra.mxu0 %v3425
  %3602 = vmatprep.subr.mxu0 %v3429
  %3603 = vmatpush1.msra.mxu0 %v3428
  %3604 = vmatprep.subr.mxu0 %v3432
  %3605 = vmatpush1.msra.mxu0 %v3431
  %3606 = vmatprep.subr.mxu0 %v3435
  %3607 = vmatpush1.msra.mxu0 %v3434
  %3608 = vmatprep.subr.mxu0 %v3438
  %3609 = vmatpush1.msra.mxu0 %v3437
  %3610 = vmatprep.subr.mxu0 %v3441
  %3611 = vmatpush1.msra.mxu0 %v3440
  %3612 = vmatprep.subr.mxu0 %v3444
  %3613 = vmatpush1.msra.mxu0 %v3443
  %3614 = vmatprep.subr.mxu0 0.0
  %3615 = vmatpush1.msra.mxu0 0.0
  %3616 = vmatprep.subr.mxu0 0.0
  %3617 = vmatpush1.msra.mxu0 0.0
  %3618 = vmatprep.subr.mxu0 0.0
  %3619 = vmatpush1.msra.mxu0 0.0
  %3620 = vmatprep.subr.mxu0 0.0
  %3621 = vmatpush1.msra.mxu0 0.0
  %3622 = vmatprep.subr.mxu0 0.0
  %3623 = vmatpush1.msra.mxu0 0.0
  %3624 = vmatprep.subr.mxu0 0.0
  %3625 = vmatpush1.msra.mxu0 0.0
  %3626 = vmatprep.subr.mxu0 0.0
  %3627 = vmatpush1.msra.mxu0 0.0
  %3628 = vmatprep.subr.mxu0 0.0
  %3629 = vmatpush1.msra.mxu0 0.0
  %3630 = vmatprep.subr.mxu0 0.0
  %3631 = vmatpush1.msra.mxu0 0.0
  %3632 = vmatprep.subr.mxu0 0.0
  %3633 = vmatpush1.msra.mxu0 0.0
  %3634 = vmatprep.subr.mxu0 0.0
  %3635 = vmatpush1.msra.mxu0 0.0
  %3636 = vmatprep.subr.mxu0 0.0
  %3637 = vmatpush1.msra.mxu0 0.0
  %3638 = vmatprep.subr.mxu0 0.0
  %3639 = vmatpush1.msra.mxu0 0.0
  %3640 = vmatprep.subr.mxu0 0.0
  %3641 = vmatpush1.msra.mxu0 0.0
  %3642 = vmatprep.subr.mxu0 0.0
  %3643 = vmatpush1.msra.mxu0 0.0
  %3644 = vmatprep.subr.mxu0 0.0
  %3645 = vmatpush1.msra.mxu0 0.0
  %3646 = vmatprep.mubr.f32.mxu0 0.0
  %3647 = vmatmul.mubr.f32.gmra.mrb[0].mxu0 %v3277
  %v3648 = vpop.f32.mrb[0].mxu0
  %v3649 = vadd.f32 %v3530, %v3648
  %v3650 = vpop.f32.mrb[0].mxu0
  %v3651 = vadd.f32 %v3532, %v3650
  %3652 = vmatprep.mubr.f32.mxu0 0.0
  %3653 = vmatmul.mubr.f32.gmra.mrb[0].mxu0 %v3280
  %v3654 = vpop.f32.mrb[0].mxu0
  %v3655 = vadd.f32 %v3536, %v3654
  %v3656 = vpop.f32.mrb[0].mxu0
  %v3657 = vadd.f32 %v3538, %v3656
  %3658 = vmatprep.mubr.f32.mxu0 0.0
  %3659 = vmatmul.mubr.f32.gmra.mrb[0].mxu0 %v3283
  %v3660 = vpop.f32.mrb[0].mxu0
  %v3661 = vadd.f32 %v3542, %v3660
  %v3662 = vpop.f32.mrb[0].mxu0
  %v3663 = vadd.f32 %v3544, %v3662
  %3664 = vmatprep.mubr.f32.mxu0 0.0
  %3665 = vmatmul.mubr.f32.gmra.mrb[0].mxu0 %v3286
  %v3666 = vpop.f32.mrb[0].mxu0
  %v3667 = vadd.f32 %v3548, %v3666
  %v3668 = vpop.f32.mrb[0].mxu0
  %v3669 = vadd.f32 %v3550, %v3668
  %3670 = vmatprep.mubr.f32.mxu0 0.0
  %3671 = vmatmul.mubr.f32.gmra.mrb[0].mxu0 %v3289
  %v3672 = vpop.f32.mrb[0].mxu0
  %v3673 = vadd.f32 %v3554, %v3672
  %v3674 = vpop.f32.mrb[0].mxu0
  %v3675 = vadd.f32 %v3556, %v3674
  %3676 = vmatprep.mubr.f32.mxu0 0.0
  %3677 = vmatmul.mubr.f32.gmra.mrb[0].mxu0 %v3292
  %v3678 = vpop.f32.mrb[0].mxu0
  %v3679 = vadd.f32 %v3560, %v3678
  %v3680 = vpop.f32.mrb[0].mxu0
  %v3681 = vadd.f32 %v3562, %v3680
  %3682 = vmatprep.mubr.f32.mxu0 0.0
  %3683 = vmatmul.mubr.f32.gmra.mrb[0].mxu0 %v3295
  %v3684 = vpop.f32.mrb[0].mxu0
  %v3685 = vadd.f32 %v3566, %v3684
  %v3686 = vpop.f32.mrb[0].mxu0
  %v3687 = vadd.f32 %v3568, %v3686
  %3688 = vmatprep.mubr.f32.mxu0 0.0
  %3689 = vmatmul.mubr.f32.gmra.mrb[0].mxu0 %v3298
  %v3690 = vpop.f32.mrb[0].mxu0
  %v3691 = vadd.f32 %v3572, %v3690
  %v3692 = vpop.f32.mrb[0].mxu0
  %v3693 = vadd.f32 %v3574, %v3692
  %3694 = vmatprep.mubr.f32.mxu0 0.0
  %3695 = vmatmul.mubr.f32.gmra.mrb[0].mxu0 %v3301
  %v3696 = vpop.f32.mrb[0].mxu0
  %v3697 = vadd.f32 %v3578, %v3696
  %v3698 = vpop.f32.mrb[0].mxu0
  %v3699 = vadd.f32 %v3580, %v3698
  %3700 = vdwg.mxu0
  %3701 = vmatprep.subr.mxu0 0.0
  %3702 = vmatpush1.msra.mxu0 %v3304
  %3703 = vmatprep.subr.mxu0 0.0
  %3704 = vmatpush1.msra.mxu0 %v3307
  %3705 = vmatprep.subr.mxu0 0.0
  %3706 = vmatpush1.msra.mxu0 %v3310
  %3707 = vmatprep.subr.mxu0 0.0
  %3708 = vmatpush1.msra.mxu0 %v3313
  %3709 = vmatprep.subr.mxu0 0.0
  %3710 = vmatpush1.msra.mxu0 %v3316
  %3711 = vmatprep.subr.mxu0 0.0
  %3712 = vmatpush1.msra.mxu0 %v3319
  %3713 = vmatprep.subr.mxu0 0.0
  %3714 = vmatpush1.msra.mxu0 %v3322
  %3715 = vmatprep.subr.mxu0 0.0
  %3716 = vmatpush1.msra.mxu0 %v3325
  %3717 = vmatprep.subr.mxu0 0.0
  %3718 = vmatpush1.msra.mxu0 %v3328
  %3719 = vmatprep.subr.mxu0 0.0
  %3720 = vmatpush1.msra.mxu0 %v3331
  %3721 = vmatprep.subr.mxu0 0.0
  %3722 = vmatpush1.msra.mxu0 %v3334
  %3723 = vmatprep.subr.mxu0 0.0
  %3724 = vmatpush1.msra.mxu0 %v3337
  %3725 = vmatprep.subr.mxu0 0.0
  %3726 = vmatpush1.msra.mxu0 %v3340
  %3727 = vmatprep.subr.mxu0 0.0
  %3728 = vmatpush1.msra.mxu0 %v3343
  %3729 = vmatprep.subr.mxu0 0.0
  %3730 = vmatpush1.msra.mxu0 %v3346
  %3731 = vmatprep.subr.mxu0 0.0
  %3732 = vmatpush1.msra.mxu0 %v3349
  %3733 = vmatprep.subr.mxu0 0.0
  %3734 = vmatpush1.msra.mxu0 %v3352
  %3735 = vmatprep.subr.mxu0 0.0
  %3736 = vmatpush1.msra.mxu0 %v3355
  %3737 = vmatprep.subr.mxu0 0.0
  %3738 = vmatpush1.msra.mxu0 %v3358
  %3739 = vmatprep.subr.mxu0 0.0
  %3740 = vmatpush1.msra.mxu0 %v3361
  %3741 = vmatprep.subr.mxu0 0.0
  %3742 = vmatpush1.msra.mxu0 %v3364
  %3743 = vmatprep.subr.mxu0 0.0
  %3744 = vmatpush1.msra.mxu0 %v3367
  %3745 = vmatprep.subr.mxu0 0.0
  %3746 = vmatpush1.msra.mxu0 %v3370
  %3747 = vmatprep.subr.mxu0 0.0
  %3748 = vmatpush1.msra.mxu0 %v3373
  %3749 = vmatprep.subr.mxu0 0.0
  %3750 = vmatpush1.msra.mxu0 %v3376
  %3751 = vmatprep.subr.mxu0 0.0
  %3752 = vmatpush1.msra.mxu0 %v3379
  %3753 = vmatprep.subr.mxu0 0.0
  %3754 = vmatpush1.msra.mxu0 %v3382
  %3755 = vmatprep.subr.mxu0 0.0
  %3756 = vmatpush1.msra.mxu0 %v3385
  %3757 = vmatprep.subr.mxu0 0.0
  %3758 = vmatpush1.msra.mxu0 %v3388
  %3759 = vmatprep.subr.mxu0 0.0
  %3760 = vmatpush1.msra.mxu0 %v3391
  %3761 = vmatprep.subr.mxu0 0.0
  %3762 = vmatpush1.msra.mxu0 %v3394
  %3763 = vmatprep.subr.mxu0 0.0
  %3764 = vmatpush1.msra.mxu0 %v3397
  %3765 = vmatprep.mubr.f32.mxu0 %v3276
  %3766 = vmatmul.mubr.f32.gmra.mrb[0].mxu0 %v3275
  %v3767 = vpop.f32.mrb[0].mxu0
  %v3768 = vadd.f32 %v3459, %v3767
  %v3769 = vpop.f32.mrb[0].mxu0
  %3770 = vmatprep.mubr.f32.mxu0 %v3279
  %3771 = vmatmul.mubr.f32.gmra.mrb[0].mxu0 %v3278
  %v3772 = vpop.f32.mrb[0].mxu0
  %v3773 = vadd.f32 %v3459, %v3772
  %v3774 = vpop.f32.mrb[0].mxu0
  %3775 = vmatprep.mubr.f32.mxu0 %v3282
  %3776 = vmatmul.mubr.f32.gmra.mrb[0].mxu0 %v3281
  %v3777 = vpop.f32.mrb[0].mxu0
  %v3778 = vadd.f32 %v3459, %v3777
  %v3779 = vpop.f32.mrb[0].mxu0
  %3780 = vmatprep.mubr.f32.mxu0 %v3285
  %3781 = vmatmul.mubr.f32.gmra.mrb[0].mxu0 %v3284
  %v3782 = vpop.f32.mrb[0].mxu0
  %v3783 = vadd.f32 %v3459, %v3782
  %v3784 = vpop.f32.mrb[0].mxu0
  %3785 = vmatprep.mubr.f32.mxu0 %v3288
  %3786 = vmatmul.mubr.f32.gmra.mrb[0].mxu0 %v3287
  %v3787 = vpop.f32.mrb[0].mxu0
  %v3788 = vadd.f32 %v3459, %v3787
  %v3789 = vpop.f32.mrb[0].mxu0
  %3790 = vmatprep.mubr.f32.mxu0 %v3291
  %3791 = vmatmul.mubr.f32.gmra.mrb[0].mxu0 %v3290
  %v3792 = vpop.f32.mrb[0].mxu0
  %v3793 = vadd.f32 %v3459, %v3792
  %v3794 = vpop.f32.mrb[0].mxu0
  %3795 = vmatprep.mubr.f32.mxu0 %v3294
  %3796 = vmatmul.mubr.f32.gmra.mrb[0].mxu0 %v3293
  %v3797 = vpop.f32.mrb[0].mxu0
  %v3798 = vadd.f32 %v3459, %v3797
  %v3799 = vpop.f32.mrb[0].mxu0
  %3800 = vmatprep.mubr.f32.mxu0 %v3297
  %3801 = vmatmul.mubr.f32.gmra.mrb[0].mxu0 %v3296
  %v3802 = vpop.f32.mrb[0].mxu0
  %v3803 = vadd.f32 %v3459, %v3802
  %v3804 = vpop.f32.mrb[0].mxu0
  %3805 = vmatprep.mubr.f32.mxu0 %v3300
  %3806 = vmatmul.mubr.f32.gmra.mrb[0].mxu0 %v3299
  %v3807 = vpop.f32.mrb[0].mxu0
  %v3808 = vadd.f32 %v3459, %v3807
  %v3809 = vpop.f32.mrb[0].mxu0
  %3810 = vdwg.mxu0
  %3811 = vmatprep.subr.mxu0 0.0
  %3812 = vmatpush1.msra.mxu0 %v3400
  %3813 = vmatprep.subr.mxu0 0.0
  %3814 = vmatpush1.msra.mxu0 %v3403
  %3815 = vmatprep.subr.mxu0 0.0
  %3816 = vmatpush1.msra.mxu0 %v3406
  %3817 = vmatprep.subr.mxu0 0.0
  %3818 = vmatpush1.msra.mxu0 %v3409
  %3819 = vmatprep.subr.mxu0 0.0
  %3820 = vmatpush1.msra.mxu0 %v3412
  %3821 = vmatprep.subr.mxu0 0.0
  %3822 = vmatpush1.msra.mxu0 %v3415
  %3823 = vmatprep.subr.mxu0 0.0
  %3824 = vmatpush1.msra.mxu0 %v3418
  %3825 = vmatprep.subr.mxu0 0.0
  %3826 = vmatpush1.msra.mxu0 %v3421
  %3827 = vmatprep.subr.mxu0 0.0
  %3828 = vmatpush1.msra.mxu0 %v3424
  %3829 = vmatprep.subr.mxu0 0.0
  %3830 = vmatpush1.msra.mxu0 %v3427
  %3831 = vmatprep.subr.mxu0 0.0
  %3832 = vmatpush1.msra.mxu0 %v3430
  %3833 = vmatprep.subr.mxu0 0.0
  %3834 = vmatpush1.msra.mxu0 %v3433
  %3835 = vmatprep.subr.mxu0 0.0
  %3836 = vmatpush1.msra.mxu0 %v3436
  %3837 = vmatprep.subr.mxu0 0.0
  %3838 = vmatpush1.msra.mxu0 %v3439
  %3839 = vmatprep.subr.mxu0 0.0
  %3840 = vmatpush1.msra.mxu0 %v3442
  %3841 = vmatprep.subr.mxu0 0.0
  %3842 = vmatpush1.msra.mxu0 %v3445
  %3843 = vmatprep.subr.mxu0 0.0
  %3844 = vmatpush1.msra.mxu0 0.0
  %3845 = vmatprep.subr.mxu0 0.0
  %3846 = vmatpush1.msra.mxu0 0.0
  %3847 = vmatprep.subr.mxu0 0.0
  %3848 = vmatpush1.msra.mxu0 0.0
  %3849 = vmatprep.subr.mxu0 0.0
  %3850 = vmatpush1.msra.mxu0 0.0
  %3851 = vmatprep.subr.mxu0 0.0
  %3852 = vmatpush1.msra.mxu0 0.0
  %3853 = vmatprep.subr.mxu0 0.0
  %3854 = vmatpush1.msra.mxu0 0.0
  %3855 = vmatprep.subr.mxu0 0.0
  %3856 = vmatpush1.msra.mxu0 0.0
  %3857 = vmatprep.subr.mxu0 0.0
  %3858 = vmatpush1.msra.mxu0 0.0
  %3859 = vmatprep.subr.mxu0 0.0
  %3860 = vmatpush1.msra.mxu0 0.0
  %3861 = vmatprep.subr.mxu0 0.0
  %3862 = vmatpush1.msra.mxu0 0.0
  %3863 = vmatprep.subr.mxu0 0.0
  %3864 = vmatpush1.msra.mxu0 0.0
  %3865 = vmatprep.subr.mxu0 0.0
  %3866 = vmatpush1.msra.mxu0 0.0
  %3867 = vmatprep.subr.mxu0 0.0
  %3868 = vmatpush1.msra.mxu0 0.0
  %3869 = vmatprep.subr.mxu0 0.0
  %3870 = vmatpush1.msra.mxu0 0.0
  %3871 = vmatprep.subr.mxu0 0.0
  %3872 = vmatpush1.msra.mxu0 0.0
  %3873 = vmatprep.subr.mxu0 0.0
  %3874 = vmatpush1.msra.mxu0 0.0
  %3875 = vmatprep.mubr.f32.mxu0 0.0
  %3876 = vmatmul.mubr.f32.gmra.mrb[0].mxu0 %v3277
  %v3877 = vpop.f32.mrb[0].mxu0
  %v3878 = vadd.f32 %v3768, %v3877
  %v3879 = vpop.f32.mrb[0].mxu0
  %3880 = vmatprep.mubr.f32.mxu0 0.0
  %3881 = vmatmul.mubr.f32.gmra.mrb[0].mxu0 %v3280
  %v3882 = vpop.f32.mrb[0].mxu0
  %v3883 = vadd.f32 %v3773, %v3882
  %v3884 = vpop.f32.mrb[0].mxu0
  %3885 = vmatprep.mubr.f32.mxu0 0.0
  %3886 = vmatmul.mubr.f32.gmra.mrb[0].mxu0 %v3283
  %v3887 = vpop.f32.mrb[0].mxu0
  %v3888 = vadd.f32 %v3778, %v3887
  %v3889 = vpop.f32.mrb[0].mxu0
  %3890 = vmatprep.mubr.f32.mxu0 0.0
  %3891 = vmatmul.mubr.f32.gmra.mrb[0].mxu0 %v3286
  %v3892 = vpop.f32.mrb[0].mxu0
  %v3893 = vadd.f32 %v3783, %v3892
  %v3894 = vpop.f32.mrb[0].mxu0
  %3895 = vmatprep.mubr.f32.mxu0 0.0
  %3896 = vmatmul.mubr.f32.gmra.mrb[0].mxu0 %v3289
  %v3897 = vpop.f32.mrb[0].mxu0
  %v3898 = vadd.f32 %v3788, %v3897
  %v3899 = vpop.f32.mrb[0].mxu0
  %3900 = vmatprep.mubr.f32.mxu0 0.0
  %3901 = vmatmul.mubr.f32.gmra.mrb[0].mxu0 %v3292
  %v3902 = vpop.f32.mrb[0].mxu0
  %v3903 = vadd.f32 %v3793, %v3902
  %v3904 = vpop.f32.mrb[0].mxu0
  %3905 = vmatprep.mubr.f32.mxu0 0.0
  %3906 = vmatmul.mubr.f32.gmra.mrb[0].mxu0 %v3295
  %v3907 = vpop.f32.mrb[0].mxu0
  %v3908 = vadd.f32 %v3798, %v3907
  %v3909 = vpop.f32.mrb[0].mxu0
  %3910 = vmatprep.mubr.f32.mxu0 0.0
  %3911 = vmatmul.mubr.f32.gmra.mrb[0].mxu0 %v3298
  %v3912 = vpop.f32.mrb[0].mxu0
  %v3913 = vadd.f32 %v3803, %v3912
  %v3914 = vpop.f32.mrb[0].mxu0
  %3915 = vmatprep.mubr.f32.mxu0 0.0
  %3916 = vmatmul.mubr.f32.gmra.mrb[0].mxu0 %v3301
  %v3917 = vpop.f32.mrb[0].mxu0
  %v3918 = vadd.f32 %v3808, %v3917
  %v3919 = vpop.f32.mrb[0].mxu0
  %3920 = vdwg.mxu0
  %v3921 = vmax.f32 %v3649, 0.0
  %v3922 = vmax.f32 %v3651, 0.0
  %v3923 = vmax.f32 %v3878, 0.0
  %v3924 = vmax.f32 %v3655, 0.0
  %v3925 = vmax.f32 %v3657, 0.0
  %v3926 = vmax.f32 %v3883, 0.0
  %v3927 = vmax.f32 %v3661, 0.0
  %v3928 = vmax.f32 %v3663, 0.0
  %v3929 = vmax.f32 %v3888, 0.0
  %v3930 = vmax.f32 %v3667, 0.0
  %v3931 = vmax.f32 %v3669, 0.0
  %v3932 = vmax.f32 %v3893, 0.0
  %v3933 = vmax.f32 %v3673, 0.0
  %v3934 = vmax.f32 %v3675, 0.0
  %v3935 = vmax.f32 %v3898, 0.0
  %v3936 = vmax.f32 %v3679, 0.0
  %v3937 = vmax.f32 %v3681, 0.0
  %v3938 = vmax.f32 %v3903, 0.0
  %v3939 = vmax.f32 %v3685, 0.0
  %v3940 = vmax.f32 %v3687, 0.0
  %v3941 = vmax.f32 %v3908, 0.0
  %v3942 = vmax.f32 %v3691, 0.0
  %v3943 = vmax.f32 %v3693, 0.0
  %v3944 = vmax.f32 %v3913, 0.0
  %v3945 = vmax.f32 %v3697, 0.0
  %v3946 = vmax.f32 %v3699, 0.0
  %v3947 = vmax.f32 %v3918, 0.0
  %v3948 = vld [vmem:[%s13] sm:$0xff]
  %v3949 = vld [vmem:[%s13 + $0x8] sm:$0xff]
  %v3950 = vld [vmem:[%s13 + $0x10] sm:$0xff]
  %v3951 = vld [vmem:[%s13 + $0x18] sm:$0xff]
  %v3952 = vld [vmem:[%s13 + $0x20] sm:$0xff]
  %v3953 = vld [vmem:[%s13 + $0x28] sm:$0xff]
  %v3954 = vld [vmem:[%s13 + $0x30] sm:$0xff]
  %v3955 = vld [vmem:[%s13 + $0x38] sm:$0xff]
  %v3956 = vld [vmem:[%s13 + $0x40] sm:$0xff]
  %v3957 = vld [vmem:[%s13 + $0x48] sm:$0xff]
  %v3958 = vld [vmem:[%s13 + $0x50] sm:$0xff]
  %v3959 = vld [vmem:[%s13 + $0x58] sm:$0xff]
  %v3960 = vld [vmem:[%s13 + $0x60] sm:$0xff]
  %v3961 = vld [vmem:[%s13 + $0x68] sm:$0xff]
  %v3962 = vld [vmem:[%s13 + $0x70] sm:$0xff]
  %v3963 = vld [vmem:[%s13 + $0x78] sm:$0xff]
  %v3964 = vld [vmem:[%s13 + $0x80] sm:$0xff]
  %v3965 = vld [vmem:[%s13 + $0x88] sm:$0xff]
  %v3966 = vld [vmem:[%s13 + $0x90] sm:$0xff]
  %v3967 = vld [vmem:[%s13 + $0x98] sm:$0xff]
  %v3968 = vld [vmem:[%s13 + $0xa0] sm:$0xff]
  %v3969 = vld [vmem:[%s13 + $0xa8] sm:$0xff]
  %v3970 = vld [vmem:[%s13 + $0xb0] sm:$0xff]
  %v3971 = vld [vmem:[%s13 + $0xb8] sm:$0xff]
  %v3972 = vld [vmem:[%s13 + $0xc0] sm:$0xff]
  %v3973 = vld [vmem:[%s13 + $0xc8] sm:$0xff]
  %v3974 = vld [vmem:[%s13 + $0xd0] sm:$0xff]
  %v3975 = vld [vmem:[%s13 + $0xd8] sm:$0xff]
  %v3976 = vld [vmem:[%s13 + $0xe0] sm:$0xff]
  %v3977 = vld [vmem:[%s13 + $0xe8] sm:$0xff]
  %v3978 = vld [vmem:[%s13 + $0xf0] sm:$0xff]
  %v3979 = vld [vmem:[%s13 + $0xf8] sm:$0xff]
  %v3980 = vld [vmem:[%s13 + $0x100] sm:$0xff]
  %v3981 = vld [vmem:[%s13 + $0x108] sm:$0xff]
  %v3982 = vld [vmem:[%s13 + $0x110] sm:$0xff]
  %v3983 = vld [vmem:[%s13 + $0x118] sm:$0xff]
  %v3984 = vld [vmem:[%s13 + $0x120] sm:$0xff]
  %v3985 = vld [vmem:[%s13 + $0x128] sm:$0xff]
  %v3986 = vld [vmem:[%s13 + $0x130] sm:$0xff]
  %v3987 = vld [vmem:[%s13 + $0x138] sm:$0xff]
  %v3988 = vld [vmem:[%s13 + $0x140] sm:$0xff]
  %v3989 = vld [vmem:[%s13 + $0x148] sm:$0xff]
  %v3990 = vld [vmem:[%s13 + $0x150] sm:$0xff]
  %v3991 = vld [vmem:[%s13 + $0x158] sm:$0xff]
  %v3992 = vld [vmem:[%s13 + $0x160] sm:$0xff]
  %v3993 = vld [vmem:[%s13 + $0x168] sm:$0xff]
  %v3994 = vld [vmem:[%s13 + $0x170] sm:$0xff]
  %v3995 = vld [vmem:[%s13 + $0x178] sm:$0xff]
  %v3996 = vld [vmem:[%s14] sm:$0x1]
  %v3998 = vlaneseq
  %v3999 = vshrl.u32 %v3998, 7
  %v4000 = vsub.s32 0, %v3999
  %v4001 = vrot.slane %v3996, %v4000
  %4003 = vmatprep.subr.mxu0 0.0
  %4004 = vmatpush1.msra.mxu0 %v3948
  %4005 = vmatprep.subr.mxu0 0.0
  %4006 = vmatpush1.msra.mxu0 %v3949
  %4007 = vmatprep.subr.mxu0 0.0
  %4008 = vmatpush1.msra.mxu0 %v3950
  %4009 = vmatprep.subr.mxu0 0.0
  %4010 = vmatpush1.msra.mxu0 %v3951
  %4011 = vmatprep.subr.mxu0 0.0
  %4012 = vmatpush1.msra.mxu0 %v3952
  %4013 = vmatprep.subr.mxu0 0.0
  %4014 = vmatpush1.msra.mxu0 %v3953
  %4015 = vmatprep.subr.mxu0 0.0
  %4016 = vmatpush1.msra.mxu0 %v3954
  %4017 = vmatprep.subr.mxu0 0.0
  %4018 = vmatpush1.msra.mxu0 %v3955
  %4019 = vmatprep.subr.mxu0 0.0
  %4020 = vmatpush1.msra.mxu0 %v3956
  %4021 = vmatprep.subr.mxu0 0.0
  %4022 = vmatpush1.msra.mxu0 %v3957
  %4023 = vmatprep.subr.mxu0 0.0
  %4024 = vmatpush1.msra.mxu0 %v3958
  %4025 = vmatprep.subr.mxu0 0.0
  %4026 = vmatpush1.msra.mxu0 %v3959
  %4027 = vmatprep.subr.mxu0 0.0
  %4028 = vmatpush1.msra.mxu0 %v3960
  %4029 = vmatprep.subr.mxu0 0.0
  %4030 = vmatpush1.msra.mxu0 %v3961
  %4031 = vmatprep.subr.mxu0 0.0
  %4032 = vmatpush1.msra.mxu0 %v3962
  %4033 = vmatprep.subr.mxu0 0.0
  %4034 = vmatpush1.msra.mxu0 %v3963
  %4035 = vmatprep.subr.mxu0 0.0
  %4036 = vmatpush1.msra.mxu0 %v3964
  %4037 = vmatprep.subr.mxu0 0.0
  %4038 = vmatpush1.msra.mxu0 %v3965
  %4039 = vmatprep.subr.mxu0 0.0
  %4040 = vmatpush1.msra.mxu0 %v3966
  %4041 = vmatprep.subr.mxu0 0.0
  %4042 = vmatpush1.msra.mxu0 %v3967
  %4043 = vmatprep.subr.mxu0 0.0
  %4044 = vmatpush1.msra.mxu0 %v3968
  %4045 = vmatprep.subr.mxu0 0.0
  %4046 = vmatpush1.msra.mxu0 %v3969
  %4047 = vmatprep.subr.mxu0 0.0
  %4048 = vmatpush1.msra.mxu0 %v3970
  %4049 = vmatprep.subr.mxu0 0.0
  %4050 = vmatpush1.msra.mxu0 %v3971
  %4051 = vmatprep.subr.mxu0 0.0
  %4052 = vmatpush1.msra.mxu0 %v3972
  %4053 = vmatprep.subr.mxu0 0.0
  %4054 = vmatpush1.msra.mxu0 %v3973
  %4055 = vmatprep.subr.mxu0 0.0
  %4056 = vmatpush1.msra.mxu0 %v3974
  %4057 = vmatprep.subr.mxu0 0.0
  %4058 = vmatpush1.msra.mxu0 %v3975
  %4059 = vmatprep.subr.mxu0 0.0
  %4060 = vmatpush1.msra.mxu0 %v3976
  %4061 = vmatprep.subr.mxu0 0.0
  %4062 = vmatpush1.msra.mxu0 %v3977
  %4063 = vmatprep.subr.mxu0 0.0
  %4064 = vmatpush1.msra.mxu0 %v3978
  %4065 = vmatprep.subr.mxu0 0.0
  %4066 = vmatpush1.msra.mxu0 %v3979
  %4067 = vmatprep.mubr.f32.mxu0 %v3922
  %4068 = vmatmul.mubr.f32.gmra.mrb[0].mxu0 %v3921
  %v4069 = vpop.f32.mrb[0].mxu0
  %v4070 = vadd.f32 %v4001, %v4069
  %v4071 = vpop.f32.mrb[0].mxu0
  %4072 = vmatprep.mubr.f32.mxu0 %v3925
  %4073 = vmatmul.mubr.f32.gmra.mrb[0].mxu0 %v3924
  %v4074 = vpop.f32.mrb[0].mxu0
  %v4075 = vadd.f32 %v4001, %v4074
  %v4076 = vpop.f32.mrb[0].mxu0
  %4077 = vmatprep.mubr.f32.mxu0 %v3928
  %4078 = vmatmul.mubr.f32.gmra.mrb[0].mxu0 %v3927
  %v4079 = vpop.f32.mrb[0].mxu0
  %v4080 = vadd.f32 %v4001, %v4079
  %v4081 = vpop.f32.mrb[0].mxu0
  %4082 = vmatprep.mubr.f32.mxu0 %v3931
  %4083 = vmatmul.mubr.f32.gmra.mrb[0].mxu0 %v3930
  %v4084 = vpop.f32.mrb[0].mxu0
  %v4085 = vadd.f32 %v4001, %v4084
  %v4086 = vpop.f32.mrb[0].mxu0
  %4087 = vmatprep.mubr.f32.mxu0 %v3934
  %4088 = vmatmul.mubr.f32.gmra.mrb[0].mxu0 %v3933
  %v4089 = vpop.f32.mrb[0].mxu0
  %v4090 = vadd.f32 %v4001, %v4089
  %v4091 = vpop.f32.mrb[0].mxu0
  %4092 = vmatprep.mubr.f32.mxu0 %v3937
  %4093 = vmatmul.mubr.f32.gmra.mrb[0].mxu0 %v3936
  %v4094 = vpop.f32.mrb[0].mxu0
  %v4095 = vadd.f32 %v4001, %v4094
  %v4096 = vpop.f32.mrb[0].mxu0
  %4097 = vmatprep.mubr.f32.mxu0 %v3940
  %4098 = vmatmul.mubr.f32.gmra.mrb[0].mxu0 %v3939
  %v4099 = vpop.f32.mrb[0].mxu0
  %v4100 = vadd.f32 %v4001, %v4099
  %v4101 = vpop.f32.mrb[0].mxu0
  %4102 = vmatprep.mubr.f32.mxu0 %v3943
  %4103 = vmatmul.mubr.f32.gmra.mrb[0].mxu0 %v3942
  %v4104 = vpop.f32.mrb[0].mxu0
  %v4105 = vadd.f32 %v4001, %v4104
  %v4106 = vpop.f32.mrb[0].mxu0
  %4107 = vmatprep.mubr.f32.mxu0 %v3946
  %4108 = vmatmul.mubr.f32.gmra.mrb[0].mxu0 %v3945
  %v4109 = vpop.f32.mrb[0].mxu0
  %v4110 = vadd.f32 %v4001, %v4109
  %v4111 = vpop.f32.mrb[0].mxu0
  %4112 = vdwg.mxu0
  %4113 = vmatprep.subr.mxu0 0.0
  %4114 = vmatpush1.msra.mxu0 %v3980
  %4115 = vmatprep.subr.mxu0 0.0
  %4116 = vmatpush1.msra.mxu0 %v3981
  %4117 = vmatprep.subr.mxu0 0.0
  %4118 = vmatpush1.msra.mxu0 %v3982
  %4119 = vmatprep.subr.mxu0 0.0
  %4120 = vmatpush1.msra.mxu0 %v3983
  %4121 = vmatprep.subr.mxu0 0.0
  %4122 = vmatpush1.msra.mxu0 %v3984
  %4123 = vmatprep.subr.mxu0 0.0
  %4124 = vmatpush1.msra.mxu0 %v3985
  %4125 = vmatprep.subr.mxu0 0.0
  %4126 = vmatpush1.msra.mxu0 %v3986
  %4127 = vmatprep.subr.mxu0 0.0
  %4128 = vmatpush1.msra.mxu0 %v3987
  %4129 = vmatprep.subr.mxu0 0.0
  %4130 = vmatpush1.msra.mxu0 %v3988
  %4131 = vmatprep.subr.mxu0 0.0
  %4132 = vmatpush1.msra.mxu0 %v3989
  %4133 = vmatprep.subr.mxu0 0.0
  %4134 = vmatpush1.msra.mxu0 %v3990
  %4135 = vmatprep.subr.mxu0 0.0
  %4136 = vmatpush1.msra.mxu0 %v3991
  %4137 = vmatprep.subr.mxu0 0.0
  %4138 = vmatpush1.msra.mxu0 %v3992
  %4139 = vmatprep.subr.mxu0 0.0
  %4140 = vmatpush1.msra.mxu0 %v3993
  %4141 = vmatprep.subr.mxu0 0.0
  %4142 = vmatpush1.msra.mxu0 %v3994
  %4143 = vmatprep.subr.mxu0 0.0
  %4144 = vmatpush1.msra.mxu0 %v3995
  %4145 = vmatprep.subr.mxu0 0.0
  %4146 = vmatpush1.msra.mxu0 0.0
  %4147 = vmatprep.subr.mxu0 0.0
  %4148 = vmatpush1.msra.mxu0 0.0
  %4149 = vmatprep.subr.mxu0 0.0
  %4150 = vmatpush1.msra.mxu0 0.0
  %4151 = vmatprep.subr.mxu0 0.0
  %4152 = vmatpush1.msra.mxu0 0.0
  %4153 = vmatprep.subr.mxu0 0.0
  %4154 = vmatpush1.msra.mxu0 0.0
  %4155 = vmatprep.subr.mxu0 0.0
  %4156 = vmatpush1.msra.mxu0 0.0
  %4157 = vmatprep.subr.mxu0 0.0
  %4158 = vmatpush1.msra.mxu0 0.0
  %4159 = vmatprep.subr.mxu0 0.0
  %4160 = vmatpush1.msra.mxu0 0.0
  %4161 = vmatprep.subr.mxu0 0.0
  %4162 = vmatpush1.msra.mxu0 0.0
  %4163 = vmatprep.subr.mxu0 0.0
  %4164 = vmatpush1.msra.mxu0 0.0
  %4165 = vmatprep.subr.mxu0 0.0
  %4166 = vmatpush1.msra.mxu0 0.0
  %4167 = vmatprep.subr.mxu0 0.0
  %4168 = vmatpush1.msra.mxu0 0.0
  %4169 = vmatprep.subr.mxu0 0.0
  %4170 = vmatpush1.msra.mxu0 0.0
  %4171 = vmatprep.subr.mxu0 0.0
  %4172 = vmatpush1.msra.mxu0 0.0
  %4173 = vmatprep.subr.mxu0 0.0
  %4174 = vmatpush1.msra.mxu0 0.0
  %4175 = vmatprep.subr.mxu0 0.0
  %4176 = vmatpush1.msra.mxu0 0.0
  %4177 = vmatprep.mubr.f32.mxu0 0.0
  %4178 = vmatmul.mubr.f32.gmra.mrb[0].mxu0 %v3923
  %v4179 = vpop.f32.mrb[0].mxu0
  %v4180 = vadd.f32 %v4070, %v4179
  %v4181 = vpop.f32.mrb[0].mxu0
  %4182 = vmatprep.mubr.f32.mxu0 0.0
  %4183 = vmatmul.mubr.f32.gmra.mrb[0].mxu0 %v3926
  %v4184 = vpop.f32.mrb[0].mxu0
  %v4185 = vadd.f32 %v4075, %v4184
  %v4186 = vpop.f32.mrb[0].mxu0
  %4187 = vmatprep.mubr.f32.mxu0 0.0
  %4188 = vmatmul.mubr.f32.gmra.mrb[0].mxu0 %v3929
  %v4189 = vpop.f32.mrb[0].mxu0
  %v4190 = vadd.f32 %v4080, %v4189
  %v4191 = vpop.f32.mrb[0].mxu0
  %4192 = vmatprep.mubr.f32.mxu0 0.0
  %4193 = vmatmul.mubr.f32.gmra.mrb[0].mxu0 %v3932
  %v4194 = vpop.f32.mrb[0].mxu0
  %v4195 = vadd.f32 %v4085, %v4194
  %v4196 = vpop.f32.mrb[0].mxu0
  %4197 = vmatprep.mubr.f32.mxu0 0.0
  %4198 = vmatmul.mubr.f32.gmra.mrb[0].mxu0 %v3935
  %v4199 = vpop.f32.mrb[0].mxu0
  %v4200 = vadd.f32 %v4090, %v4199
  %v4201 = vpop.f32.mrb[0].mxu0
  %4202 = vmatprep.mubr.f32.mxu0 0.0
  %4203 = vmatmul.mubr.f32.gmra.mrb[0].mxu0 %v3938
  %v4204 = vpop.f32.mrb[0].mxu0
  %v4205 = vadd.f32 %v4095, %v4204
  %v4206 = vpop.f32.mrb[0].mxu0
  %4207 = vmatprep.mubr.f32.mxu0 0.0
  %4208 = vmatmul.mubr.f32.gmra.mrb[0].mxu0 %v3941
  %v4209 = vpop.f32.mrb[0].mxu0
  %v4210 = vadd.f32 %v4100, %v4209
  %v4211 = vpop.f32.mrb[0].mxu0
  %4212 = vmatprep.mubr.f32.mxu0 0.0
  %4213 = vmatmul.mubr.f32.gmra.mrb[0].mxu0 %v3944
  %v4214 = vpop.f32.mrb[0].mxu0
  %v4215 = vadd.f32 %v4105, %v4214
  %v4216 = vpop.f32.mrb[0].mxu0
  %4217 = vmatprep.mubr.f32.mxu0 0.0
  %4218 = vmatmul.mubr.f32.gmra.mrb[0].mxu0 %v3947
  %v4219 = vpop.f32.mrb[0].mxu0
  %v4220 = vadd.f32 %v4110, %v4219
  %v4221 = vpop.f32.mrb[0].mxu0
  %4222 = vdwg.mxu0
  %4223 = vst [vmem:[%s15] sm:$0xff] %v4180
  %4224 = vst [vmem:[%s15 + $0x8] sm:$0xff] %v4185
  %4225 = vst [vmem:[%s15 + $0x10] sm:$0xff] %v4190
  %4226 = vst [vmem:[%s15 + $0x18] sm:$0xff] %v4195
  %4227 = vst [vmem:[%s15 + $0x20] sm:$0xff] %v4200
  %4228 = vst [vmem:[%s15 + $0x28] sm:$0xff] %v4205
  %4229 = vst [vmem:[%s15 + $0x30] sm:$0xff] %v4210
  %4230 = vst [vmem:[%s15 + $0x38] sm:$0xff] %v4215
  %4231 = vst [vmem:[%s15 + $0x40] sm:$0xff] %v4220
  // Predicated region
  $region62: #{forward.1} parent=0 // pred_check
    _
  $region63: #{forward.1} parent=0 // pred_check_branch
    %4233 = sbr.rel (0) target = $region65
  $region64: #{forward.1} parent=0 // pred_region
    _
  $region65: #{forward.1} parent=0 // pred_fallthru
    _
  // Predicated region
  $region66: #{forward.1} parent=0 // pred_check
    _
  $region67: #{forward.1} parent=0 // pred_check_branch
    %4235 = sbr.rel (0) target = $region69
  $region68: #{forward.1} parent=0 // pred_region
    _
  $region69: #{forward.1} parent=0 // pred_fallthru
    _

</llo_original>
